<compile_context>
chip_gen: v7x
topology: tpu7x:2x2x1
jax: 0.10.0
libtpu: 0.0.40
codegen_flags: <defaults>
</compile_context>

<pallas_src>
import jax
import jax.numpy as jnp
from jax.experimental import pallas as pl
from jax.experimental.pallas import tpu as pltpu


def _silu_kernel(x_ref, o_ref):
    x = x_ref[...].astype(jnp.float32)
    # sigmoid(x) = 0.5 * (tanh(x / 2) + 1): a single EUP op (tanh) per element,
    # exact to a few f32 ulps (no approx reciprocal).
    sig = 0.5 * jnp.tanh(0.5 * x) + 0.5
    o_ref[...] = (x * sig).astype(o_ref.dtype)


def _silu_jnp(x):
    """XLA fallback for small inputs / tails (compute in f32, cast back)."""
    xf = x.astype(jnp.float32)
    return (xf * jax.nn.sigmoid(xf)).astype(x.dtype)


def ii_silu(x, *, target_block_bytes=4 * 1024 * 1024, lane=1024,
            small_bytes=2 * 1024 * 1024):
    """Elementwise x * sigmoid(x) on an arbitrary-shaped array via Pallas."""
    orig_shape = x.shape
    dtype = x.dtype
    n = x.size
    if n == 0:
        return x

    itemsize = jnp.dtype(dtype).itemsize

    # Small tensors (or anything that would be a single block): XLA's fused
    # elementwise already hits the HBM roofline; skip the custom-call + per-step
    # pipeline overhead.  Non-float dtypes also take this path.
    if (n * itemsize <= small_bytes
            or n < 2 * 8 * lane
            or not jnp.issubdtype(dtype, jnp.floating)):
        return _silu_jnp(x)

    flat = x.reshape(-1)

    # Lane-dense main part: largest prefix whose size is a multiple of `lane`.
    # The (< lane)-element tail is handled by plain jnp -- no full-array
    # pad/slice round trip for sizes not divisible by 128.
    n_main = (n // lane) * lane
    tail = None
    if n_main != n:
        main = flat[:n_main]
        tail = flat[n_main:]
    else:
        main = flat
    rows = n_main // lane
    x2d = main.reshape(rows, lane)

    # Block rows sized for ~target_block_bytes, multiple of 8 sublanes, with
    # at least 2 (even-count) grid steps so both v7x TensorCores participate.
    max_block_rows = max(8, (target_block_bytes // (lane * itemsize)) // 8 * 8)
    num_blocks = pl.cdiv(rows, max_block_rows)
    if num_blocks < 2:
        num_blocks = 2
    if num_blocks % 2:
        num_blocks += 1
    block_rows = max(8, pl.cdiv(pl.cdiv(rows, num_blocks), 8) * 8)
    grid = (pl.cdiv(rows, block_rows),)

    out2d = pl.pallas_call(
        _silu_kernel,
        out_shape=jax.ShapeDtypeStruct((rows, lane), dtype),
        grid=grid,
        in_specs=[pl.BlockSpec((block_rows, lane), lambda i: (i, 0))],
        out_specs=pl.BlockSpec((block_rows, lane), lambda i: (i, 0)),
        compiler_params=pltpu.CompilerParams(
            dimension_semantics=("parallel",),
            # ~4 MiB blocks, double-buffered in+out ~= 16 MiB; 32 MiB leaves
            # headroom and respects v7x's 64 MiB physical VMEM.
            vmem_limit_bytes=32 * 1024 * 1024,
        ),
    )(x2d)

    out = out2d.reshape(-1)
    if tail is not None:
        out = jnp.concatenate([out, _silu_jnp(tail)])
    return out.reshape(orig_shape)


if __name__ == "__main__":
    key = jax.random.PRNGKey(0)

    # 1) Small conv-backbone activation (NCHW-like) -> early-out path.
    x = jax.random.normal(key, (2, 4, 16, 16), dtype=jnp.float32)
    y = ii_silu(x)
    jax.block_until_ready(y)
    ref = x * jax.nn.sigmoid(x)
    assert y.shape == x.shape and y.dtype == x.dtype
    assert float(jnp.max(jnp.abs(y - ref))) < 1e-4

    # 2) Larger activation -> exercises the Pallas kernel path (grid >= 2).
    x_big = jax.random.normal(jax.random.PRNGKey(1), (8, 32, 64, 64),
                              dtype=jnp.float32)
    y_big = ii_silu(x_big)
    jax.block_until_ready(y_big)
    ref_big = x_big * jax.nn.sigmoid(x_big)
    assert y_big.shape == x_big.shape and y_big.dtype == x_big.dtype
    assert float(jnp.max(jnp.abs(y_big - ref_big))) < 1e-4

    # 3) Larger odd size (not a multiple of 128) -> kernel on the lane-dense
    #    main part (with a masked partial last block) + jnp tail, no padding.
    x_odd = jax.random.normal(jax.random.PRNGKey(2), (3, 257, 1025),
                              dtype=jnp.float32)
    y_odd = ii_silu(x_odd)
    jax.block_until_ready(y_odd)
    ref_odd = x_odd * jax.nn.sigmoid(x_odd)
    assert y_odd.shape == x_odd.shape and y_odd.dtype == x_odd.dtype
    assert float(jnp.max(jnp.abs(y_odd - ref_odd))) < 1e-4

    print("KERNEL_OK")
</pallas_src>

<mosaic_0001>
module attributes {stable_mosaic.version = 11 : i64} {
  func.func @_silu_kernel(%arg0: i32, %arg1: memref<512x1024xf32, #tpu.memory_space<vmem>>, %arg2: memref<512x1024xf32, #tpu.memory_space<vmem>>) attributes {dimension_semantics = [#tpu.dimension_semantics<parallel>], iteration_bounds = array<i64: 2>, scalar_prefetch = 0 : i64, scratch_operands = 0 : i64, tpu.core_type = #tpu.core_type<tc>, window_params = [{transform_indices = @transform_0, window_bounds = array<i64: 512, 1024>}, {transform_indices = @transform_1, window_bounds = array<i64: 512, 1024>}]} {
    %c0 = arith.constant 0 : index
    %c0_0 = arith.constant 0 : index
    %0 = vector.load %arg1[%c0, %c0_0] : memref<512x1024xf32, #tpu.memory_space<vmem>>, vector<512x1024xf32>
    %cst = arith.constant 5.000000e-01 : f32
    %1 = vector.broadcast %cst : f32 to vector<512x1024xf32>
    %2 = arith.mulf %1, %0 : vector<512x1024xf32>
    %3 = math.tanh %2 : vector<512x1024xf32>
    %cst_1 = arith.constant 5.000000e-01 : f32
    %4 = vector.broadcast %cst_1 : f32 to vector<512x1024xf32>
    %5 = arith.mulf %4, %3 : vector<512x1024xf32>
    %cst_2 = arith.constant 5.000000e-01 : f32
    %6 = vector.broadcast %cst_2 : f32 to vector<512x1024xf32>
    %7 = arith.addf %5, %6 : vector<512x1024xf32>
    %8 = arith.mulf %0, %7 : vector<512x1024xf32>
    %c0_3 = arith.constant 0 : index
    %c0_4 = arith.constant 0 : index
    %9 = vector.load %arg2[%c0_3, %c0_4] : memref<512x1024xf32, #tpu.memory_space<vmem>>, vector<512x1024xf32>
    tpu.vector_store %arg2[%c0_3, %c0_4], %8 {strides = array<i32>} : memref<512x1024xf32, #tpu.memory_space<vmem>>, vector<512x1024xf32>,
    return
  }
  func.func @transform_0(%arg0: i32) -> (i32, i32) {
    %c0_i32 = arith.constant 0 : i32
    %c0_i32_0 = arith.constant 0 : i32
    return %arg0, %c0_i32 : i32, i32
  }
  func.func @transform_1(%arg0: i32) -> (i32, i32) {
    %c0_i32 = arith.constant 0 : i32
    %c0_i32_0 = arith.constant 0 : i32
    return %arg0, %c0_i32 : i32, i32
  }
}

</mosaic_0001>

<llo_original>
// kernel: tpu_custom_call.1
$region0: #{tpu_custom_call.1}
  #allocation0 [shape = 'u32[]', space=smem, size = 0x4, offset = 0x4, fixed_abs, tag = 'smem constant byte address 0x4 - core index']
  #allocation1 [shape = 'u32[144,128]{1,0:T(1,128)}', space=vmem, size = 0x12000, scoped, tag = 'internal scratch']
  %s0 = inlined_call_operand.hbm [shape: f32[1024,1024], index: 0, kind: input, shape index: {}]
  %s1 = inlined_call_operand.hbm [shape: f32[1024,1024], index: 1, kind: output, shape index: {}]
  %s2 = sld [smem:[#allocation0]]
  $region41: #{tpu_custom_call.1} parent=0
    _
  %s4 = ssub.s32 1, %s2
  %s5 = scalar_select 0, %s4, %s2
  $region1: #{tpu_custom_call.1} parent=0
    #allocation2 [shape = 'u8[4194304]{0}', space=vmem, size = 0x400000, scoped, tag = 'input window, operand 0']
    #allocation3 [shape = 's32[2]{0}', space=sflag, size = 0x8, scoped, tag = 'scoped memory for tpu_custom_call.1']
    #allocation4 [shape = 's32[2]{0}', space=sflag, size = 0x8, scoped, tag = 'scoped memory for tpu_custom_call.1']
    #allocation5 [shape = 'u8[4194304]{0}', space=vmem, size = 0x400000, scoped, tag = 'output window, operand 0']
    %6 = vsyncpa [#allocation3], 0
    %s7 = scalar_lea.sflag [#allocation3], 1
    %8 = vsyncpa %s7, 0
    %9 = vsyncpa [#allocation4], 0
    %s10 = scalar_lea.sflag [#allocation4], 1
    %11 = vsyncpa %s10, 0
    loop: start=0, step=1, limit=4
    $region2: #{tpu_custom_call.1} parent=1 // loop_pre_header
      _
    $region3: #{tpu_custom_call.1} parent=1 // loop_header
      %s13 = sphi 0, %s17
      %p14 = scmp.ge.s32.totalorder %s13, 4
      %s23 = sphi 0, %s25
      %s26 = sphi 0, %s23
      %s27 = sphi 0, %s26
      %s43 = sphi 0, %s27
      %s49 = sphi 0, %s51
      %s52 = sphi 0, %s49
      %s53 = sphi 0, %s52
      %s69 = sphi 0, %s53
    $region4: #{tpu_custom_call.1} parent=1 // loop_header_branch
      %16 = sbr.rel (%p14) target = $region8
    $region5: #{tpu_custom_call.1} parent=1 // loop_body
      %s18 = ssub.s32 %s13, 1
      %s19 = ssub.s32 %s13, 2
      %s20 = sadd.s32 %s13, 1
      %s21 = ssub.s32 %s13, %s20
      %p22 = scmp.eq.s32.totalorder %s21, 0
      %s24 = sadd.s32 %s23, 1
      %s25 = scalar_select %p22, %s23, %s24
      %p28 = pneg %p22
      %p29 = scmp.eq.s32.totalorder %s13, 1
      %p30 = por %p28, %p29
      %p31 = scmp.ne.s32.totalorder %s23, %s26
      %p32 = scmp.eq.s32.totalorder %s13, 0
      %p33 = por %p31, %p32
      %p34 = scmp.ne.s32.totalorder %s23, %s26
      %p35 = scmp.eq.s32.totalorder %s18, 1
      %p36 = por %p34, %p35
      %p37 = scmp.ne.s32.totalorder %s26, %s27
      %p38 = scmp.eq.s32.totalorder %s18, 0
      %p39 = por %p37, %p38
      %p40 = scmp.ne.s32.totalorder %s26, %s27
      %p41 = scmp.eq.s32.totalorder %s19, 1
      %p42 = por %p40, %p41
      %p44 = scmp.ne.s32.totalorder %s27, %s43
      %p45 = scmp.eq.s32.totalorder %s19, 0
      %p46 = por %p44, %p45
      %s47 = ssub.s32 %s13, %s20
      %p48 = scmp.eq.s32.totalorder %s47, 0
      %s50 = sadd.s32 %s49, 1
      %s51 = scalar_select %p48, %s49, %s50
      %p54 = pneg %p48
      %p55 = scmp.eq.s32.totalorder %s13, 1
      %p56 = por %p54, %p55
      %p57 = scmp.ne.s32.totalorder %s49, %s52
      %p58 = scmp.eq.s32.totalorder %s13, 0
      %p59 = por %p57, %p58
      %p60 = scmp.ne.s32.totalorder %s49, %s52
      %p61 = scmp.eq.s32.totalorder %s18, 1
      %p62 = por %p60, %p61
      %p63 = scmp.ne.s32.totalorder %s52, %s53
      %p64 = scmp.eq.s32.totalorder %s18, 0
      %p65 = por %p63, %p64
      %p66 = scmp.ne.s32.totalorder %s52, %s53
      %p67 = scmp.eq.s32.totalorder %s19, 1
      %p68 = por %p66, %p67
      %p70 = scmp.ne.s32.totalorder %s53, %s69
      %p71 = scmp.eq.s32.totalorder %s19, 0
      %p72 = por %p70, %p71
      %p73 = scmp.le.s32.totalorder 1, %s13
      %p74 = scmp.lt.s32.totalorder %s13, 3
      %p75 = pnand %p73, %p74
      %p76 = pneg %p75
      // Predicated region
      $region9: #{tpu_custom_call.1} parent=5 // pred_check
        _
      $region10: #{tpu_custom_call.1} parent=5 // pred_check_branch
        %78 = sbr.rel (%p75) target = $region12
      $region11: #{tpu_custom_call.1} parent=5 // pred_region
        %s79 = ssub.s32 %s13, 1
      $region12: #{tpu_custom_call.1} parent=5 // pred_fallthru
        _
      %p80 = scmp.lt.s32.totalorder %s13, 2
      // Predicated region
      $region13: #{tpu_custom_call.1} parent=5 // pred_check
        %p81 = pneg %p80
      $region14: #{tpu_custom_call.1} parent=5 // pred_check_branch
        %83 = sbr.rel (%p81) target = $region16
      $region15: #{tpu_custom_call.1} parent=5 // pred_region
        // Predicated region
        $region17: #{tpu_custom_call.1} parent=15 // pred_check
          %p84 = pneg %p33
        $region18: #{tpu_custom_call.1} parent=15 // pred_check_branch
          %86 = sbr.rel (%p84) target = $region20
        $region19: #{tpu_custom_call.1} parent=15 // pred_region
          %s87 = sand.u32 %s23, 1
          %s88 = scalar_lea.sflag [#allocation3], %s87
          %s89 = sand.u32 %s23, 1
          %s90 = smul.addr %s89, 4096
          %s91 = scalar_lea.vmem [#allocation2], %s90
          %s92 = smul.u32 64, %s13
          %s94 = ssub.s32 65536, 65536
          %95 = vsyncadd %s88, %s94
          %s96 = smul.addr %s92, 8
          %s97 = smul.addr %s96, 128
          %s98 = scalar_lea.hbm %s0, %s97
          %s99 = sshll.u32 %s91, 4
          %s100 = int_to_ptr.vmem [resolvable:$true] %s99
          %105 = dma.hbm_to_vmem [thread:$0]  %s98, 65536, %s100, %s88, 1024, 1024, 64
        $region20: #{tpu_custom_call.1} parent=15 // pred_fallthru
          _
      $region16: #{tpu_custom_call.1} parent=5 // pred_fallthru
        _
      %p106 = scmp.le.s32.totalorder 1, %s13
      %p107 = scmp.lt.s32.totalorder %s13, 3
      %p108 = pnand %p106, %p107
      %p109 = pneg %p108
      // Predicated region
      $region21: #{tpu_custom_call.1} parent=5 // pred_check
        _
      $region22: #{tpu_custom_call.1} parent=5 // pred_check_branch
        %111 = sbr.rel (%p108) target = $region24
      $region23: #{tpu_custom_call.1} parent=5 // pred_region
        %s112 = ssub.s32 %s13, 1
        %s113 = sand.u32 %s26, 1
        %s114 = scalar_lea.sflag [#allocation3], %s113
        %s115 = sand.u32 %s26, 1
        %s116 = smul.addr %s115, 4096
        %s117 = scalar_lea.vmem [#allocation2], %s116
        // Predicated region
        $region25: #{tpu_custom_call.1} parent=23 // pred_check
          %p118 = pneg %p39
        $region26: #{tpu_custom_call.1} parent=23 // pred_check_branch
          %120 = sbr.rel (%p118) target = $region28
        $region27: #{tpu_custom_call.1} parent=23 // pred_region
          %121 = dma.done %s114, 65536
        $region28: #{tpu_custom_call.1} parent=23 // pred_fallthru
          _
        %s122 = sand.u32 %s26, 1
        %s123 = scalar_lea.sflag [#allocation3], %s122
        %s124 = sand.u32 %s26, 1
        %s125 = smul.addr %s124, 4096
        %s126 = scalar_lea.vmem [#allocation2], %s125
        %p127 = pneg %p39
        %p128 = pneg %p36
        %p129 = pneg %p65
        %p130 = pneg %p62
        %s131 = sand.u32 %s52, 1
        %s132 = scalar_lea.sflag [#allocation4], %s131
        %s133 = sand.u32 %s52, 1
        %s134 = smul.addr %s133, 4096
        %s135 = scalar_lea.vmem [#allocation5], %s134
        %s136 = smul.u32 64, %s18
        %s137 = smul.u32 64, %s18
        %v138 = vld [vmem:[%s117] sm:$0xff]
        %v139 = vld [vmem:[%s117 + $0x8] sm:$0xff]
        %v140 = vld [vmem:[%s117 + $0x10] sm:$0xff]
        %v141 = vld [vmem:[%s117 + $0x18] sm:$0xff]
        %v142 = vld [vmem:[%s117 + $0x20] sm:$0xff]
        %v143 = vld [vmem:[%s117 + $0x28] sm:$0xff]
        %v144 = vld [vmem:[%s117 + $0x30] sm:$0xff]
        %v145 = vld [vmem:[%s117 + $0x38] sm:$0xff]
        %v146 = vld [vmem:[%s117 + $0x40] sm:$0xff]
        %v147 = vld [vmem:[%s117 + $0x48] sm:$0xff]
        %v148 = vld [vmem:[%s117 + $0x50] sm:$0xff]
        %v149 = vld [vmem:[%s117 + $0x58] sm:$0xff]
        %v150 = vld [vmem:[%s117 + $0x60] sm:$0xff]
        %v151 = vld [vmem:[%s117 + $0x68] sm:$0xff]
        %v152 = vld [vmem:[%s117 + $0x70] sm:$0xff]
        %v153 = vld [vmem:[%s117 + $0x78] sm:$0xff]
        %v154 = vld [vmem:[%s117 + $0x80] sm:$0xff]
        %v155 = vld [vmem:[%s117 + $0x88] sm:$0xff]
        %v156 = vld [vmem:[%s117 + $0x90] sm:$0xff]
        %v157 = vld [vmem:[%s117 + $0x98] sm:$0xff]
        %v158 = vld [vmem:[%s117 + $0xa0] sm:$0xff]
        %v159 = vld [vmem:[%s117 + $0xa8] sm:$0xff]
        %v160 = vld [vmem:[%s117 + $0xb0] sm:$0xff]
        %v161 = vld [vmem:[%s117 + $0xb8] sm:$0xff]
        %v162 = vld [vmem:[%s117 + $0xc0] sm:$0xff]
        %v163 = vld [vmem:[%s117 + $0xc8] sm:$0xff]
        %v164 = vld [vmem:[%s117 + $0xd0] sm:$0xff]
        %v165 = vld [vmem:[%s117 + $0xd8] sm:$0xff]
        %v166 = vld [vmem:[%s117 + $0xe0] sm:$0xff]
        %v167 = vld [vmem:[%s117 + $0xe8] sm:$0xff]
        %v168 = vld [vmem:[%s117 + $0xf0] sm:$0xff]
        %v169 = vld [vmem:[%s117 + $0xf8] sm:$0xff]
        %v170 = vld [vmem:[%s117 + $0x100] sm:$0xff]
        %v171 = vld [vmem:[%s117 + $0x108] sm:$0xff]
        %v172 = vld [vmem:[%s117 + $0x110] sm:$0xff]
        %v173 = vld [vmem:[%s117 + $0x118] sm:$0xff]
        %v174 = vld [vmem:[%s117 + $0x120] sm:$0xff]
        %v175 = vld [vmem:[%s117 + $0x128] sm:$0xff]
        %v176 = vld [vmem:[%s117 + $0x130] sm:$0xff]
        %v177 = vld [vmem:[%s117 + $0x138] sm:$0xff]
        %v178 = vld [vmem:[%s117 + $0x140] sm:$0xff]
        %v179 = vld [vmem:[%s117 + $0x148] sm:$0xff]
        %v180 = vld [vmem:[%s117 + $0x150] sm:$0xff]
        %v181 = vld [vmem:[%s117 + $0x158] sm:$0xff]
        %v182 = vld [vmem:[%s117 + $0x160] sm:$0xff]
        %v183 = vld [vmem:[%s117 + $0x168] sm:$0xff]
        %v184 = vld [vmem:[%s117 + $0x170] sm:$0xff]
        %v185 = vld [vmem:[%s117 + $0x178] sm:$0xff]
        %v186 = vld [vmem:[%s117 + $0x180] sm:$0xff]
        %v187 = vld [vmem:[%s117 + $0x188] sm:$0xff]
        %v188 = vld [vmem:[%s117 + $0x190] sm:$0xff]
        %v189 = vld [vmem:[%s117 + $0x198] sm:$0xff]
        %v190 = vld [vmem:[%s117 + $0x1a0] sm:$0xff]
        %v191 = vld [vmem:[%s117 + $0x1a8] sm:$0xff]
        %v192 = vld [vmem:[%s117 + $0x1b0] sm:$0xff]
        %v193 = vld [vmem:[%s117 + $0x1b8] sm:$0xff]
        %v194 = vld [vmem:[%s117 + $0x1c0] sm:$0xff]
        %v195 = vld [vmem:[%s117 + $0x1c8] sm:$0xff]
        %v196 = vld [vmem:[%s117 + $0x1d0] sm:$0xff]
        %v197 = vld [vmem:[%s117 + $0x1d8] sm:$0xff]
        %v198 = vld [vmem:[%s117 + $0x1e0] sm:$0xff]
        %v199 = vld [vmem:[%s117 + $0x1e8] sm:$0xff]
        %v200 = vld [vmem:[%s117 + $0x1f0] sm:$0xff]
        %v201 = vld [vmem:[%s117 + $0x1f8] sm:$0xff]
        %v202 = vld [vmem:[%s117 + $0x200] sm:$0xff]
        %v203 = vld [vmem:[%s117 + $0x208] sm:$0xff]
        %v204 = vld [vmem:[%s117 + $0x210] sm:$0xff]
        %v205 = vld [vmem:[%s117 + $0x218] sm:$0xff]
        %v206 = vld [vmem:[%s117 + $0x220] sm:$0xff]
        %v207 = vld [vmem:[%s117 + $0x228] sm:$0xff]
        %v208 = vld [vmem:[%s117 + $0x230] sm:$0xff]
        %v209 = vld [vmem:[%s117 + $0x238] sm:$0xff]
        %v210 = vld [vmem:[%s117 + $0x240] sm:$0xff]
        %v211 = vld [vmem:[%s117 + $0x248] sm:$0xff]
        %v212 = vld [vmem:[%s117 + $0x250] sm:$0xff]
        %v213 = vld [vmem:[%s117 + $0x258] sm:$0xff]
        %v214 = vld [vmem:[%s117 + $0x260] sm:$0xff]
        %v215 = vld [vmem:[%s117 + $0x268] sm:$0xff]
        %v216 = vld [vmem:[%s117 + $0x270] sm:$0xff]
        %v217 = vld [vmem:[%s117 + $0x278] sm:$0xff]
        %v218 = vld [vmem:[%s117 + $0x280] sm:$0xff]
        %v219 = vld [vmem:[%s117 + $0x288] sm:$0xff]
        %v220 = vld [vmem:[%s117 + $0x290] sm:$0xff]
        %v221 = vld [vmem:[%s117 + $0x298] sm:$0xff]
        %v222 = vld [vmem:[%s117 + $0x2a0] sm:$0xff]
        %v223 = vld [vmem:[%s117 + $0x2a8] sm:$0xff]
        %v224 = vld [vmem:[%s117 + $0x2b0] sm:$0xff]
        %v225 = vld [vmem:[%s117 + $0x2b8] sm:$0xff]
        %v226 = vld [vmem:[%s117 + $0x2c0] sm:$0xff]
        %v227 = vld [vmem:[%s117 + $0x2c8] sm:$0xff]
        %v228 = vld [vmem:[%s117 + $0x2d0] sm:$0xff]
        %v229 = vld [vmem:[%s117 + $0x2d8] sm:$0xff]
        %v230 = vld [vmem:[%s117 + $0x2e0] sm:$0xff]
        %v231 = vld [vmem:[%s117 + $0x2e8] sm:$0xff]
        %v232 = vld [vmem:[%s117 + $0x2f0] sm:$0xff]
        %v233 = vld [vmem:[%s117 + $0x2f8] sm:$0xff]
        %v234 = vld [vmem:[%s117 + $0x300] sm:$0xff]
        %v235 = vld [vmem:[%s117 + $0x308] sm:$0xff]
        %v236 = vld [vmem:[%s117 + $0x310] sm:$0xff]
        %v237 = vld [vmem:[%s117 + $0x318] sm:$0xff]
        %v238 = vld [vmem:[%s117 + $0x320] sm:$0xff]
        %v239 = vld [vmem:[%s117 + $0x328] sm:$0xff]
        %v240 = vld [vmem:[%s117 + $0x330] sm:$0xff]
        %v241 = vld [vmem:[%s117 + $0x338] sm:$0xff]
        %v242 = vld [vmem:[%s117 + $0x340] sm:$0xff]
        %v243 = vld [vmem:[%s117 + $0x348] sm:$0xff]
        %v244 = vld [vmem:[%s117 + $0x350] sm:$0xff]
        %v245 = vld [vmem:[%s117 + $0x358] sm:$0xff]
        %v246 = vld [vmem:[%s117 + $0x360] sm:$0xff]
        %v247 = vld [vmem:[%s117 + $0x368] sm:$0xff]
        %v248 = vld [vmem:[%s117 + $0x370] sm:$0xff]
        %v249 = vld [vmem:[%s117 + $0x378] sm:$0xff]
        %v250 = vld [vmem:[%s117 + $0x380] sm:$0xff]
        %v251 = vld [vmem:[%s117 + $0x388] sm:$0xff]
        %v252 = vld [vmem:[%s117 + $0x390] sm:$0xff]
        %v253 = vld [vmem:[%s117 + $0x398] sm:$0xff]
        %v254 = vld [vmem:[%s117 + $0x3a0] sm:$0xff]
        %v255 = vld [vmem:[%s117 + $0x3a8] sm:$0xff]
        %v256 = vld [vmem:[%s117 + $0x3b0] sm:$0xff]
        %v257 = vld [vmem:[%s117 + $0x3b8] sm:$0xff]
        %v258 = vld [vmem:[%s117 + $0x3c0] sm:$0xff]
        %v259 = vld [vmem:[%s117 + $0x3c8] sm:$0xff]
        %v260 = vld [vmem:[%s117 + $0x3d0] sm:$0xff]
        %v261 = vld [vmem:[%s117 + $0x3d8] sm:$0xff]
        %v262 = vld [vmem:[%s117 + $0x3e0] sm:$0xff]
        %v263 = vld [vmem:[%s117 + $0x3e8] sm:$0xff]
        %v264 = vld [vmem:[%s117 + $0x3f0] sm:$0xff]
        %v265 = vld [vmem:[%s117 + $0x3f8] sm:$0xff]
        %v266 = vld [vmem:[%s117 + $0x400] sm:$0xff]
        %v267 = vld [vmem:[%s117 + $0x408] sm:$0xff]
        %v268 = vld [vmem:[%s117 + $0x410] sm:$0xff]
        %v269 = vld [vmem:[%s117 + $0x418] sm:$0xff]
        %v270 = vld [vmem:[%s117 + $0x420] sm:$0xff]
        %v271 = vld [vmem:[%s117 + $0x428] sm:$0xff]
        %v272 = vld [vmem:[%s117 + $0x430] sm:$0xff]
        %v273 = vld [vmem:[%s117 + $0x438] sm:$0xff]
        %v274 = vld [vmem:[%s117 + $0x440] sm:$0xff]
        %v275 = vld [vmem:[%s117 + $0x448] sm:$0xff]
        %v276 = vld [vmem:[%s117 + $0x450] sm:$0xff]
        %v277 = vld [vmem:[%s117 + $0x458] sm:$0xff]
        %v278 = vld [vmem:[%s117 + $0x460] sm:$0xff]
        %v279 = vld [vmem:[%s117 + $0x468] sm:$0xff]
        %v280 = vld [vmem:[%s117 + $0x470] sm:$0xff]
        %v281 = vld [vmem:[%s117 + $0x478] sm:$0xff]
        %v282 = vld [vmem:[%s117 + $0x480] sm:$0xff]
        %v283 = vld [vmem:[%s117 + $0x488] sm:$0xff]
        %v284 = vld [vmem:[%s117 + $0x490] sm:$0xff]
        %v285 = vld [vmem:[%s117 + $0x498] sm:$0xff]
        %v286 = vld [vmem:[%s117 + $0x4a0] sm:$0xff]
        %v287 = vld [vmem:[%s117 + $0x4a8] sm:$0xff]
        %v288 = vld [vmem:[%s117 + $0x4b0] sm:$0xff]
        %v289 = vld [vmem:[%s117 + $0x4b8] sm:$0xff]
        %v290 = vld [vmem:[%s117 + $0x4c0] sm:$0xff]
        %v291 = vld [vmem:[%s117 + $0x4c8] sm:$0xff]
        %v292 = vld [vmem:[%s117 + $0x4d0] sm:$0xff]
        %v293 = vld [vmem:[%s117 + $0x4d8] sm:$0xff]
        %v294 = vld [vmem:[%s117 + $0x4e0] sm:$0xff]
        %v295 = vld [vmem:[%s117 + $0x4e8] sm:$0xff]
        %v296 = vld [vmem:[%s117 + $0x4f0] sm:$0xff]
        %v297 = vld [vmem:[%s117 + $0x4f8] sm:$0xff]
        %v298 = vld [vmem:[%s117 + $0x500] sm:$0xff]
        %v299 = vld [vmem:[%s117 + $0x508] sm:$0xff]
        %v300 = vld [vmem:[%s117 + $0x510] sm:$0xff]
        %v301 = vld [vmem:[%s117 + $0x518] sm:$0xff]
        %v302 = vld [vmem:[%s117 + $0x520] sm:$0xff]
        %v303 = vld [vmem:[%s117 + $0x528] sm:$0xff]
        %v304 = vld [vmem:[%s117 + $0x530] sm:$0xff]
        %v305 = vld [vmem:[%s117 + $0x538] sm:$0xff]
        %v306 = vld [vmem:[%s117 + $0x540] sm:$0xff]
        %v307 = vld [vmem:[%s117 + $0x548] sm:$0xff]
        %v308 = vld [vmem:[%s117 + $0x550] sm:$0xff]
        %v309 = vld [vmem:[%s117 + $0x558] sm:$0xff]
        %v310 = vld [vmem:[%s117 + $0x560] sm:$0xff]
        %v311 = vld [vmem:[%s117 + $0x568] sm:$0xff]
        %v312 = vld [vmem:[%s117 + $0x570] sm:$0xff]
        %v313 = vld [vmem:[%s117 + $0x578] sm:$0xff]
        %v314 = vld [vmem:[%s117 + $0x580] sm:$0xff]
        %v315 = vld [vmem:[%s117 + $0x588] sm:$0xff]
        %v316 = vld [vmem:[%s117 + $0x590] sm:$0xff]
        %v317 = vld [vmem:[%s117 + $0x598] sm:$0xff]
        %v318 = vld [vmem:[%s117 + $0x5a0] sm:$0xff]
        %v319 = vld [vmem:[%s117 + $0x5a8] sm:$0xff]
        %v320 = vld [vmem:[%s117 + $0x5b0] sm:$0xff]
        %v321 = vld [vmem:[%s117 + $0x5b8] sm:$0xff]
        %v322 = vld [vmem:[%s117 + $0x5c0] sm:$0xff]
        %v323 = vld [vmem:[%s117 + $0x5c8] sm:$0xff]
        %v324 = vld [vmem:[%s117 + $0x5d0] sm:$0xff]
        %v325 = vld [vmem:[%s117 + $0x5d8] sm:$0xff]
        %v326 = vld [vmem:[%s117 + $0x5e0] sm:$0xff]
        %v327 = vld [vmem:[%s117 + $0x5e8] sm:$0xff]
        %v328 = vld [vmem:[%s117 + $0x5f0] sm:$0xff]
        %v329 = vld [vmem:[%s117 + $0x5f8] sm:$0xff]
        %v330 = vld [vmem:[%s117 + $0x600] sm:$0xff]
        %v331 = vld [vmem:[%s117 + $0x608] sm:$0xff]
        %v332 = vld [vmem:[%s117 + $0x610] sm:$0xff]
        %v333 = vld [vmem:[%s117 + $0x618] sm:$0xff]
        %v334 = vld [vmem:[%s117 + $0x620] sm:$0xff]
        %v335 = vld [vmem:[%s117 + $0x628] sm:$0xff]
        %v336 = vld [vmem:[%s117 + $0x630] sm:$0xff]
        %v337 = vld [vmem:[%s117 + $0x638] sm:$0xff]
        %v338 = vld [vmem:[%s117 + $0x640] sm:$0xff]
        %v339 = vld [vmem:[%s117 + $0x648] sm:$0xff]
        %v340 = vld [vmem:[%s117 + $0x650] sm:$0xff]
        %v341 = vld [vmem:[%s117 + $0x658] sm:$0xff]
        %v342 = vld [vmem:[%s117 + $0x660] sm:$0xff]
        %v343 = vld [vmem:[%s117 + $0x668] sm:$0xff]
        %v344 = vld [vmem:[%s117 + $0x670] sm:$0xff]
        %v345 = vld [vmem:[%s117 + $0x678] sm:$0xff]
        %v346 = vld [vmem:[%s117 + $0x680] sm:$0xff]
        %v347 = vld [vmem:[%s117 + $0x688] sm:$0xff]
        %v348 = vld [vmem:[%s117 + $0x690] sm:$0xff]
        %v349 = vld [vmem:[%s117 + $0x698] sm:$0xff]
        %v350 = vld [vmem:[%s117 + $0x6a0] sm:$0xff]
        %v351 = vld [vmem:[%s117 + $0x6a8] sm:$0xff]
        %v352 = vld [vmem:[%s117 + $0x6b0] sm:$0xff]
        %v353 = vld [vmem:[%s117 + $0x6b8] sm:$0xff]
        %v354 = vld [vmem:[%s117 + $0x6c0] sm:$0xff]
        %v355 = vld [vmem:[%s117 + $0x6c8] sm:$0xff]
        %v356 = vld [vmem:[%s117 + $0x6d0] sm:$0xff]
        %v357 = vld [vmem:[%s117 + $0x6d8] sm:$0xff]
        %v358 = vld [vmem:[%s117 + $0x6e0] sm:$0xff]
        %v359 = vld [vmem:[%s117 + $0x6e8] sm:$0xff]
        %v360 = vld [vmem:[%s117 + $0x6f0] sm:$0xff]
        %v361 = vld [vmem:[%s117 + $0x6f8] sm:$0xff]
        %v362 = vld [vmem:[%s117 + $0x700] sm:$0xff]
        %v363 = vld [vmem:[%s117 + $0x708] sm:$0xff]
        %v364 = vld [vmem:[%s117 + $0x710] sm:$0xff]
        %v365 = vld [vmem:[%s117 + $0x718] sm:$0xff]
        %v366 = vld [vmem:[%s117 + $0x720] sm:$0xff]
        %v367 = vld [vmem:[%s117 + $0x728] sm:$0xff]
        %v368 = vld [vmem:[%s117 + $0x730] sm:$0xff]
        %v369 = vld [vmem:[%s117 + $0x738] sm:$0xff]
        %v370 = vld [vmem:[%s117 + $0x740] sm:$0xff]
        %v371 = vld [vmem:[%s117 + $0x748] sm:$0xff]
        %v372 = vld [vmem:[%s117 + $0x750] sm:$0xff]
        %v373 = vld [vmem:[%s117 + $0x758] sm:$0xff]
        %v374 = vld [vmem:[%s117 + $0x760] sm:$0xff]
        %v375 = vld [vmem:[%s117 + $0x768] sm:$0xff]
        %v376 = vld [vmem:[%s117 + $0x770] sm:$0xff]
        %v377 = vld [vmem:[%s117 + $0x778] sm:$0xff]
        %v378 = vld [vmem:[%s117 + $0x780] sm:$0xff]
        %v379 = vld [vmem:[%s117 + $0x788] sm:$0xff]
        %v380 = vld [vmem:[%s117 + $0x790] sm:$0xff]
        %v381 = vld [vmem:[%s117 + $0x798] sm:$0xff]
        %v382 = vld [vmem:[%s117 + $0x7a0] sm:$0xff]
        %v383 = vld [vmem:[%s117 + $0x7a8] sm:$0xff]
        %v384 = vld [vmem:[%s117 + $0x7b0] sm:$0xff]
        %v385 = vld [vmem:[%s117 + $0x7b8] sm:$0xff]
        %v386 = vld [vmem:[%s117 + $0x7c0] sm:$0xff]
        %v387 = vld [vmem:[%s117 + $0x7c8] sm:$0xff]
        %v388 = vld [vmem:[%s117 + $0x7d0] sm:$0xff]
        %v389 = vld [vmem:[%s117 + $0x7d8] sm:$0xff]
        %v390 = vld [vmem:[%s117 + $0x7e0] sm:$0xff]
        %v391 = vld [vmem:[%s117 + $0x7e8] sm:$0xff]
        %v392 = vld [vmem:[%s117 + $0x7f0] sm:$0xff]
        %v393 = vld [vmem:[%s117 + $0x7f8] sm:$0xff]
        %v394 = vld [vmem:[%s117 + $0x800] sm:$0xff]
        %v395 = vld [vmem:[%s117 + $0x808] sm:$0xff]
        %v396 = vld [vmem:[%s117 + $0x810] sm:$0xff]
        %v397 = vld [vmem:[%s117 + $0x818] sm:$0xff]
        %v398 = vld [vmem:[%s117 + $0x820] sm:$0xff]
        %v399 = vld [vmem:[%s117 + $0x828] sm:$0xff]
        %v400 = vld [vmem:[%s117 + $0x830] sm:$0xff]
        %v401 = vld [vmem:[%s117 + $0x838] sm:$0xff]
        %v402 = vld [vmem:[%s117 + $0x840] sm:$0xff]
        %v403 = vld [vmem:[%s117 + $0x848] sm:$0xff]
        %v404 = vld [vmem:[%s117 + $0x850] sm:$0xff]
        %v405 = vld [vmem:[%s117 + $0x858] sm:$0xff]
        %v406 = vld [vmem:[%s117 + $0x860] sm:$0xff]
        %v407 = vld [vmem:[%s117 + $0x868] sm:$0xff]
        %v408 = vld [vmem:[%s117 + $0x870] sm:$0xff]
        %v409 = vld [vmem:[%s117 + $0x878] sm:$0xff]
        %v410 = vld [vmem:[%s117 + $0x880] sm:$0xff]
        %v411 = vld [vmem:[%s117 + $0x888] sm:$0xff]
        %v412 = vld [vmem:[%s117 + $0x890] sm:$0xff]
        %v413 = vld [vmem:[%s117 + $0x898] sm:$0xff]
        %v414 = vld [vmem:[%s117 + $0x8a0] sm:$0xff]
        %v415 = vld [vmem:[%s117 + $0x8a8] sm:$0xff]
        %v416 = vld [vmem:[%s117 + $0x8b0] sm:$0xff]
        %v417 = vld [vmem:[%s117 + $0x8b8] sm:$0xff]
        %v418 = vld [vmem:[%s117 + $0x8c0] sm:$0xff]
        %v419 = vld [vmem:[%s117 + $0x8c8] sm:$0xff]
        %v420 = vld [vmem:[%s117 + $0x8d0] sm:$0xff]
        %v421 = vld [vmem:[%s117 + $0x8d8] sm:$0xff]
        %v422 = vld [vmem:[%s117 + $0x8e0] sm:$0xff]
        %v423 = vld [vmem:[%s117 + $0x8e8] sm:$0xff]
        %v424 = vld [vmem:[%s117 + $0x8f0] sm:$0xff]
        %v425 = vld [vmem:[%s117 + $0x8f8] sm:$0xff]
        %v426 = vld [vmem:[%s117 + $0x900] sm:$0xff]
        %v427 = vld [vmem:[%s117 + $0x908] sm:$0xff]
        %v428 = vld [vmem:[%s117 + $0x910] sm:$0xff]
        %v429 = vld [vmem:[%s117 + $0x918] sm:$0xff]
        %v430 = vld [vmem:[%s117 + $0x920] sm:$0xff]
        %v431 = vld [vmem:[%s117 + $0x928] sm:$0xff]
        %v432 = vld [vmem:[%s117 + $0x930] sm:$0xff]
        %v433 = vld [vmem:[%s117 + $0x938] sm:$0xff]
        %v434 = vld [vmem:[%s117 + $0x940] sm:$0xff]
        %v435 = vld [vmem:[%s117 + $0x948] sm:$0xff]
        %v436 = vld [vmem:[%s117 + $0x950] sm:$0xff]
        %v437 = vld [vmem:[%s117 + $0x958] sm:$0xff]
        %v438 = vld [vmem:[%s117 + $0x960] sm:$0xff]
        %v439 = vld [vmem:[%s117 + $0x968] sm:$0xff]
        %v440 = vld [vmem:[%s117 + $0x970] sm:$0xff]
        %v441 = vld [vmem:[%s117 + $0x978] sm:$0xff]
        %v442 = vld [vmem:[%s117 + $0x980] sm:$0xff]
        %v443 = vld [vmem:[%s117 + $0x988] sm:$0xff]
        %v444 = vld [vmem:[%s117 + $0x990] sm:$0xff]
        %v445 = vld [vmem:[%s117 + $0x998] sm:$0xff]
        %v446 = vld [vmem:[%s117 + $0x9a0] sm:$0xff]
        %v447 = vld [vmem:[%s117 + $0x9a8] sm:$0xff]
        %v448 = vld [vmem:[%s117 + $0x9b0] sm:$0xff]
        %v449 = vld [vmem:[%s117 + $0x9b8] sm:$0xff]
        %v450 = vld [vmem:[%s117 + $0x9c0] sm:$0xff]
        %v451 = vld [vmem:[%s117 + $0x9c8] sm:$0xff]
        %v452 = vld [vmem:[%s117 + $0x9d0] sm:$0xff]
        %v453 = vld [vmem:[%s117 + $0x9d8] sm:$0xff]
        %v454 = vld [vmem:[%s117 + $0x9e0] sm:$0xff]
        %v455 = vld [vmem:[%s117 + $0x9e8] sm:$0xff]
        %v456 = vld [vmem:[%s117 + $0x9f0] sm:$0xff]
        %v457 = vld [vmem:[%s117 + $0x9f8] sm:$0xff]
        %v458 = vld [vmem:[%s117 + $0xa00] sm:$0xff]
        %v459 = vld [vmem:[%s117 + $0xa08] sm:$0xff]
        %v460 = vld [vmem:[%s117 + $0xa10] sm:$0xff]
        %v461 = vld [vmem:[%s117 + $0xa18] sm:$0xff]
        %v462 = vld [vmem:[%s117 + $0xa20] sm:$0xff]
        %v463 = vld [vmem:[%s117 + $0xa28] sm:$0xff]
        %v464 = vld [vmem:[%s117 + $0xa30] sm:$0xff]
        %v465 = vld [vmem:[%s117 + $0xa38] sm:$0xff]
        %v466 = vld [vmem:[%s117 + $0xa40] sm:$0xff]
        %v467 = vld [vmem:[%s117 + $0xa48] sm:$0xff]
        %v468 = vld [vmem:[%s117 + $0xa50] sm:$0xff]
        %v469 = vld [vmem:[%s117 + $0xa58] sm:$0xff]
        %v470 = vld [vmem:[%s117 + $0xa60] sm:$0xff]
        %v471 = vld [vmem:[%s117 + $0xa68] sm:$0xff]
        %v472 = vld [vmem:[%s117 + $0xa70] sm:$0xff]
        %v473 = vld [vmem:[%s117 + $0xa78] sm:$0xff]
        %v474 = vld [vmem:[%s117 + $0xa80] sm:$0xff]
        %v475 = vld [vmem:[%s117 + $0xa88] sm:$0xff]
        %v476 = vld [vmem:[%s117 + $0xa90] sm:$0xff]
        %v477 = vld [vmem:[%s117 + $0xa98] sm:$0xff]
        %v478 = vld [vmem:[%s117 + $0xaa0] sm:$0xff]
        %v479 = vld [vmem:[%s117 + $0xaa8] sm:$0xff]
        %v480 = vld [vmem:[%s117 + $0xab0] sm:$0xff]
        %v481 = vld [vmem:[%s117 + $0xab8] sm:$0xff]
        %v482 = vld [vmem:[%s117 + $0xac0] sm:$0xff]
        %v483 = vld [vmem:[%s117 + $0xac8] sm:$0xff]
        %v484 = vld [vmem:[%s117 + $0xad0] sm:$0xff]
        %v485 = vld [vmem:[%s117 + $0xad8] sm:$0xff]
        %v486 = vld [vmem:[%s117 + $0xae0] sm:$0xff]
        %v487 = vld [vmem:[%s117 + $0xae8] sm:$0xff]
        %v488 = vld [vmem:[%s117 + $0xaf0] sm:$0xff]
        %v489 = vld [vmem:[%s117 + $0xaf8] sm:$0xff]
        %v490 = vld [vmem:[%s117 + $0xb00] sm:$0xff]
        %v491 = vld [vmem:[%s117 + $0xb08] sm:$0xff]
        %v492 = vld [vmem:[%s117 + $0xb10] sm:$0xff]
        %v493 = vld [vmem:[%s117 + $0xb18] sm:$0xff]
        %v494 = vld [vmem:[%s117 + $0xb20] sm:$0xff]
        %v495 = vld [vmem:[%s117 + $0xb28] sm:$0xff]
        %v496 = vld [vmem:[%s117 + $0xb30] sm:$0xff]
        %v497 = vld [vmem:[%s117 + $0xb38] sm:$0xff]
        %v498 = vld [vmem:[%s117 + $0xb40] sm:$0xff]
        %v499 = vld [vmem:[%s117 + $0xb48] sm:$0xff]
        %v500 = vld [vmem:[%s117 + $0xb50] sm:$0xff]
        %v501 = vld [vmem:[%s117 + $0xb58] sm:$0xff]
        %v502 = vld [vmem:[%s117 + $0xb60] sm:$0xff]
        %v503 = vld [vmem:[%s117 + $0xb68] sm:$0xff]
        %v504 = vld [vmem:[%s117 + $0xb70] sm:$0xff]
        %v505 = vld [vmem:[%s117 + $0xb78] sm:$0xff]
        %v506 = vld [vmem:[%s117 + $0xb80] sm:$0xff]
        %v507 = vld [vmem:[%s117 + $0xb88] sm:$0xff]
        %v508 = vld [vmem:[%s117 + $0xb90] sm:$0xff]
        %v509 = vld [vmem:[%s117 + $0xb98] sm:$0xff]
        %v510 = vld [vmem:[%s117 + $0xba0] sm:$0xff]
        %v511 = vld [vmem:[%s117 + $0xba8] sm:$0xff]
        %v512 = vld [vmem:[%s117 + $0xbb0] sm:$0xff]
        %v513 = vld [vmem:[%s117 + $0xbb8] sm:$0xff]
        %v514 = vld [vmem:[%s117 + $0xbc0] sm:$0xff]
        %v515 = vld [vmem:[%s117 + $0xbc8] sm:$0xff]
        %v516 = vld [vmem:[%s117 + $0xbd0] sm:$0xff]
        %v517 = vld [vmem:[%s117 + $0xbd8] sm:$0xff]
        %v518 = vld [vmem:[%s117 + $0xbe0] sm:$0xff]
        %v519 = vld [vmem:[%s117 + $0xbe8] sm:$0xff]
        %v520 = vld [vmem:[%s117 + $0xbf0] sm:$0xff]
        %v521 = vld [vmem:[%s117 + $0xbf8] sm:$0xff]
        %v522 = vld [vmem:[%s117 + $0xc00] sm:$0xff]
        %v523 = vld [vmem:[%s117 + $0xc08] sm:$0xff]
        %v524 = vld [vmem:[%s117 + $0xc10] sm:$0xff]
        %v525 = vld [vmem:[%s117 + $0xc18] sm:$0xff]
        %v526 = vld [vmem:[%s117 + $0xc20] sm:$0xff]
        %v527 = vld [vmem:[%s117 + $0xc28] sm:$0xff]
        %v528 = vld [vmem:[%s117 + $0xc30] sm:$0xff]
        %v529 = vld [vmem:[%s117 + $0xc38] sm:$0xff]
        %v530 = vld [vmem:[%s117 + $0xc40] sm:$0xff]
        %v531 = vld [vmem:[%s117 + $0xc48] sm:$0xff]
        %v532 = vld [vmem:[%s117 + $0xc50] sm:$0xff]
        %v533 = vld [vmem:[%s117 + $0xc58] sm:$0xff]
        %v534 = vld [vmem:[%s117 + $0xc60] sm:$0xff]
        %v535 = vld [vmem:[%s117 + $0xc68] sm:$0xff]
        %v536 = vld [vmem:[%s117 + $0xc70] sm:$0xff]
        %v537 = vld [vmem:[%s117 + $0xc78] sm:$0xff]
        %v538 = vld [vmem:[%s117 + $0xc80] sm:$0xff]
        %v539 = vld [vmem:[%s117 + $0xc88] sm:$0xff]
        %v540 = vld [vmem:[%s117 + $0xc90] sm:$0xff]
        %v541 = vld [vmem:[%s117 + $0xc98] sm:$0xff]
        %v542 = vld [vmem:[%s117 + $0xca0] sm:$0xff]
        %v543 = vld [vmem:[%s117 + $0xca8] sm:$0xff]
        %v544 = vld [vmem:[%s117 + $0xcb0] sm:$0xff]
        %v545 = vld [vmem:[%s117 + $0xcb8] sm:$0xff]
        %v546 = vld [vmem:[%s117 + $0xcc0] sm:$0xff]
        %v547 = vld [vmem:[%s117 + $0xcc8] sm:$0xff]
        %v548 = vld [vmem:[%s117 + $0xcd0] sm:$0xff]
        %v549 = vld [vmem:[%s117 + $0xcd8] sm:$0xff]
        %v550 = vld [vmem:[%s117 + $0xce0] sm:$0xff]
        %v551 = vld [vmem:[%s117 + $0xce8] sm:$0xff]
        %v552 = vld [vmem:[%s117 + $0xcf0] sm:$0xff]
        %v553 = vld [vmem:[%s117 + $0xcf8] sm:$0xff]
        %v554 = vld [vmem:[%s117 + $0xd00] sm:$0xff]
        %v555 = vld [vmem:[%s117 + $0xd08] sm:$0xff]
        %v556 = vld [vmem:[%s117 + $0xd10] sm:$0xff]
        %v557 = vld [vmem:[%s117 + $0xd18] sm:$0xff]
        %v558 = vld [vmem:[%s117 + $0xd20] sm:$0xff]
        %v559 = vld [vmem:[%s117 + $0xd28] sm:$0xff]
        %v560 = vld [vmem:[%s117 + $0xd30] sm:$0xff]
        %v561 = vld [vmem:[%s117 + $0xd38] sm:$0xff]
        %v562 = vld [vmem:[%s117 + $0xd40] sm:$0xff]
        %v563 = vld [vmem:[%s117 + $0xd48] sm:$0xff]
        %v564 = vld [vmem:[%s117 + $0xd50] sm:$0xff]
        %v565 = vld [vmem:[%s117 + $0xd58] sm:$0xff]
        %v566 = vld [vmem:[%s117 + $0xd60] sm:$0xff]
        %v567 = vld [vmem:[%s117 + $0xd68] sm:$0xff]
        %v568 = vld [vmem:[%s117 + $0xd70] sm:$0xff]
        %v569 = vld [vmem:[%s117 + $0xd78] sm:$0xff]
        %v570 = vld [vmem:[%s117 + $0xd80] sm:$0xff]
        %v571 = vld [vmem:[%s117 + $0xd88] sm:$0xff]
        %v572 = vld [vmem:[%s117 + $0xd90] sm:$0xff]
        %v573 = vld [vmem:[%s117 + $0xd98] sm:$0xff]
        %v574 = vld [vmem:[%s117 + $0xda0] sm:$0xff]
        %v575 = vld [vmem:[%s117 + $0xda8] sm:$0xff]
        %v576 = vld [vmem:[%s117 + $0xdb0] sm:$0xff]
        %v577 = vld [vmem:[%s117 + $0xdb8] sm:$0xff]
        %v578 = vld [vmem:[%s117 + $0xdc0] sm:$0xff]
        %v579 = vld [vmem:[%s117 + $0xdc8] sm:$0xff]
        %v580 = vld [vmem:[%s117 + $0xdd0] sm:$0xff]
        %v581 = vld [vmem:[%s117 + $0xdd8] sm:$0xff]
        %v582 = vld [vmem:[%s117 + $0xde0] sm:$0xff]
        %v583 = vld [vmem:[%s117 + $0xde8] sm:$0xff]
        %v584 = vld [vmem:[%s117 + $0xdf0] sm:$0xff]
        %v585 = vld [vmem:[%s117 + $0xdf8] sm:$0xff]
        %v586 = vld [vmem:[%s117 + $0xe00] sm:$0xff]
        %v587 = vld [vmem:[%s117 + $0xe08] sm:$0xff]
        %v588 = vld [vmem:[%s117 + $0xe10] sm:$0xff]
        %v589 = vld [vmem:[%s117 + $0xe18] sm:$0xff]
        %v590 = vld [vmem:[%s117 + $0xe20] sm:$0xff]
        %v591 = vld [vmem:[%s117 + $0xe28] sm:$0xff]
        %v592 = vld [vmem:[%s117 + $0xe30] sm:$0xff]
        %v593 = vld [vmem:[%s117 + $0xe38] sm:$0xff]
        %v594 = vld [vmem:[%s117 + $0xe40] sm:$0xff]
        %v595 = vld [vmem:[%s117 + $0xe48] sm:$0xff]
        %v596 = vld [vmem:[%s117 + $0xe50] sm:$0xff]
        %v597 = vld [vmem:[%s117 + $0xe58] sm:$0xff]
        %v598 = vld [vmem:[%s117 + $0xe60] sm:$0xff]
        %v599 = vld [vmem:[%s117 + $0xe68] sm:$0xff]
        %v600 = vld [vmem:[%s117 + $0xe70] sm:$0xff]
        %v601 = vld [vmem:[%s117 + $0xe78] sm:$0xff]
        %v602 = vld [vmem:[%s117 + $0xe80] sm:$0xff]
        %v603 = vld [vmem:[%s117 + $0xe88] sm:$0xff]
        %v604 = vld [vmem:[%s117 + $0xe90] sm:$0xff]
        %v605 = vld [vmem:[%s117 + $0xe98] sm:$0xff]
        %v606 = vld [vmem:[%s117 + $0xea0] sm:$0xff]
        %v607 = vld [vmem:[%s117 + $0xea8] sm:$0xff]
        %v608 = vld [vmem:[%s117 + $0xeb0] sm:$0xff]
        %v609 = vld [vmem:[%s117 + $0xeb8] sm:$0xff]
        %v610 = vld [vmem:[%s117 + $0xec0] sm:$0xff]
        %v611 = vld [vmem:[%s117 + $0xec8] sm:$0xff]
        %v612 = vld [vmem:[%s117 + $0xed0] sm:$0xff]
        %v613 = vld [vmem:[%s117 + $0xed8] sm:$0xff]
        %v614 = vld [vmem:[%s117 + $0xee0] sm:$0xff]
        %v615 = vld [vmem:[%s117 + $0xee8] sm:$0xff]
        %v616 = vld [vmem:[%s117 + $0xef0] sm:$0xff]
        %v617 = vld [vmem:[%s117 + $0xef8] sm:$0xff]
        %v618 = vld [vmem:[%s117 + $0xf00] sm:$0xff]
        %v619 = vld [vmem:[%s117 + $0xf08] sm:$0xff]
        %v620 = vld [vmem:[%s117 + $0xf10] sm:$0xff]
        %v621 = vld [vmem:[%s117 + $0xf18] sm:$0xff]
        %v622 = vld [vmem:[%s117 + $0xf20] sm:$0xff]
        %v623 = vld [vmem:[%s117 + $0xf28] sm:$0xff]
        %v624 = vld [vmem:[%s117 + $0xf30] sm:$0xff]
        %v625 = vld [vmem:[%s117 + $0xf38] sm:$0xff]
        %v626 = vld [vmem:[%s117 + $0xf40] sm:$0xff]
        %v627 = vld [vmem:[%s117 + $0xf48] sm:$0xff]
        %v628 = vld [vmem:[%s117 + $0xf50] sm:$0xff]
        %v629 = vld [vmem:[%s117 + $0xf58] sm:$0xff]
        %v630 = vld [vmem:[%s117 + $0xf60] sm:$0xff]
        %v631 = vld [vmem:[%s117 + $0xf68] sm:$0xff]
        %v632 = vld [vmem:[%s117 + $0xf70] sm:$0xff]
        %v633 = vld [vmem:[%s117 + $0xf78] sm:$0xff]
        %v634 = vld [vmem:[%s117 + $0xf80] sm:$0xff]
        %v635 = vld [vmem:[%s117 + $0xf88] sm:$0xff]
        %v636 = vld [vmem:[%s117 + $0xf90] sm:$0xff]
        %v637 = vld [vmem:[%s117 + $0xf98] sm:$0xff]
        %v638 = vld [vmem:[%s117 + $0xfa0] sm:$0xff]
        %v639 = vld [vmem:[%s117 + $0xfa8] sm:$0xff]
        %v640 = vld [vmem:[%s117 + $0xfb0] sm:$0xff]
        %v641 = vld [vmem:[%s117 + $0xfb8] sm:$0xff]
        %v642 = vld [vmem:[%s117 + $0xfc0] sm:$0xff]
        %v643 = vld [vmem:[%s117 + $0xfc8] sm:$0xff]
        %v644 = vld [vmem:[%s117 + $0xfd0] sm:$0xff]
        %v645 = vld [vmem:[%s117 + $0xfd8] sm:$0xff]
        %v646 = vld [vmem:[%s117 + $0xfe0] sm:$0xff]
        %v647 = vld [vmem:[%s117 + $0xfe8] sm:$0xff]
        %v648 = vld [vmem:[%s117 + $0xff0] sm:$0xff]
        %v649 = vld [vmem:[%s117 + $0xff8] sm:$0xff]
        %v650 = vmul.f32 %v138, 0.5
        %v651 = vmul.f32 %v139, 0.5
        %v652 = vmul.f32 %v140, 0.5
        %v653 = vmul.f32 %v141, 0.5
        %v654 = vmul.f32 %v142, 0.5
        %v655 = vmul.f32 %v143, 0.5
        %v656 = vmul.f32 %v144, 0.5
        %v657 = vmul.f32 %v145, 0.5
        %v658 = vmul.f32 %v146, 0.5
        %v659 = vmul.f32 %v147, 0.5
        %v660 = vmul.f32 %v148, 0.5
        %v661 = vmul.f32 %v149, 0.5
        %v662 = vmul.f32 %v150, 0.5
        %v663 = vmul.f32 %v151, 0.5
        %v664 = vmul.f32 %v152, 0.5
        %v665 = vmul.f32 %v153, 0.5
        %v666 = vmul.f32 %v154, 0.5
        %v667 = vmul.f32 %v155, 0.5
        %v668 = vmul.f32 %v156, 0.5
        %v669 = vmul.f32 %v157, 0.5
        %v670 = vmul.f32 %v158, 0.5
        %v671 = vmul.f32 %v159, 0.5
        %v672 = vmul.f32 %v160, 0.5
        %v673 = vmul.f32 %v161, 0.5
        %v674 = vmul.f32 %v162, 0.5
        %v675 = vmul.f32 %v163, 0.5
        %v676 = vmul.f32 %v164, 0.5
        %v677 = vmul.f32 %v165, 0.5
        %v678 = vmul.f32 %v166, 0.5
        %v679 = vmul.f32 %v167, 0.5
        %v680 = vmul.f32 %v168, 0.5
        %v681 = vmul.f32 %v169, 0.5
        %v682 = vmul.f32 %v170, 0.5
        %v683 = vmul.f32 %v171, 0.5
        %v684 = vmul.f32 %v172, 0.5
        %v685 = vmul.f32 %v173, 0.5
        %v686 = vmul.f32 %v174, 0.5
        %v687 = vmul.f32 %v175, 0.5
        %v688 = vmul.f32 %v176, 0.5
        %v689 = vmul.f32 %v177, 0.5
        %v690 = vmul.f32 %v178, 0.5
        %v691 = vmul.f32 %v179, 0.5
        %v692 = vmul.f32 %v180, 0.5
        %v693 = vmul.f32 %v181, 0.5
        %v694 = vmul.f32 %v182, 0.5
        %v695 = vmul.f32 %v183, 0.5
        %v696 = vmul.f32 %v184, 0.5
        %v697 = vmul.f32 %v185, 0.5
        %v698 = vmul.f32 %v186, 0.5
        %v699 = vmul.f32 %v187, 0.5
        %v700 = vmul.f32 %v188, 0.5
        %v701 = vmul.f32 %v189, 0.5
        %v702 = vmul.f32 %v190, 0.5
        %v703 = vmul.f32 %v191, 0.5
        %v704 = vmul.f32 %v192, 0.5
        %v705 = vmul.f32 %v193, 0.5
        %v706 = vmul.f32 %v194, 0.5
        %v707 = vmul.f32 %v195, 0.5
        %v708 = vmul.f32 %v196, 0.5
        %v709 = vmul.f32 %v197, 0.5
        %v710 = vmul.f32 %v198, 0.5
        %v711 = vmul.f32 %v199, 0.5
        %v712 = vmul.f32 %v200, 0.5
        %v713 = vmul.f32 %v201, 0.5
        %v714 = vmul.f32 %v202, 0.5
        %v715 = vmul.f32 %v203, 0.5
        %v716 = vmul.f32 %v204, 0.5
        %v717 = vmul.f32 %v205, 0.5
        %v718 = vmul.f32 %v206, 0.5
        %v719 = vmul.f32 %v207, 0.5
        %v720 = vmul.f32 %v208, 0.5
        %v721 = vmul.f32 %v209, 0.5
        %v722 = vmul.f32 %v210, 0.5
        %v723 = vmul.f32 %v211, 0.5
        %v724 = vmul.f32 %v212, 0.5
        %v725 = vmul.f32 %v213, 0.5
        %v726 = vmul.f32 %v214, 0.5
        %v727 = vmul.f32 %v215, 0.5
        %v728 = vmul.f32 %v216, 0.5
        %v729 = vmul.f32 %v217, 0.5
        %v730 = vmul.f32 %v218, 0.5
        %v731 = vmul.f32 %v219, 0.5
        %v732 = vmul.f32 %v220, 0.5
        %v733 = vmul.f32 %v221, 0.5
        %v734 = vmul.f32 %v222, 0.5
        %v735 = vmul.f32 %v223, 0.5
        %v736 = vmul.f32 %v224, 0.5
        %v737 = vmul.f32 %v225, 0.5
        %v738 = vmul.f32 %v226, 0.5
        %v739 = vmul.f32 %v227, 0.5
        %v740 = vmul.f32 %v228, 0.5
        %v741 = vmul.f32 %v229, 0.5
        %v742 = vmul.f32 %v230, 0.5
        %v743 = vmul.f32 %v231, 0.5
        %v744 = vmul.f32 %v232, 0.5
        %v745 = vmul.f32 %v233, 0.5
        %v746 = vmul.f32 %v234, 0.5
        %v747 = vmul.f32 %v235, 0.5
        %v748 = vmul.f32 %v236, 0.5
        %v749 = vmul.f32 %v237, 0.5
        %v750 = vmul.f32 %v238, 0.5
        %v751 = vmul.f32 %v239, 0.5
        %v752 = vmul.f32 %v240, 0.5
        %v753 = vmul.f32 %v241, 0.5
        %v754 = vmul.f32 %v242, 0.5
        %v755 = vmul.f32 %v243, 0.5
        %v756 = vmul.f32 %v244, 0.5
        %v757 = vmul.f32 %v245, 0.5
        %v758 = vmul.f32 %v246, 0.5
        %v759 = vmul.f32 %v247, 0.5
        %v760 = vmul.f32 %v248, 0.5
        %v761 = vmul.f32 %v249, 0.5
        %v762 = vmul.f32 %v250, 0.5
        %v763 = vmul.f32 %v251, 0.5
        %v764 = vmul.f32 %v252, 0.5
        %v765 = vmul.f32 %v253, 0.5
        %v766 = vmul.f32 %v254, 0.5
        %v767 = vmul.f32 %v255, 0.5
        %v768 = vmul.f32 %v256, 0.5
        %v769 = vmul.f32 %v257, 0.5
        %v770 = vmul.f32 %v258, 0.5
        %v771 = vmul.f32 %v259, 0.5
        %v772 = vmul.f32 %v260, 0.5
        %v773 = vmul.f32 %v261, 0.5
        %v774 = vmul.f32 %v262, 0.5
        %v775 = vmul.f32 %v263, 0.5
        %v776 = vmul.f32 %v264, 0.5
        %v777 = vmul.f32 %v265, 0.5
        %v778 = vmul.f32 %v266, 0.5
        %v779 = vmul.f32 %v267, 0.5
        %v780 = vmul.f32 %v268, 0.5
        %v781 = vmul.f32 %v269, 0.5
        %v782 = vmul.f32 %v270, 0.5
        %v783 = vmul.f32 %v271, 0.5
        %v784 = vmul.f32 %v272, 0.5
        %v785 = vmul.f32 %v273, 0.5
        %v786 = vmul.f32 %v274, 0.5
        %v787 = vmul.f32 %v275, 0.5
        %v788 = vmul.f32 %v276, 0.5
        %v789 = vmul.f32 %v277, 0.5
        %v790 = vmul.f32 %v278, 0.5
        %v791 = vmul.f32 %v279, 0.5
        %v792 = vmul.f32 %v280, 0.5
        %v793 = vmul.f32 %v281, 0.5
        %v794 = vmul.f32 %v282, 0.5
        %v795 = vmul.f32 %v283, 0.5
        %v796 = vmul.f32 %v284, 0.5
        %v797 = vmul.f32 %v285, 0.5
        %v798 = vmul.f32 %v286, 0.5
        %v799 = vmul.f32 %v287, 0.5
        %v800 = vmul.f32 %v288, 0.5
        %v801 = vmul.f32 %v289, 0.5
        %v802 = vmul.f32 %v290, 0.5
        %v803 = vmul.f32 %v291, 0.5
        %v804 = vmul.f32 %v292, 0.5
        %v805 = vmul.f32 %v293, 0.5
        %v806 = vmul.f32 %v294, 0.5
        %v807 = vmul.f32 %v295, 0.5
        %v808 = vmul.f32 %v296, 0.5
        %v809 = vmul.f32 %v297, 0.5
        %v810 = vmul.f32 %v298, 0.5
        %v811 = vmul.f32 %v299, 0.5
        %v812 = vmul.f32 %v300, 0.5
        %v813 = vmul.f32 %v301, 0.5
        %v814 = vmul.f32 %v302, 0.5
        %v815 = vmul.f32 %v303, 0.5
        %v816 = vmul.f32 %v304, 0.5
        %v817 = vmul.f32 %v305, 0.5
        %v818 = vmul.f32 %v306, 0.5
        %v819 = vmul.f32 %v307, 0.5
        %v820 = vmul.f32 %v308, 0.5
        %v821 = vmul.f32 %v309, 0.5
        %v822 = vmul.f32 %v310, 0.5
        %v823 = vmul.f32 %v311, 0.5
        %v824 = vmul.f32 %v312, 0.5
        %v825 = vmul.f32 %v313, 0.5
        %v826 = vmul.f32 %v314, 0.5
        %v827 = vmul.f32 %v315, 0.5
        %v828 = vmul.f32 %v316, 0.5
        %v829 = vmul.f32 %v317, 0.5
        %v830 = vmul.f32 %v318, 0.5
        %v831 = vmul.f32 %v319, 0.5
        %v832 = vmul.f32 %v320, 0.5
        %v833 = vmul.f32 %v321, 0.5
        %v834 = vmul.f32 %v322, 0.5
        %v835 = vmul.f32 %v323, 0.5
        %v836 = vmul.f32 %v324, 0.5
        %v837 = vmul.f32 %v325, 0.5
        %v838 = vmul.f32 %v326, 0.5
        %v839 = vmul.f32 %v327, 0.5
        %v840 = vmul.f32 %v328, 0.5
        %v841 = vmul.f32 %v329, 0.5
        %v842 = vmul.f32 %v330, 0.5
        %v843 = vmul.f32 %v331, 0.5
        %v844 = vmul.f32 %v332, 0.5
        %v845 = vmul.f32 %v333, 0.5
        %v846 = vmul.f32 %v334, 0.5
        %v847 = vmul.f32 %v335, 0.5
        %v848 = vmul.f32 %v336, 0.5
        %v849 = vmul.f32 %v337, 0.5
        %v850 = vmul.f32 %v338, 0.5
        %v851 = vmul.f32 %v339, 0.5
        %v852 = vmul.f32 %v340, 0.5
        %v853 = vmul.f32 %v341, 0.5
        %v854 = vmul.f32 %v342, 0.5
        %v855 = vmul.f32 %v343, 0.5
        %v856 = vmul.f32 %v344, 0.5
        %v857 = vmul.f32 %v345, 0.5
        %v858 = vmul.f32 %v346, 0.5
        %v859 = vmul.f32 %v347, 0.5
        %v860 = vmul.f32 %v348, 0.5
        %v861 = vmul.f32 %v349, 0.5
        %v862 = vmul.f32 %v350, 0.5
        %v863 = vmul.f32 %v351, 0.5
        %v864 = vmul.f32 %v352, 0.5
        %v865 = vmul.f32 %v353, 0.5
        %v866 = vmul.f32 %v354, 0.5
        %v867 = vmul.f32 %v355, 0.5
        %v868 = vmul.f32 %v356, 0.5
        %v869 = vmul.f32 %v357, 0.5
        %v870 = vmul.f32 %v358, 0.5
        %v871 = vmul.f32 %v359, 0.5
        %v872 = vmul.f32 %v360, 0.5
        %v873 = vmul.f32 %v361, 0.5
        %v874 = vmul.f32 %v362, 0.5
        %v875 = vmul.f32 %v363, 0.5
        %v876 = vmul.f32 %v364, 0.5
        %v877 = vmul.f32 %v365, 0.5
        %v878 = vmul.f32 %v366, 0.5
        %v879 = vmul.f32 %v367, 0.5
        %v880 = vmul.f32 %v368, 0.5
        %v881 = vmul.f32 %v369, 0.5
        %v882 = vmul.f32 %v370, 0.5
        %v883 = vmul.f32 %v371, 0.5
        %v884 = vmul.f32 %v372, 0.5
        %v885 = vmul.f32 %v373, 0.5
        %v886 = vmul.f32 %v374, 0.5
        %v887 = vmul.f32 %v375, 0.5
        %v888 = vmul.f32 %v376, 0.5
        %v889 = vmul.f32 %v377, 0.5
        %v890 = vmul.f32 %v378, 0.5
        %v891 = vmul.f32 %v379, 0.5
        %v892 = vmul.f32 %v380, 0.5
        %v893 = vmul.f32 %v381, 0.5
        %v894 = vmul.f32 %v382, 0.5
        %v895 = vmul.f32 %v383, 0.5
        %v896 = vmul.f32 %v384, 0.5
        %v897 = vmul.f32 %v385, 0.5
        %v898 = vmul.f32 %v386, 0.5
        %v899 = vmul.f32 %v387, 0.5
        %v900 = vmul.f32 %v388, 0.5
        %v901 = vmul.f32 %v389, 0.5
        %v902 = vmul.f32 %v390, 0.5
        %v903 = vmul.f32 %v391, 0.5
        %v904 = vmul.f32 %v392, 0.5
        %v905 = vmul.f32 %v393, 0.5
        %v906 = vmul.f32 %v394, 0.5
        %v907 = vmul.f32 %v395, 0.5
        %v908 = vmul.f32 %v396, 0.5
        %v909 = vmul.f32 %v397, 0.5
        %v910 = vmul.f32 %v398, 0.5
        %v911 = vmul.f32 %v399, 0.5
        %v912 = vmul.f32 %v400, 0.5
        %v913 = vmul.f32 %v401, 0.5
        %v914 = vmul.f32 %v402, 0.5
        %v915 = vmul.f32 %v403, 0.5
        %v916 = vmul.f32 %v404, 0.5
        %v917 = vmul.f32 %v405, 0.5
        %v918 = vmul.f32 %v406, 0.5
        %v919 = vmul.f32 %v407, 0.5
        %v920 = vmul.f32 %v408, 0.5
        %v921 = vmul.f32 %v409, 0.5
        %v922 = vmul.f32 %v410, 0.5
        %v923 = vmul.f32 %v411, 0.5
        %v924 = vmul.f32 %v412, 0.5
        %v925 = vmul.f32 %v413, 0.5
        %v926 = vmul.f32 %v414, 0.5
        %v927 = vmul.f32 %v415, 0.5
        %v928 = vmul.f32 %v416, 0.5
        %v929 = vmul.f32 %v417, 0.5
        %v930 = vmul.f32 %v418, 0.5
        %v931 = vmul.f32 %v419, 0.5
        %v932 = vmul.f32 %v420, 0.5
        %v933 = vmul.f32 %v421, 0.5
        %v934 = vmul.f32 %v422, 0.5
        %v935 = vmul.f32 %v423, 0.5
        %v936 = vmul.f32 %v424, 0.5
        %v937 = vmul.f32 %v425, 0.5
        %v938 = vmul.f32 %v426, 0.5
        %v939 = vmul.f32 %v427, 0.5
        %v940 = vmul.f32 %v428, 0.5
        %v941 = vmul.f32 %v429, 0.5
        %v942 = vmul.f32 %v430, 0.5
        %v943 = vmul.f32 %v431, 0.5
        %v944 = vmul.f32 %v432, 0.5
        %v945 = vmul.f32 %v433, 0.5
        %v946 = vmul.f32 %v434, 0.5
        %v947 = vmul.f32 %v435, 0.5
        %v948 = vmul.f32 %v436, 0.5
        %v949 = vmul.f32 %v437, 0.5
        %v950 = vmul.f32 %v438, 0.5
        %v951 = vmul.f32 %v439, 0.5
        %v952 = vmul.f32 %v440, 0.5
        %v953 = vmul.f32 %v441, 0.5
        %v954 = vmul.f32 %v442, 0.5
        %v955 = vmul.f32 %v443, 0.5
        %v956 = vmul.f32 %v444, 0.5
        %v957 = vmul.f32 %v445, 0.5
        %v958 = vmul.f32 %v446, 0.5
        %v959 = vmul.f32 %v447, 0.5
        %v960 = vmul.f32 %v448, 0.5
        %v961 = vmul.f32 %v449, 0.5
        %v962 = vmul.f32 %v450, 0.5
        %v963 = vmul.f32 %v451, 0.5
        %v964 = vmul.f32 %v452, 0.5
        %v965 = vmul.f32 %v453, 0.5
        %v966 = vmul.f32 %v454, 0.5
        %v967 = vmul.f32 %v455, 0.5
        %v968 = vmul.f32 %v456, 0.5
        %v969 = vmul.f32 %v457, 0.5
        %v970 = vmul.f32 %v458, 0.5
        %v971 = vmul.f32 %v459, 0.5
        %v972 = vmul.f32 %v460, 0.5
        %v973 = vmul.f32 %v461, 0.5
        %v974 = vmul.f32 %v462, 0.5
        %v975 = vmul.f32 %v463, 0.5
        %v976 = vmul.f32 %v464, 0.5
        %v977 = vmul.f32 %v465, 0.5
        %v978 = vmul.f32 %v466, 0.5
        %v979 = vmul.f32 %v467, 0.5
        %v980 = vmul.f32 %v468, 0.5
        %v981 = vmul.f32 %v469, 0.5
        %v982 = vmul.f32 %v470, 0.5
        %v983 = vmul.f32 %v471, 0.5
        %v984 = vmul.f32 %v472, 0.5
        %v985 = vmul.f32 %v473, 0.5
        %v986 = vmul.f32 %v474, 0.5
        %v987 = vmul.f32 %v475, 0.5
        %v988 = vmul.f32 %v476, 0.5
        %v989 = vmul.f32 %v477, 0.5
        %v990 = vmul.f32 %v478, 0.5
        %v991 = vmul.f32 %v479, 0.5
        %v992 = vmul.f32 %v480, 0.5
        %v993 = vmul.f32 %v481, 0.5
        %v994 = vmul.f32 %v482, 0.5
        %v995 = vmul.f32 %v483, 0.5
        %v996 = vmul.f32 %v484, 0.5
        %v997 = vmul.f32 %v485, 0.5
        %v998 = vmul.f32 %v486, 0.5
        %v999 = vmul.f32 %v487, 0.5
        %v1000 = vmul.f32 %v488, 0.5
        %v1001 = vmul.f32 %v489, 0.5
        %v1002 = vmul.f32 %v490, 0.5
        %v1003 = vmul.f32 %v491, 0.5
        %v1004 = vmul.f32 %v492, 0.5
        %v1005 = vmul.f32 %v493, 0.5
        %v1006 = vmul.f32 %v494, 0.5
        %v1007 = vmul.f32 %v495, 0.5
        %v1008 = vmul.f32 %v496, 0.5
        %v1009 = vmul.f32 %v497, 0.5
        %v1010 = vmul.f32 %v498, 0.5
        %v1011 = vmul.f32 %v499, 0.5
        %v1012 = vmul.f32 %v500, 0.5
        %v1013 = vmul.f32 %v501, 0.5
        %v1014 = vmul.f32 %v502, 0.5
        %v1015 = vmul.f32 %v503, 0.5
        %v1016 = vmul.f32 %v504, 0.5
        %v1017 = vmul.f32 %v505, 0.5
        %v1018 = vmul.f32 %v506, 0.5
        %v1019 = vmul.f32 %v507, 0.5
        %v1020 = vmul.f32 %v508, 0.5
        %v1021 = vmul.f32 %v509, 0.5
        %v1022 = vmul.f32 %v510, 0.5
        %v1023 = vmul.f32 %v511, 0.5
        %v1024 = vmul.f32 %v512, 0.5
        %v1025 = vmul.f32 %v513, 0.5
        %v1026 = vmul.f32 %v514, 0.5
        %v1027 = vmul.f32 %v515, 0.5
        %v1028 = vmul.f32 %v516, 0.5
        %v1029 = vmul.f32 %v517, 0.5
        %v1030 = vmul.f32 %v518, 0.5
        %v1031 = vmul.f32 %v519, 0.5
        %v1032 = vmul.f32 %v520, 0.5
        %v1033 = vmul.f32 %v521, 0.5
        %v1034 = vmul.f32 %v522, 0.5
        %v1035 = vmul.f32 %v523, 0.5
        %v1036 = vmul.f32 %v524, 0.5
        %v1037 = vmul.f32 %v525, 0.5
        %v1038 = vmul.f32 %v526, 0.5
        %v1039 = vmul.f32 %v527, 0.5
        %v1040 = vmul.f32 %v528, 0.5
        %v1041 = vmul.f32 %v529, 0.5
        %v1042 = vmul.f32 %v530, 0.5
        %v1043 = vmul.f32 %v531, 0.5
        %v1044 = vmul.f32 %v532, 0.5
        %v1045 = vmul.f32 %v533, 0.5
        %v1046 = vmul.f32 %v534, 0.5
        %v1047 = vmul.f32 %v535, 0.5
        %v1048 = vmul.f32 %v536, 0.5
        %v1049 = vmul.f32 %v537, 0.5
        %v1050 = vmul.f32 %v538, 0.5
        %v1051 = vmul.f32 %v539, 0.5
        %v1052 = vmul.f32 %v540, 0.5
        %v1053 = vmul.f32 %v541, 0.5
        %v1054 = vmul.f32 %v542, 0.5
        %v1055 = vmul.f32 %v543, 0.5
        %v1056 = vmul.f32 %v544, 0.5
        %v1057 = vmul.f32 %v545, 0.5
        %v1058 = vmul.f32 %v546, 0.5
        %v1059 = vmul.f32 %v547, 0.5
        %v1060 = vmul.f32 %v548, 0.5
        %v1061 = vmul.f32 %v549, 0.5
        %v1062 = vmul.f32 %v550, 0.5
        %v1063 = vmul.f32 %v551, 0.5
        %v1064 = vmul.f32 %v552, 0.5
        %v1065 = vmul.f32 %v553, 0.5
        %v1066 = vmul.f32 %v554, 0.5
        %v1067 = vmul.f32 %v555, 0.5
        %v1068 = vmul.f32 %v556, 0.5
        %v1069 = vmul.f32 %v557, 0.5
        %v1070 = vmul.f32 %v558, 0.5
        %v1071 = vmul.f32 %v559, 0.5
        %v1072 = vmul.f32 %v560, 0.5
        %v1073 = vmul.f32 %v561, 0.5
        %v1074 = vmul.f32 %v562, 0.5
        %v1075 = vmul.f32 %v563, 0.5
        %v1076 = vmul.f32 %v564, 0.5
        %v1077 = vmul.f32 %v565, 0.5
        %v1078 = vmul.f32 %v566, 0.5
        %v1079 = vmul.f32 %v567, 0.5
        %v1080 = vmul.f32 %v568, 0.5
        %v1081 = vmul.f32 %v569, 0.5
        %v1082 = vmul.f32 %v570, 0.5
        %v1083 = vmul.f32 %v571, 0.5
        %v1084 = vmul.f32 %v572, 0.5
        %v1085 = vmul.f32 %v573, 0.5
        %v1086 = vmul.f32 %v574, 0.5
        %v1087 = vmul.f32 %v575, 0.5
        %v1088 = vmul.f32 %v576, 0.5
        %v1089 = vmul.f32 %v577, 0.5
        %v1090 = vmul.f32 %v578, 0.5
        %v1091 = vmul.f32 %v579, 0.5
        %v1092 = vmul.f32 %v580, 0.5
        %v1093 = vmul.f32 %v581, 0.5
        %v1094 = vmul.f32 %v582, 0.5
        %v1095 = vmul.f32 %v583, 0.5
        %v1096 = vmul.f32 %v584, 0.5
        %v1097 = vmul.f32 %v585, 0.5
        %v1098 = vmul.f32 %v586, 0.5
        %v1099 = vmul.f32 %v587, 0.5
        %v1100 = vmul.f32 %v588, 0.5
        %v1101 = vmul.f32 %v589, 0.5
        %v1102 = vmul.f32 %v590, 0.5
        %v1103 = vmul.f32 %v591, 0.5
        %v1104 = vmul.f32 %v592, 0.5
        %v1105 = vmul.f32 %v593, 0.5
        %v1106 = vmul.f32 %v594, 0.5
        %v1107 = vmul.f32 %v595, 0.5
        %v1108 = vmul.f32 %v596, 0.5
        %v1109 = vmul.f32 %v597, 0.5
        %v1110 = vmul.f32 %v598, 0.5
        %v1111 = vmul.f32 %v599, 0.5
        %v1112 = vmul.f32 %v600, 0.5
        %v1113 = vmul.f32 %v601, 0.5
        %v1114 = vmul.f32 %v602, 0.5
        %v1115 = vmul.f32 %v603, 0.5
        %v1116 = vmul.f32 %v604, 0.5
        %v1117 = vmul.f32 %v605, 0.5
        %v1118 = vmul.f32 %v606, 0.5
        %v1119 = vmul.f32 %v607, 0.5
        %v1120 = vmul.f32 %v608, 0.5
        %v1121 = vmul.f32 %v609, 0.5
        %v1122 = vmul.f32 %v610, 0.5
        %v1123 = vmul.f32 %v611, 0.5
        %v1124 = vmul.f32 %v612, 0.5
        %v1125 = vmul.f32 %v613, 0.5
        %v1126 = vmul.f32 %v614, 0.5
        %v1127 = vmul.f32 %v615, 0.5
        %v1128 = vmul.f32 %v616, 0.5
        %v1129 = vmul.f32 %v617, 0.5
        %v1130 = vmul.f32 %v618, 0.5
        %v1131 = vmul.f32 %v619, 0.5
        %v1132 = vmul.f32 %v620, 0.5
        %v1133 = vmul.f32 %v621, 0.5
        %v1134 = vmul.f32 %v622, 0.5
        %v1135 = vmul.f32 %v623, 0.5
        %v1136 = vmul.f32 %v624, 0.5
        %v1137 = vmul.f32 %v625, 0.5
        %v1138 = vmul.f32 %v626, 0.5
        %v1139 = vmul.f32 %v627, 0.5
        %v1140 = vmul.f32 %v628, 0.5
        %v1141 = vmul.f32 %v629, 0.5
        %v1142 = vmul.f32 %v630, 0.5
        %v1143 = vmul.f32 %v631, 0.5
        %v1144 = vmul.f32 %v632, 0.5
        %v1145 = vmul.f32 %v633, 0.5
        %v1146 = vmul.f32 %v634, 0.5
        %v1147 = vmul.f32 %v635, 0.5
        %v1148 = vmul.f32 %v636, 0.5
        %v1149 = vmul.f32 %v637, 0.5
        %v1150 = vmul.f32 %v638, 0.5
        %v1151 = vmul.f32 %v639, 0.5
        %v1152 = vmul.f32 %v640, 0.5
        %v1153 = vmul.f32 %v641, 0.5
        %v1154 = vmul.f32 %v642, 0.5
        %v1155 = vmul.f32 %v643, 0.5
        %v1156 = vmul.f32 %v644, 0.5
        %v1157 = vmul.f32 %v645, 0.5
        %v1158 = vmul.f32 %v646, 0.5
        %v1159 = vmul.f32 %v647, 0.5
        %v1160 = vmul.f32 %v648, 0.5
        %v1161 = vmul.f32 %v649, 0.5
        %v1162 = vtanh.pop %v650
        %v1163 = vtanh.pop %v651
        %v1164 = vtanh.pop %v652
        %v1165 = vtanh.pop %v653
        %v1166 = vtanh.pop %v654
        %v1167 = vtanh.pop %v655
        %v1168 = vtanh.pop %v656
        %v1169 = vtanh.pop %v657
        %v1170 = vtanh.pop %v658
        %v1171 = vtanh.pop %v659
        %v1172 = vtanh.pop %v660
        %v1173 = vtanh.pop %v661
        %v1174 = vtanh.pop %v662
        %v1175 = vtanh.pop %v663
        %v1176 = vtanh.pop %v664
        %v1177 = vtanh.pop %v665
        %v1178 = vtanh.pop %v666
        %v1179 = vtanh.pop %v667
        %v1180 = vtanh.pop %v668
        %v1181 = vtanh.pop %v669
        %v1182 = vtanh.pop %v670
        %v1183 = vtanh.pop %v671
        %v1184 = vtanh.pop %v672
        %v1185 = vtanh.pop %v673
        %v1186 = vtanh.pop %v674
        %v1187 = vtanh.pop %v675
        %v1188 = vtanh.pop %v676
        %v1189 = vtanh.pop %v677
        %v1190 = vtanh.pop %v678
        %v1191 = vtanh.pop %v679
        %v1192 = vtanh.pop %v680
        %v1193 = vtanh.pop %v681
        %v1194 = vtanh.pop %v682
        %v1195 = vtanh.pop %v683
        %v1196 = vtanh.pop %v684
        %v1197 = vtanh.pop %v685
        %v1198 = vtanh.pop %v686
        %v1199 = vtanh.pop %v687
        %v1200 = vtanh.pop %v688
        %v1201 = vtanh.pop %v689
        %v1202 = vtanh.pop %v690
        %v1203 = vtanh.pop %v691
        %v1204 = vtanh.pop %v692
        %v1205 = vtanh.pop %v693
        %v1206 = vtanh.pop %v694
        %v1207 = vtanh.pop %v695
        %v1208 = vtanh.pop %v696
        %v1209 = vtanh.pop %v697
        %v1210 = vtanh.pop %v698
        %v1211 = vtanh.pop %v699
        %v1212 = vtanh.pop %v700
        %v1213 = vtanh.pop %v701
        %v1214 = vtanh.pop %v702
        %v1215 = vtanh.pop %v703
        %v1216 = vtanh.pop %v704
        %v1217 = vtanh.pop %v705
        %v1218 = vtanh.pop %v706
        %v1219 = vtanh.pop %v707
        %v1220 = vtanh.pop %v708
        %v1221 = vtanh.pop %v709
        %v1222 = vtanh.pop %v710
        %v1223 = vtanh.pop %v711
        %v1224 = vtanh.pop %v712
        %v1225 = vtanh.pop %v713
        %v1226 = vtanh.pop %v714
        %v1227 = vtanh.pop %v715
        %v1228 = vtanh.pop %v716
        %v1229 = vtanh.pop %v717
        %v1230 = vtanh.pop %v718
        %v1231 = vtanh.pop %v719
        %v1232 = vtanh.pop %v720
        %v1233 = vtanh.pop %v721
        %v1234 = vtanh.pop %v722
        %v1235 = vtanh.pop %v723
        %v1236 = vtanh.pop %v724
        %v1237 = vtanh.pop %v725
        %v1238 = vtanh.pop %v726
        %v1239 = vtanh.pop %v727
        %v1240 = vtanh.pop %v728
        %v1241 = vtanh.pop %v729
        %v1242 = vtanh.pop %v730
        %v1243 = vtanh.pop %v731
        %v1244 = vtanh.pop %v732
        %v1245 = vtanh.pop %v733
        %v1246 = vtanh.pop %v734
        %v1247 = vtanh.pop %v735
        %v1248 = vtanh.pop %v736
        %v1249 = vtanh.pop %v737
        %v1250 = vtanh.pop %v738
        %v1251 = vtanh.pop %v739
        %v1252 = vtanh.pop %v740
        %v1253 = vtanh.pop %v741
        %v1254 = vtanh.pop %v742
        %v1255 = vtanh.pop %v743
        %v1256 = vtanh.pop %v744
        %v1257 = vtanh.pop %v745
        %v1258 = vtanh.pop %v746
        %v1259 = vtanh.pop %v747
        %v1260 = vtanh.pop %v748
        %v1261 = vtanh.pop %v749
        %v1262 = vtanh.pop %v750
        %v1263 = vtanh.pop %v751
        %v1264 = vtanh.pop %v752
        %v1265 = vtanh.pop %v753
        %v1266 = vtanh.pop %v754
        %v1267 = vtanh.pop %v755
        %v1268 = vtanh.pop %v756
        %v1269 = vtanh.pop %v757
        %v1270 = vtanh.pop %v758
        %v1271 = vtanh.pop %v759
        %v1272 = vtanh.pop %v760
        %v1273 = vtanh.pop %v761
        %v1274 = vtanh.pop %v762
        %v1275 = vtanh.pop %v763
        %v1276 = vtanh.pop %v764
        %v1277 = vtanh.pop %v765
        %v1278 = vtanh.pop %v766
        %v1279 = vtanh.pop %v767
        %v1280 = vtanh.pop %v768
        %v1281 = vtanh.pop %v769
        %v1282 = vtanh.pop %v770
        %v1283 = vtanh.pop %v771
        %v1284 = vtanh.pop %v772
        %v1285 = vtanh.pop %v773
        %v1286 = vtanh.pop %v774
        %v1287 = vtanh.pop %v775
        %v1288 = vtanh.pop %v776
        %v1289 = vtanh.pop %v777
        %v1290 = vtanh.pop %v778
        %v1291 = vtanh.pop %v779
        %v1292 = vtanh.pop %v780
        %v1293 = vtanh.pop %v781
        %v1294 = vtanh.pop %v782
        %v1295 = vtanh.pop %v783
        %v1296 = vtanh.pop %v784
        %v1297 = vtanh.pop %v785
        %v1298 = vtanh.pop %v786
        %v1299 = vtanh.pop %v787
        %v1300 = vtanh.pop %v788
        %v1301 = vtanh.pop %v789
        %v1302 = vtanh.pop %v790
        %v1303 = vtanh.pop %v791
        %v1304 = vtanh.pop %v792
        %v1305 = vtanh.pop %v793
        %v1306 = vtanh.pop %v794
        %v1307 = vtanh.pop %v795
        %v1308 = vtanh.pop %v796
        %v1309 = vtanh.pop %v797
        %v1310 = vtanh.pop %v798
        %v1311 = vtanh.pop %v799
        %v1312 = vtanh.pop %v800
        %v1313 = vtanh.pop %v801
        %v1314 = vtanh.pop %v802
        %v1315 = vtanh.pop %v803
        %v1316 = vtanh.pop %v804
        %v1317 = vtanh.pop %v805
        %v1318 = vtanh.pop %v806
        %v1319 = vtanh.pop %v807
        %v1320 = vtanh.pop %v808
        %v1321 = vtanh.pop %v809
        %v1322 = vtanh.pop %v810
        %v1323 = vtanh.pop %v811
        %v1324 = vtanh.pop %v812
        %v1325 = vtanh.pop %v813
        %v1326 = vtanh.pop %v814
        %v1327 = vtanh.pop %v815
        %v1328 = vtanh.pop %v816
        %v1329 = vtanh.pop %v817
        %v1330 = vtanh.pop %v818
        %v1331 = vtanh.pop %v819
        %v1332 = vtanh.pop %v820
        %v1333 = vtanh.pop %v821
        %v1334 = vtanh.pop %v822
        %v1335 = vtanh.pop %v823
        %v1336 = vtanh.pop %v824
        %v1337 = vtanh.pop %v825
        %v1338 = vtanh.pop %v826
        %v1339 = vtanh.pop %v827
        %v1340 = vtanh.pop %v828
        %v1341 = vtanh.pop %v829
        %v1342 = vtanh.pop %v830
        %v1343 = vtanh.pop %v831
        %v1344 = vtanh.pop %v832
        %v1345 = vtanh.pop %v833
        %v1346 = vtanh.pop %v834
        %v1347 = vtanh.pop %v835
        %v1348 = vtanh.pop %v836
        %v1349 = vtanh.pop %v837
        %v1350 = vtanh.pop %v838
        %v1351 = vtanh.pop %v839
        %v1352 = vtanh.pop %v840
        %v1353 = vtanh.pop %v841
        %v1354 = vtanh.pop %v842
        %v1355 = vtanh.pop %v843
        %v1356 = vtanh.pop %v844
        %v1357 = vtanh.pop %v845
        %v1358 = vtanh.pop %v846
        %v1359 = vtanh.pop %v847
        %v1360 = vtanh.pop %v848
        %v1361 = vtanh.pop %v849
        %v1362 = vtanh.pop %v850
        %v1363 = vtanh.pop %v851
        %v1364 = vtanh.pop %v852
        %v1365 = vtanh.pop %v853
        %v1366 = vtanh.pop %v854
        %v1367 = vtanh.pop %v855
        %v1368 = vtanh.pop %v856
        %v1369 = vtanh.pop %v857
        %v1370 = vtanh.pop %v858
        %v1371 = vtanh.pop %v859
        %v1372 = vtanh.pop %v860
        %v1373 = vtanh.pop %v861
        %v1374 = vtanh.pop %v862
        %v1375 = vtanh.pop %v863
        %v1376 = vtanh.pop %v864
        %v1377 = vtanh.pop %v865
        %v1378 = vtanh.pop %v866
        %v1379 = vtanh.pop %v867
        %v1380 = vtanh.pop %v868
        %v1381 = vtanh.pop %v869
        %v1382 = vtanh.pop %v870
        %v1383 = vtanh.pop %v871
        %v1384 = vtanh.pop %v872
        %v1385 = vtanh.pop %v873
        %v1386 = vtanh.pop %v874
        %v1387 = vtanh.pop %v875
        %v1388 = vtanh.pop %v876
        %v1389 = vtanh.pop %v877
        %v1390 = vtanh.pop %v878
        %v1391 = vtanh.pop %v879
        %v1392 = vtanh.pop %v880
        %v1393 = vtanh.pop %v881
        %v1394 = vtanh.pop %v882
        %v1395 = vtanh.pop %v883
        %v1396 = vtanh.pop %v884
        %v1397 = vtanh.pop %v885
        %v1398 = vtanh.pop %v886
        %v1399 = vtanh.pop %v887
        %v1400 = vtanh.pop %v888
        %v1401 = vtanh.pop %v889
        %v1402 = vtanh.pop %v890
        %v1403 = vtanh.pop %v891
        %v1404 = vtanh.pop %v892
        %v1405 = vtanh.pop %v893
        %v1406 = vtanh.pop %v894
        %v1407 = vtanh.pop %v895
        %v1408 = vtanh.pop %v896
        %v1409 = vtanh.pop %v897
        %v1410 = vtanh.pop %v898
        %v1411 = vtanh.pop %v899
        %v1412 = vtanh.pop %v900
        %v1413 = vtanh.pop %v901
        %v1414 = vtanh.pop %v902
        %v1415 = vtanh.pop %v903
        %v1416 = vtanh.pop %v904
        %v1417 = vtanh.pop %v905
        %v1418 = vtanh.pop %v906
        %v1419 = vtanh.pop %v907
        %v1420 = vtanh.pop %v908
        %v1421 = vtanh.pop %v909
        %v1422 = vtanh.pop %v910
        %v1423 = vtanh.pop %v911
        %v1424 = vtanh.pop %v912
        %v1425 = vtanh.pop %v913
        %v1426 = vtanh.pop %v914
        %v1427 = vtanh.pop %v915
        %v1428 = vtanh.pop %v916
        %v1429 = vtanh.pop %v917
        %v1430 = vtanh.pop %v918
        %v1431 = vtanh.pop %v919
        %v1432 = vtanh.pop %v920
        %v1433 = vtanh.pop %v921
        %v1434 = vtanh.pop %v922
        %v1435 = vtanh.pop %v923
        %v1436 = vtanh.pop %v924
        %v1437 = vtanh.pop %v925
        %v1438 = vtanh.pop %v926
        %v1439 = vtanh.pop %v927
        %v1440 = vtanh.pop %v928
        %v1441 = vtanh.pop %v929
        %v1442 = vtanh.pop %v930
        %v1443 = vtanh.pop %v931
        %v1444 = vtanh.pop %v932
        %v1445 = vtanh.pop %v933
        %v1446 = vtanh.pop %v934
        %v1447 = vtanh.pop %v935
        %v1448 = vtanh.pop %v936
        %v1449 = vtanh.pop %v937
        %v1450 = vtanh.pop %v938
        %v1451 = vtanh.pop %v939
        %v1452 = vtanh.pop %v940
        %v1453 = vtanh.pop %v941
        %v1454 = vtanh.pop %v942
        %v1455 = vtanh.pop %v943
        %v1456 = vtanh.pop %v944
        %v1457 = vtanh.pop %v945
        %v1458 = vtanh.pop %v946
        %v1459 = vtanh.pop %v947
        %v1460 = vtanh.pop %v948
        %v1461 = vtanh.pop %v949
        %v1462 = vtanh.pop %v950
        %v1463 = vtanh.pop %v951
        %v1464 = vtanh.pop %v952
        %v1465 = vtanh.pop %v953
        %v1466 = vtanh.pop %v954
        %v1467 = vtanh.pop %v955
        %v1468 = vtanh.pop %v956
        %v1469 = vtanh.pop %v957
        %v1470 = vtanh.pop %v958
        %v1471 = vtanh.pop %v959
        %v1472 = vtanh.pop %v960
        %v1473 = vtanh.pop %v961
        %v1474 = vtanh.pop %v962
        %v1475 = vtanh.pop %v963
        %v1476 = vtanh.pop %v964
        %v1477 = vtanh.pop %v965
        %v1478 = vtanh.pop %v966
        %v1479 = vtanh.pop %v967
        %v1480 = vtanh.pop %v968
        %v1481 = vtanh.pop %v969
        %v1482 = vtanh.pop %v970
        %v1483 = vtanh.pop %v971
        %v1484 = vtanh.pop %v972
        %v1485 = vtanh.pop %v973
        %v1486 = vtanh.pop %v974
        %v1487 = vtanh.pop %v975
        %v1488 = vtanh.pop %v976
        %v1489 = vtanh.pop %v977
        %v1490 = vtanh.pop %v978
        %v1491 = vtanh.pop %v979
        %v1492 = vtanh.pop %v980
        %v1493 = vtanh.pop %v981
        %v1494 = vtanh.pop %v982
        %v1495 = vtanh.pop %v983
        %v1496 = vtanh.pop %v984
        %v1497 = vtanh.pop %v985
        %v1498 = vtanh.pop %v986
        %v1499 = vtanh.pop %v987
        %v1500 = vtanh.pop %v988
        %v1501 = vtanh.pop %v989
        %v1502 = vtanh.pop %v990
        %v1503 = vtanh.pop %v991
        %v1504 = vtanh.pop %v992
        %v1505 = vtanh.pop %v993
        %v1506 = vtanh.pop %v994
        %v1507 = vtanh.pop %v995
        %v1508 = vtanh.pop %v996
        %v1509 = vtanh.pop %v997
        %v1510 = vtanh.pop %v998
        %v1511 = vtanh.pop %v999
        %v1512 = vtanh.pop %v1000
        %v1513 = vtanh.pop %v1001
        %v1514 = vtanh.pop %v1002
        %v1515 = vtanh.pop %v1003
        %v1516 = vtanh.pop %v1004
        %v1517 = vtanh.pop %v1005
        %v1518 = vtanh.pop %v1006
        %v1519 = vtanh.pop %v1007
        %v1520 = vtanh.pop %v1008
        %v1521 = vtanh.pop %v1009
        %v1522 = vtanh.pop %v1010
        %v1523 = vtanh.pop %v1011
        %v1524 = vtanh.pop %v1012
        %v1525 = vtanh.pop %v1013
        %v1526 = vtanh.pop %v1014
        %v1527 = vtanh.pop %v1015
        %v1528 = vtanh.pop %v1016
        %v1529 = vtanh.pop %v1017
        %v1530 = vtanh.pop %v1018
        %v1531 = vtanh.pop %v1019
        %v1532 = vtanh.pop %v1020
        %v1533 = vtanh.pop %v1021
        %v1534 = vtanh.pop %v1022
        %v1535 = vtanh.pop %v1023
        %v1536 = vtanh.pop %v1024
        %v1537 = vtanh.pop %v1025
        %v1538 = vtanh.pop %v1026
        %v1539 = vtanh.pop %v1027
        %v1540 = vtanh.pop %v1028
        %v1541 = vtanh.pop %v1029
        %v1542 = vtanh.pop %v1030
        %v1543 = vtanh.pop %v1031
        %v1544 = vtanh.pop %v1032
        %v1545 = vtanh.pop %v1033
        %v1546 = vtanh.pop %v1034
        %v1547 = vtanh.pop %v1035
        %v1548 = vtanh.pop %v1036
        %v1549 = vtanh.pop %v1037
        %v1550 = vtanh.pop %v1038
        %v1551 = vtanh.pop %v1039
        %v1552 = vtanh.pop %v1040
        %v1553 = vtanh.pop %v1041
        %v1554 = vtanh.pop %v1042
        %v1555 = vtanh.pop %v1043
        %v1556 = vtanh.pop %v1044
        %v1557 = vtanh.pop %v1045
        %v1558 = vtanh.pop %v1046
        %v1559 = vtanh.pop %v1047
        %v1560 = vtanh.pop %v1048
        %v1561 = vtanh.pop %v1049
        %v1562 = vtanh.pop %v1050
        %v1563 = vtanh.pop %v1051
        %v1564 = vtanh.pop %v1052
        %v1565 = vtanh.pop %v1053
        %v1566 = vtanh.pop %v1054
        %v1567 = vtanh.pop %v1055
        %v1568 = vtanh.pop %v1056
        %v1569 = vtanh.pop %v1057
        %v1570 = vtanh.pop %v1058
        %v1571 = vtanh.pop %v1059
        %v1572 = vtanh.pop %v1060
        %v1573 = vtanh.pop %v1061
        %v1574 = vtanh.pop %v1062
        %v1575 = vtanh.pop %v1063
        %v1576 = vtanh.pop %v1064
        %v1577 = vtanh.pop %v1065
        %v1578 = vtanh.pop %v1066
        %v1579 = vtanh.pop %v1067
        %v1580 = vtanh.pop %v1068
        %v1581 = vtanh.pop %v1069
        %v1582 = vtanh.pop %v1070
        %v1583 = vtanh.pop %v1071
        %v1584 = vtanh.pop %v1072
        %v1585 = vtanh.pop %v1073
        %v1586 = vtanh.pop %v1074
        %v1587 = vtanh.pop %v1075
        %v1588 = vtanh.pop %v1076
        %v1589 = vtanh.pop %v1077
        %v1590 = vtanh.pop %v1078
        %v1591 = vtanh.pop %v1079
        %v1592 = vtanh.pop %v1080
        %v1593 = vtanh.pop %v1081
        %v1594 = vtanh.pop %v1082
        %v1595 = vtanh.pop %v1083
        %v1596 = vtanh.pop %v1084
        %v1597 = vtanh.pop %v1085
        %v1598 = vtanh.pop %v1086
        %v1599 = vtanh.pop %v1087
        %v1600 = vtanh.pop %v1088
        %v1601 = vtanh.pop %v1089
        %v1602 = vtanh.pop %v1090
        %v1603 = vtanh.pop %v1091
        %v1604 = vtanh.pop %v1092
        %v1605 = vtanh.pop %v1093
        %v1606 = vtanh.pop %v1094
        %v1607 = vtanh.pop %v1095
        %v1608 = vtanh.pop %v1096
        %v1609 = vtanh.pop %v1097
        %v1610 = vtanh.pop %v1098
        %v1611 = vtanh.pop %v1099
        %v1612 = vtanh.pop %v1100
        %v1613 = vtanh.pop %v1101
        %v1614 = vtanh.pop %v1102
        %v1615 = vtanh.pop %v1103
        %v1616 = vtanh.pop %v1104
        %v1617 = vtanh.pop %v1105
        %v1618 = vtanh.pop %v1106
        %v1619 = vtanh.pop %v1107
        %v1620 = vtanh.pop %v1108
        %v1621 = vtanh.pop %v1109
        %v1622 = vtanh.pop %v1110
        %v1623 = vtanh.pop %v1111
        %v1624 = vtanh.pop %v1112
        %v1625 = vtanh.pop %v1113
        %v1626 = vtanh.pop %v1114
        %v1627 = vtanh.pop %v1115
        %v1628 = vtanh.pop %v1116
        %v1629 = vtanh.pop %v1117
        %v1630 = vtanh.pop %v1118
        %v1631 = vtanh.pop %v1119
        %v1632 = vtanh.pop %v1120
        %v1633 = vtanh.pop %v1121
        %v1634 = vtanh.pop %v1122
        %v1635 = vtanh.pop %v1123
        %v1636 = vtanh.pop %v1124
        %v1637 = vtanh.pop %v1125
        %v1638 = vtanh.pop %v1126
        %v1639 = vtanh.pop %v1127
        %v1640 = vtanh.pop %v1128
        %v1641 = vtanh.pop %v1129
        %v1642 = vtanh.pop %v1130
        %v1643 = vtanh.pop %v1131
        %v1644 = vtanh.pop %v1132
        %v1645 = vtanh.pop %v1133
        %v1646 = vtanh.pop %v1134
        %v1647 = vtanh.pop %v1135
        %v1648 = vtanh.pop %v1136
        %v1649 = vtanh.pop %v1137
        %v1650 = vtanh.pop %v1138
        %v1651 = vtanh.pop %v1139
        %v1652 = vtanh.pop %v1140
        %v1653 = vtanh.pop %v1141
        %v1654 = vtanh.pop %v1142
        %v1655 = vtanh.pop %v1143
        %v1656 = vtanh.pop %v1144
        %v1657 = vtanh.pop %v1145
        %v1658 = vtanh.pop %v1146
        %v1659 = vtanh.pop %v1147
        %v1660 = vtanh.pop %v1148
        %v1661 = vtanh.pop %v1149
        %v1662 = vtanh.pop %v1150
        %v1663 = vtanh.pop %v1151
        %v1664 = vtanh.pop %v1152
        %v1665 = vtanh.pop %v1153
        %v1666 = vtanh.pop %v1154
        %v1667 = vtanh.pop %v1155
        %v1668 = vtanh.pop %v1156
        %v1669 = vtanh.pop %v1157
        %v1670 = vtanh.pop %v1158
        %v1671 = vtanh.pop %v1159
        %v1672 = vtanh.pop %v1160
        %v1673 = vtanh.pop %v1161
        %v1674 = vmul.f32 %v1162, 0.5
        %v1675 = vmul.f32 %v1163, 0.5
        %v1676 = vmul.f32 %v1164, 0.5
        %v1677 = vmul.f32 %v1165, 0.5
        %v1678 = vmul.f32 %v1166, 0.5
        %v1679 = vmul.f32 %v1167, 0.5
        %v1680 = vmul.f32 %v1168, 0.5
        %v1681 = vmul.f32 %v1169, 0.5
        %v1682 = vmul.f32 %v1170, 0.5
        %v1683 = vmul.f32 %v1171, 0.5
        %v1684 = vmul.f32 %v1172, 0.5
        %v1685 = vmul.f32 %v1173, 0.5
        %v1686 = vmul.f32 %v1174, 0.5
        %v1687 = vmul.f32 %v1175, 0.5
        %v1688 = vmul.f32 %v1176, 0.5
        %v1689 = vmul.f32 %v1177, 0.5
        %v1690 = vmul.f32 %v1178, 0.5
        %v1691 = vmul.f32 %v1179, 0.5
        %v1692 = vmul.f32 %v1180, 0.5
        %v1693 = vmul.f32 %v1181, 0.5
        %v1694 = vmul.f32 %v1182, 0.5
        %v1695 = vmul.f32 %v1183, 0.5
        %v1696 = vmul.f32 %v1184, 0.5
        %v1697 = vmul.f32 %v1185, 0.5
        %v1698 = vmul.f32 %v1186, 0.5
        %v1699 = vmul.f32 %v1187, 0.5
        %v1700 = vmul.f32 %v1188, 0.5
        %v1701 = vmul.f32 %v1189, 0.5
        %v1702 = vmul.f32 %v1190, 0.5
        %v1703 = vmul.f32 %v1191, 0.5
        %v1704 = vmul.f32 %v1192, 0.5
        %v1705 = vmul.f32 %v1193, 0.5
        %v1706 = vmul.f32 %v1194, 0.5
        %v1707 = vmul.f32 %v1195, 0.5
        %v1708 = vmul.f32 %v1196, 0.5
        %v1709 = vmul.f32 %v1197, 0.5
        %v1710 = vmul.f32 %v1198, 0.5
        %v1711 = vmul.f32 %v1199, 0.5
        %v1712 = vmul.f32 %v1200, 0.5
        %v1713 = vmul.f32 %v1201, 0.5
        %v1714 = vmul.f32 %v1202, 0.5
        %v1715 = vmul.f32 %v1203, 0.5
        %v1716 = vmul.f32 %v1204, 0.5
        %v1717 = vmul.f32 %v1205, 0.5
        %v1718 = vmul.f32 %v1206, 0.5
        %v1719 = vmul.f32 %v1207, 0.5
        %v1720 = vmul.f32 %v1208, 0.5
        %v1721 = vmul.f32 %v1209, 0.5
        %v1722 = vmul.f32 %v1210, 0.5
        %v1723 = vmul.f32 %v1211, 0.5
        %v1724 = vmul.f32 %v1212, 0.5
        %v1725 = vmul.f32 %v1213, 0.5
        %v1726 = vmul.f32 %v1214, 0.5
        %v1727 = vmul.f32 %v1215, 0.5
        %v1728 = vmul.f32 %v1216, 0.5
        %v1729 = vmul.f32 %v1217, 0.5
        %v1730 = vmul.f32 %v1218, 0.5
        %v1731 = vmul.f32 %v1219, 0.5
        %v1732 = vmul.f32 %v1220, 0.5
        %v1733 = vmul.f32 %v1221, 0.5
        %v1734 = vmul.f32 %v1222, 0.5
        %v1735 = vmul.f32 %v1223, 0.5
        %v1736 = vmul.f32 %v1224, 0.5
        %v1737 = vmul.f32 %v1225, 0.5
        %v1738 = vmul.f32 %v1226, 0.5
        %v1739 = vmul.f32 %v1227, 0.5
        %v1740 = vmul.f32 %v1228, 0.5
        %v1741 = vmul.f32 %v1229, 0.5
        %v1742 = vmul.f32 %v1230, 0.5
        %v1743 = vmul.f32 %v1231, 0.5
        %v1744 = vmul.f32 %v1232, 0.5
        %v1745 = vmul.f32 %v1233, 0.5
        %v1746 = vmul.f32 %v1234, 0.5
        %v1747 = vmul.f32 %v1235, 0.5
        %v1748 = vmul.f32 %v1236, 0.5
        %v1749 = vmul.f32 %v1237, 0.5
        %v1750 = vmul.f32 %v1238, 0.5
        %v1751 = vmul.f32 %v1239, 0.5
        %v1752 = vmul.f32 %v1240, 0.5
        %v1753 = vmul.f32 %v1241, 0.5
        %v1754 = vmul.f32 %v1242, 0.5
        %v1755 = vmul.f32 %v1243, 0.5
        %v1756 = vmul.f32 %v1244, 0.5
        %v1757 = vmul.f32 %v1245, 0.5
        %v1758 = vmul.f32 %v1246, 0.5
        %v1759 = vmul.f32 %v1247, 0.5
        %v1760 = vmul.f32 %v1248, 0.5
        %v1761 = vmul.f32 %v1249, 0.5
        %v1762 = vmul.f32 %v1250, 0.5
        %v1763 = vmul.f32 %v1251, 0.5
        %v1764 = vmul.f32 %v1252, 0.5
        %v1765 = vmul.f32 %v1253, 0.5
        %v1766 = vmul.f32 %v1254, 0.5
        %v1767 = vmul.f32 %v1255, 0.5
        %v1768 = vmul.f32 %v1256, 0.5
        %v1769 = vmul.f32 %v1257, 0.5
        %v1770 = vmul.f32 %v1258, 0.5
        %v1771 = vmul.f32 %v1259, 0.5
        %v1772 = vmul.f32 %v1260, 0.5
        %v1773 = vmul.f32 %v1261, 0.5
        %v1774 = vmul.f32 %v1262, 0.5
        %v1775 = vmul.f32 %v1263, 0.5
        %v1776 = vmul.f32 %v1264, 0.5
        %v1777 = vmul.f32 %v1265, 0.5
        %v1778 = vmul.f32 %v1266, 0.5
        %v1779 = vmul.f32 %v1267, 0.5
        %v1780 = vmul.f32 %v1268, 0.5
        %v1781 = vmul.f32 %v1269, 0.5
        %v1782 = vmul.f32 %v1270, 0.5
        %v1783 = vmul.f32 %v1271, 0.5
        %v1784 = vmul.f32 %v1272, 0.5
        %v1785 = vmul.f32 %v1273, 0.5
        %v1786 = vmul.f32 %v1274, 0.5
        %v1787 = vmul.f32 %v1275, 0.5
        %v1788 = vmul.f32 %v1276, 0.5
        %v1789 = vmul.f32 %v1277, 0.5
        %v1790 = vmul.f32 %v1278, 0.5
        %v1791 = vmul.f32 %v1279, 0.5
        %v1792 = vmul.f32 %v1280, 0.5
        %v1793 = vmul.f32 %v1281, 0.5
        %v1794 = vmul.f32 %v1282, 0.5
        %v1795 = vmul.f32 %v1283, 0.5
        %v1796 = vmul.f32 %v1284, 0.5
        %v1797 = vmul.f32 %v1285, 0.5
        %v1798 = vmul.f32 %v1286, 0.5
        %v1799 = vmul.f32 %v1287, 0.5
        %v1800 = vmul.f32 %v1288, 0.5
        %v1801 = vmul.f32 %v1289, 0.5
        %v1802 = vmul.f32 %v1290, 0.5
        %v1803 = vmul.f32 %v1291, 0.5
        %v1804 = vmul.f32 %v1292, 0.5
        %v1805 = vmul.f32 %v1293, 0.5
        %v1806 = vmul.f32 %v1294, 0.5
        %v1807 = vmul.f32 %v1295, 0.5
        %v1808 = vmul.f32 %v1296, 0.5
        %v1809 = vmul.f32 %v1297, 0.5
        %v1810 = vmul.f32 %v1298, 0.5
        %v1811 = vmul.f32 %v1299, 0.5
        %v1812 = vmul.f32 %v1300, 0.5
        %v1813 = vmul.f32 %v1301, 0.5
        %v1814 = vmul.f32 %v1302, 0.5
        %v1815 = vmul.f32 %v1303, 0.5
        %v1816 = vmul.f32 %v1304, 0.5
        %v1817 = vmul.f32 %v1305, 0.5
        %v1818 = vmul.f32 %v1306, 0.5
        %v1819 = vmul.f32 %v1307, 0.5
        %v1820 = vmul.f32 %v1308, 0.5
        %v1821 = vmul.f32 %v1309, 0.5
        %v1822 = vmul.f32 %v1310, 0.5
        %v1823 = vmul.f32 %v1311, 0.5
        %v1824 = vmul.f32 %v1312, 0.5
        %v1825 = vmul.f32 %v1313, 0.5
        %v1826 = vmul.f32 %v1314, 0.5
        %v1827 = vmul.f32 %v1315, 0.5
        %v1828 = vmul.f32 %v1316, 0.5
        %v1829 = vmul.f32 %v1317, 0.5
        %v1830 = vmul.f32 %v1318, 0.5
        %v1831 = vmul.f32 %v1319, 0.5
        %v1832 = vmul.f32 %v1320, 0.5
        %v1833 = vmul.f32 %v1321, 0.5
        %v1834 = vmul.f32 %v1322, 0.5
        %v1835 = vmul.f32 %v1323, 0.5
        %v1836 = vmul.f32 %v1324, 0.5
        %v1837 = vmul.f32 %v1325, 0.5
        %v1838 = vmul.f32 %v1326, 0.5
        %v1839 = vmul.f32 %v1327, 0.5
        %v1840 = vmul.f32 %v1328, 0.5
        %v1841 = vmul.f32 %v1329, 0.5
        %v1842 = vmul.f32 %v1330, 0.5
        %v1843 = vmul.f32 %v1331, 0.5
        %v1844 = vmul.f32 %v1332, 0.5
        %v1845 = vmul.f32 %v1333, 0.5
        %v1846 = vmul.f32 %v1334, 0.5
        %v1847 = vmul.f32 %v1335, 0.5
        %v1848 = vmul.f32 %v1336, 0.5
        %v1849 = vmul.f32 %v1337, 0.5
        %v1850 = vmul.f32 %v1338, 0.5
        %v1851 = vmul.f32 %v1339, 0.5
        %v1852 = vmul.f32 %v1340, 0.5
        %v1853 = vmul.f32 %v1341, 0.5
        %v1854 = vmul.f32 %v1342, 0.5
        %v1855 = vmul.f32 %v1343, 0.5
        %v1856 = vmul.f32 %v1344, 0.5
        %v1857 = vmul.f32 %v1345, 0.5
        %v1858 = vmul.f32 %v1346, 0.5
        %v1859 = vmul.f32 %v1347, 0.5
        %v1860 = vmul.f32 %v1348, 0.5
        %v1861 = vmul.f32 %v1349, 0.5
        %v1862 = vmul.f32 %v1350, 0.5
        %v1863 = vmul.f32 %v1351, 0.5
        %v1864 = vmul.f32 %v1352, 0.5
        %v1865 = vmul.f32 %v1353, 0.5
        %v1866 = vmul.f32 %v1354, 0.5
        %v1867 = vmul.f32 %v1355, 0.5
        %v1868 = vmul.f32 %v1356, 0.5
        %v1869 = vmul.f32 %v1357, 0.5
        %v1870 = vmul.f32 %v1358, 0.5
        %v1871 = vmul.f32 %v1359, 0.5
        %v1872 = vmul.f32 %v1360, 0.5
        %v1873 = vmul.f32 %v1361, 0.5
        %v1874 = vmul.f32 %v1362, 0.5
        %v1875 = vmul.f32 %v1363, 0.5
        %v1876 = vmul.f32 %v1364, 0.5
        %v1877 = vmul.f32 %v1365, 0.5
        %v1878 = vmul.f32 %v1366, 0.5
        %v1879 = vmul.f32 %v1367, 0.5
        %v1880 = vmul.f32 %v1368, 0.5
        %v1881 = vmul.f32 %v1369, 0.5
        %v1882 = vmul.f32 %v1370, 0.5
        %v1883 = vmul.f32 %v1371, 0.5
        %v1884 = vmul.f32 %v1372, 0.5
        %v1885 = vmul.f32 %v1373, 0.5
        %v1886 = vmul.f32 %v1374, 0.5
        %v1887 = vmul.f32 %v1375, 0.5
        %v1888 = vmul.f32 %v1376, 0.5
        %v1889 = vmul.f32 %v1377, 0.5
        %v1890 = vmul.f32 %v1378, 0.5
        %v1891 = vmul.f32 %v1379, 0.5
        %v1892 = vmul.f32 %v1380, 0.5
        %v1893 = vmul.f32 %v1381, 0.5
        %v1894 = vmul.f32 %v1382, 0.5
        %v1895 = vmul.f32 %v1383, 0.5
        %v1896 = vmul.f32 %v1384, 0.5
        %v1897 = vmul.f32 %v1385, 0.5
        %v1898 = vmul.f32 %v1386, 0.5
        %v1899 = vmul.f32 %v1387, 0.5
        %v1900 = vmul.f32 %v1388, 0.5
        %v1901 = vmul.f32 %v1389, 0.5
        %v1902 = vmul.f32 %v1390, 0.5
        %v1903 = vmul.f32 %v1391, 0.5
        %v1904 = vmul.f32 %v1392, 0.5
        %v1905 = vmul.f32 %v1393, 0.5
        %v1906 = vmul.f32 %v1394, 0.5
        %v1907 = vmul.f32 %v1395, 0.5
        %v1908 = vmul.f32 %v1396, 0.5
        %v1909 = vmul.f32 %v1397, 0.5
        %v1910 = vmul.f32 %v1398, 0.5
        %v1911 = vmul.f32 %v1399, 0.5
        %v1912 = vmul.f32 %v1400, 0.5
        %v1913 = vmul.f32 %v1401, 0.5
        %v1914 = vmul.f32 %v1402, 0.5
        %v1915 = vmul.f32 %v1403, 0.5
        %v1916 = vmul.f32 %v1404, 0.5
        %v1917 = vmul.f32 %v1405, 0.5
        %v1918 = vmul.f32 %v1406, 0.5
        %v1919 = vmul.f32 %v1407, 0.5
        %v1920 = vmul.f32 %v1408, 0.5
        %v1921 = vmul.f32 %v1409, 0.5
        %v1922 = vmul.f32 %v1410, 0.5
        %v1923 = vmul.f32 %v1411, 0.5
        %v1924 = vmul.f32 %v1412, 0.5
        %v1925 = vmul.f32 %v1413, 0.5
        %v1926 = vmul.f32 %v1414, 0.5
        %v1927 = vmul.f32 %v1415, 0.5
        %v1928 = vmul.f32 %v1416, 0.5
        %v1929 = vmul.f32 %v1417, 0.5
        %v1930 = vmul.f32 %v1418, 0.5
        %v1931 = vmul.f32 %v1419, 0.5
        %v1932 = vmul.f32 %v1420, 0.5
        %v1933 = vmul.f32 %v1421, 0.5
        %v1934 = vmul.f32 %v1422, 0.5
        %v1935 = vmul.f32 %v1423, 0.5
        %v1936 = vmul.f32 %v1424, 0.5
        %v1937 = vmul.f32 %v1425, 0.5
        %v1938 = vmul.f32 %v1426, 0.5
        %v1939 = vmul.f32 %v1427, 0.5
        %v1940 = vmul.f32 %v1428, 0.5
        %v1941 = vmul.f32 %v1429, 0.5
        %v1942 = vmul.f32 %v1430, 0.5
        %v1943 = vmul.f32 %v1431, 0.5
        %v1944 = vmul.f32 %v1432, 0.5
        %v1945 = vmul.f32 %v1433, 0.5
        %v1946 = vmul.f32 %v1434, 0.5
        %v1947 = vmul.f32 %v1435, 0.5
        %v1948 = vmul.f32 %v1436, 0.5
        %v1949 = vmul.f32 %v1437, 0.5
        %v1950 = vmul.f32 %v1438, 0.5
        %v1951 = vmul.f32 %v1439, 0.5
        %v1952 = vmul.f32 %v1440, 0.5
        %v1953 = vmul.f32 %v1441, 0.5
        %v1954 = vmul.f32 %v1442, 0.5
        %v1955 = vmul.f32 %v1443, 0.5
        %v1956 = vmul.f32 %v1444, 0.5
        %v1957 = vmul.f32 %v1445, 0.5
        %v1958 = vmul.f32 %v1446, 0.5
        %v1959 = vmul.f32 %v1447, 0.5
        %v1960 = vmul.f32 %v1448, 0.5
        %v1961 = vmul.f32 %v1449, 0.5
        %v1962 = vmul.f32 %v1450, 0.5
        %v1963 = vmul.f32 %v1451, 0.5
        %v1964 = vmul.f32 %v1452, 0.5
        %v1965 = vmul.f32 %v1453, 0.5
        %v1966 = vmul.f32 %v1454, 0.5
        %v1967 = vmul.f32 %v1455, 0.5
        %v1968 = vmul.f32 %v1456, 0.5
        %v1969 = vmul.f32 %v1457, 0.5
        %v1970 = vmul.f32 %v1458, 0.5
        %v1971 = vmul.f32 %v1459, 0.5
        %v1972 = vmul.f32 %v1460, 0.5
        %v1973 = vmul.f32 %v1461, 0.5
        %v1974 = vmul.f32 %v1462, 0.5
        %v1975 = vmul.f32 %v1463, 0.5
        %v1976 = vmul.f32 %v1464, 0.5
        %v1977 = vmul.f32 %v1465, 0.5
        %v1978 = vmul.f32 %v1466, 0.5
        %v1979 = vmul.f32 %v1467, 0.5
        %v1980 = vmul.f32 %v1468, 0.5
        %v1981 = vmul.f32 %v1469, 0.5
        %v1982 = vmul.f32 %v1470, 0.5
        %v1983 = vmul.f32 %v1471, 0.5
        %v1984 = vmul.f32 %v1472, 0.5
        %v1985 = vmul.f32 %v1473, 0.5
        %v1986 = vmul.f32 %v1474, 0.5
        %v1987 = vmul.f32 %v1475, 0.5
        %v1988 = vmul.f32 %v1476, 0.5
        %v1989 = vmul.f32 %v1477, 0.5
        %v1990 = vmul.f32 %v1478, 0.5
        %v1991 = vmul.f32 %v1479, 0.5
        %v1992 = vmul.f32 %v1480, 0.5
        %v1993 = vmul.f32 %v1481, 0.5
        %v1994 = vmul.f32 %v1482, 0.5
        %v1995 = vmul.f32 %v1483, 0.5
        %v1996 = vmul.f32 %v1484, 0.5
        %v1997 = vmul.f32 %v1485, 0.5
        %v1998 = vmul.f32 %v1486, 0.5
        %v1999 = vmul.f32 %v1487, 0.5
        %v2000 = vmul.f32 %v1488, 0.5
        %v2001 = vmul.f32 %v1489, 0.5
        %v2002 = vmul.f32 %v1490, 0.5
        %v2003 = vmul.f32 %v1491, 0.5
        %v2004 = vmul.f32 %v1492, 0.5
        %v2005 = vmul.f32 %v1493, 0.5
        %v2006 = vmul.f32 %v1494, 0.5
        %v2007 = vmul.f32 %v1495, 0.5
        %v2008 = vmul.f32 %v1496, 0.5
        %v2009 = vmul.f32 %v1497, 0.5
        %v2010 = vmul.f32 %v1498, 0.5
        %v2011 = vmul.f32 %v1499, 0.5
        %v2012 = vmul.f32 %v1500, 0.5
        %v2013 = vmul.f32 %v1501, 0.5
        %v2014 = vmul.f32 %v1502, 0.5
        %v2015 = vmul.f32 %v1503, 0.5
        %v2016 = vmul.f32 %v1504, 0.5
        %v2017 = vmul.f32 %v1505, 0.5
        %v2018 = vmul.f32 %v1506, 0.5
        %v2019 = vmul.f32 %v1507, 0.5
        %v2020 = vmul.f32 %v1508, 0.5
        %v2021 = vmul.f32 %v1509, 0.5
        %v2022 = vmul.f32 %v1510, 0.5
        %v2023 = vmul.f32 %v1511, 0.5
        %v2024 = vmul.f32 %v1512, 0.5
        %v2025 = vmul.f32 %v1513, 0.5
        %v2026 = vmul.f32 %v1514, 0.5
        %v2027 = vmul.f32 %v1515, 0.5
        %v2028 = vmul.f32 %v1516, 0.5
        %v2029 = vmul.f32 %v1517, 0.5
        %v2030 = vmul.f32 %v1518, 0.5
        %v2031 = vmul.f32 %v1519, 0.5
        %v2032 = vmul.f32 %v1520, 0.5
        %v2033 = vmul.f32 %v1521, 0.5
        %v2034 = vmul.f32 %v1522, 0.5
        %v2035 = vmul.f32 %v1523, 0.5
        %v2036 = vmul.f32 %v1524, 0.5
        %v2037 = vmul.f32 %v1525, 0.5
        %v2038 = vmul.f32 %v1526, 0.5
        %v2039 = vmul.f32 %v1527, 0.5
        %v2040 = vmul.f32 %v1528, 0.5
        %v2041 = vmul.f32 %v1529, 0.5
        %v2042 = vmul.f32 %v1530, 0.5
        %v2043 = vmul.f32 %v1531, 0.5
        %v2044 = vmul.f32 %v1532, 0.5
        %v2045 = vmul.f32 %v1533, 0.5
        %v2046 = vmul.f32 %v1534, 0.5
        %v2047 = vmul.f32 %v1535, 0.5
        %v2048 = vmul.f32 %v1536, 0.5
        %v2049 = vmul.f32 %v1537, 0.5
        %v2050 = vmul.f32 %v1538, 0.5
        %v2051 = vmul.f32 %v1539, 0.5
        %v2052 = vmul.f32 %v1540, 0.5
        %v2053 = vmul.f32 %v1541, 0.5
        %v2054 = vmul.f32 %v1542, 0.5
        %v2055 = vmul.f32 %v1543, 0.5
        %v2056 = vmul.f32 %v1544, 0.5
        %v2057 = vmul.f32 %v1545, 0.5
        %v2058 = vmul.f32 %v1546, 0.5
        %v2059 = vmul.f32 %v1547, 0.5
        %v2060 = vmul.f32 %v1548, 0.5
        %v2061 = vmul.f32 %v1549, 0.5
        %v2062 = vmul.f32 %v1550, 0.5
        %v2063 = vmul.f32 %v1551, 0.5
        %v2064 = vmul.f32 %v1552, 0.5
        %v2065 = vmul.f32 %v1553, 0.5
        %v2066 = vmul.f32 %v1554, 0.5
        %v2067 = vmul.f32 %v1555, 0.5
        %v2068 = vmul.f32 %v1556, 0.5
        %v2069 = vmul.f32 %v1557, 0.5
        %v2070 = vmul.f32 %v1558, 0.5
        %v2071 = vmul.f32 %v1559, 0.5
        %v2072 = vmul.f32 %v1560, 0.5
        %v2073 = vmul.f32 %v1561, 0.5
        %v2074 = vmul.f32 %v1562, 0.5
        %v2075 = vmul.f32 %v1563, 0.5
        %v2076 = vmul.f32 %v1564, 0.5
        %v2077 = vmul.f32 %v1565, 0.5
        %v2078 = vmul.f32 %v1566, 0.5
        %v2079 = vmul.f32 %v1567, 0.5
        %v2080 = vmul.f32 %v1568, 0.5
        %v2081 = vmul.f32 %v1569, 0.5
        %v2082 = vmul.f32 %v1570, 0.5
        %v2083 = vmul.f32 %v1571, 0.5
        %v2084 = vmul.f32 %v1572, 0.5
        %v2085 = vmul.f32 %v1573, 0.5
        %v2086 = vmul.f32 %v1574, 0.5
        %v2087 = vmul.f32 %v1575, 0.5
        %v2088 = vmul.f32 %v1576, 0.5
        %v2089 = vmul.f32 %v1577, 0.5
        %v2090 = vmul.f32 %v1578, 0.5
        %v2091 = vmul.f32 %v1579, 0.5
        %v2092 = vmul.f32 %v1580, 0.5
        %v2093 = vmul.f32 %v1581, 0.5
        %v2094 = vmul.f32 %v1582, 0.5
        %v2095 = vmul.f32 %v1583, 0.5
        %v2096 = vmul.f32 %v1584, 0.5
        %v2097 = vmul.f32 %v1585, 0.5
        %v2098 = vmul.f32 %v1586, 0.5
        %v2099 = vmul.f32 %v1587, 0.5
        %v2100 = vmul.f32 %v1588, 0.5
        %v2101 = vmul.f32 %v1589, 0.5
        %v2102 = vmul.f32 %v1590, 0.5
        %v2103 = vmul.f32 %v1591, 0.5
        %v2104 = vmul.f32 %v1592, 0.5
        %v2105 = vmul.f32 %v1593, 0.5
        %v2106 = vmul.f32 %v1594, 0.5
        %v2107 = vmul.f32 %v1595, 0.5
        %v2108 = vmul.f32 %v1596, 0.5
        %v2109 = vmul.f32 %v1597, 0.5
        %v2110 = vmul.f32 %v1598, 0.5
        %v2111 = vmul.f32 %v1599, 0.5
        %v2112 = vmul.f32 %v1600, 0.5
        %v2113 = vmul.f32 %v1601, 0.5
        %v2114 = vmul.f32 %v1602, 0.5
        %v2115 = vmul.f32 %v1603, 0.5
        %v2116 = vmul.f32 %v1604, 0.5
        %v2117 = vmul.f32 %v1605, 0.5
        %v2118 = vmul.f32 %v1606, 0.5
        %v2119 = vmul.f32 %v1607, 0.5
        %v2120 = vmul.f32 %v1608, 0.5
        %v2121 = vmul.f32 %v1609, 0.5
        %v2122 = vmul.f32 %v1610, 0.5
        %v2123 = vmul.f32 %v1611, 0.5
        %v2124 = vmul.f32 %v1612, 0.5
        %v2125 = vmul.f32 %v1613, 0.5
        %v2126 = vmul.f32 %v1614, 0.5
        %v2127 = vmul.f32 %v1615, 0.5
        %v2128 = vmul.f32 %v1616, 0.5
        %v2129 = vmul.f32 %v1617, 0.5
        %v2130 = vmul.f32 %v1618, 0.5
        %v2131 = vmul.f32 %v1619, 0.5
        %v2132 = vmul.f32 %v1620, 0.5
        %v2133 = vmul.f32 %v1621, 0.5
        %v2134 = vmul.f32 %v1622, 0.5
        %v2135 = vmul.f32 %v1623, 0.5
        %v2136 = vmul.f32 %v1624, 0.5
        %v2137 = vmul.f32 %v1625, 0.5
        %v2138 = vmul.f32 %v1626, 0.5
        %v2139 = vmul.f32 %v1627, 0.5
        %v2140 = vmul.f32 %v1628, 0.5
        %v2141 = vmul.f32 %v1629, 0.5
        %v2142 = vmul.f32 %v1630, 0.5
        %v2143 = vmul.f32 %v1631, 0.5
        %v2144 = vmul.f32 %v1632, 0.5
        %v2145 = vmul.f32 %v1633, 0.5
        %v2146 = vmul.f32 %v1634, 0.5
        %v2147 = vmul.f32 %v1635, 0.5
        %v2148 = vmul.f32 %v1636, 0.5
        %v2149 = vmul.f32 %v1637, 0.5
        %v2150 = vmul.f32 %v1638, 0.5
        %v2151 = vmul.f32 %v1639, 0.5
        %v2152 = vmul.f32 %v1640, 0.5
        %v2153 = vmul.f32 %v1641, 0.5
        %v2154 = vmul.f32 %v1642, 0.5
        %v2155 = vmul.f32 %v1643, 0.5
        %v2156 = vmul.f32 %v1644, 0.5
        %v2157 = vmul.f32 %v1645, 0.5
        %v2158 = vmul.f32 %v1646, 0.5
        %v2159 = vmul.f32 %v1647, 0.5
        %v2160 = vmul.f32 %v1648, 0.5
        %v2161 = vmul.f32 %v1649, 0.5
        %v2162 = vmul.f32 %v1650, 0.5
        %v2163 = vmul.f32 %v1651, 0.5
        %v2164 = vmul.f32 %v1652, 0.5
        %v2165 = vmul.f32 %v1653, 0.5
        %v2166 = vmul.f32 %v1654, 0.5
        %v2167 = vmul.f32 %v1655, 0.5
        %v2168 = vmul.f32 %v1656, 0.5
        %v2169 = vmul.f32 %v1657, 0.5
        %v2170 = vmul.f32 %v1658, 0.5
        %v2171 = vmul.f32 %v1659, 0.5
        %v2172 = vmul.f32 %v1660, 0.5
        %v2173 = vmul.f32 %v1661, 0.5
        %v2174 = vmul.f32 %v1662, 0.5
        %v2175 = vmul.f32 %v1663, 0.5
        %v2176 = vmul.f32 %v1664, 0.5
        %v2177 = vmul.f32 %v1665, 0.5
        %v2178 = vmul.f32 %v1666, 0.5
        %v2179 = vmul.f32 %v1667, 0.5
        %v2180 = vmul.f32 %v1668, 0.5
        %v2181 = vmul.f32 %v1669, 0.5
        %v2182 = vmul.f32 %v1670, 0.5
        %v2183 = vmul.f32 %v1671, 0.5
        %v2184 = vmul.f32 %v1672, 0.5
        %v2185 = vmul.f32 %v1673, 0.5
        %v2186 = vadd.f32 %v1674, 0.5
        %v2187 = vadd.f32 %v1675, 0.5
        %v2188 = vadd.f32 %v1676, 0.5
        %v2189 = vadd.f32 %v1677, 0.5
        %v2190 = vadd.f32 %v1678, 0.5
        %v2191 = vadd.f32 %v1679, 0.5
        %v2192 = vadd.f32 %v1680, 0.5
        %v2193 = vadd.f32 %v1681, 0.5
        %v2194 = vadd.f32 %v1682, 0.5
        %v2195 = vadd.f32 %v1683, 0.5
        %v2196 = vadd.f32 %v1684, 0.5
        %v2197 = vadd.f32 %v1685, 0.5
        %v2198 = vadd.f32 %v1686, 0.5
        %v2199 = vadd.f32 %v1687, 0.5
        %v2200 = vadd.f32 %v1688, 0.5
        %v2201 = vadd.f32 %v1689, 0.5
        %v2202 = vadd.f32 %v1690, 0.5
        %v2203 = vadd.f32 %v1691, 0.5
        %v2204 = vadd.f32 %v1692, 0.5
        %v2205 = vadd.f32 %v1693, 0.5
        %v2206 = vadd.f32 %v1694, 0.5
        %v2207 = vadd.f32 %v1695, 0.5
        %v2208 = vadd.f32 %v1696, 0.5
        %v2209 = vadd.f32 %v1697, 0.5
        %v2210 = vadd.f32 %v1698, 0.5
        %v2211 = vadd.f32 %v1699, 0.5
        %v2212 = vadd.f32 %v1700, 0.5
        %v2213 = vadd.f32 %v1701, 0.5
        %v2214 = vadd.f32 %v1702, 0.5
        %v2215 = vadd.f32 %v1703, 0.5
        %v2216 = vadd.f32 %v1704, 0.5
        %v2217 = vadd.f32 %v1705, 0.5
        %v2218 = vadd.f32 %v1706, 0.5
        %v2219 = vadd.f32 %v1707, 0.5
        %v2220 = vadd.f32 %v1708, 0.5
        %v2221 = vadd.f32 %v1709, 0.5
        %v2222 = vadd.f32 %v1710, 0.5
        %v2223 = vadd.f32 %v1711, 0.5
        %v2224 = vadd.f32 %v1712, 0.5
        %v2225 = vadd.f32 %v1713, 0.5
        %v2226 = vadd.f32 %v1714, 0.5
        %v2227 = vadd.f32 %v1715, 0.5
        %v2228 = vadd.f32 %v1716, 0.5
        %v2229 = vadd.f32 %v1717, 0.5
        %v2230 = vadd.f32 %v1718, 0.5
        %v2231 = vadd.f32 %v1719, 0.5
        %v2232 = vadd.f32 %v1720, 0.5
        %v2233 = vadd.f32 %v1721, 0.5
        %v2234 = vadd.f32 %v1722, 0.5
        %v2235 = vadd.f32 %v1723, 0.5
        %v2236 = vadd.f32 %v1724, 0.5
        %v2237 = vadd.f32 %v1725, 0.5
        %v2238 = vadd.f32 %v1726, 0.5
        %v2239 = vadd.f32 %v1727, 0.5
        %v2240 = vadd.f32 %v1728, 0.5
        %v2241 = vadd.f32 %v1729, 0.5
        %v2242 = vadd.f32 %v1730, 0.5
        %v2243 = vadd.f32 %v1731, 0.5
        %v2244 = vadd.f32 %v1732, 0.5
        %v2245 = vadd.f32 %v1733, 0.5
        %v2246 = vadd.f32 %v1734, 0.5
        %v2247 = vadd.f32 %v1735, 0.5
        %v2248 = vadd.f32 %v1736, 0.5
        %v2249 = vadd.f32 %v1737, 0.5
        %v2250 = vadd.f32 %v1738, 0.5
        %v2251 = vadd.f32 %v1739, 0.5
        %v2252 = vadd.f32 %v1740, 0.5
        %v2253 = vadd.f32 %v1741, 0.5
        %v2254 = vadd.f32 %v1742, 0.5
        %v2255 = vadd.f32 %v1743, 0.5
        %v2256 = vadd.f32 %v1744, 0.5
        %v2257 = vadd.f32 %v1745, 0.5
        %v2258 = vadd.f32 %v1746, 0.5
        %v2259 = vadd.f32 %v1747, 0.5
        %v2260 = vadd.f32 %v1748, 0.5
        %v2261 = vadd.f32 %v1749, 0.5
        %v2262 = vadd.f32 %v1750, 0.5
        %v2263 = vadd.f32 %v1751, 0.5
        %v2264 = vadd.f32 %v1752, 0.5
        %v2265 = vadd.f32 %v1753, 0.5
        %v2266 = vadd.f32 %v1754, 0.5
        %v2267 = vadd.f32 %v1755, 0.5
        %v2268 = vadd.f32 %v1756, 0.5
        %v2269 = vadd.f32 %v1757, 0.5
        %v2270 = vadd.f32 %v1758, 0.5
        %v2271 = vadd.f32 %v1759, 0.5
        %v2272 = vadd.f32 %v1760, 0.5
        %v2273 = vadd.f32 %v1761, 0.5
        %v2274 = vadd.f32 %v1762, 0.5
        %v2275 = vadd.f32 %v1763, 0.5
        %v2276 = vadd.f32 %v1764, 0.5
        %v2277 = vadd.f32 %v1765, 0.5
        %v2278 = vadd.f32 %v1766, 0.5
        %v2279 = vadd.f32 %v1767, 0.5
        %v2280 = vadd.f32 %v1768, 0.5
        %v2281 = vadd.f32 %v1769, 0.5
        %v2282 = vadd.f32 %v1770, 0.5
        %v2283 = vadd.f32 %v1771, 0.5
        %v2284 = vadd.f32 %v1772, 0.5
        %v2285 = vadd.f32 %v1773, 0.5
        %v2286 = vadd.f32 %v1774, 0.5
        %v2287 = vadd.f32 %v1775, 0.5
        %v2288 = vadd.f32 %v1776, 0.5
        %v2289 = vadd.f32 %v1777, 0.5
        %v2290 = vadd.f32 %v1778, 0.5
        %v2291 = vadd.f32 %v1779, 0.5
        %v2292 = vadd.f32 %v1780, 0.5
        %v2293 = vadd.f32 %v1781, 0.5
        %v2294 = vadd.f32 %v1782, 0.5
        %v2295 = vadd.f32 %v1783, 0.5
        %v2296 = vadd.f32 %v1784, 0.5
        %v2297 = vadd.f32 %v1785, 0.5
        %v2298 = vadd.f32 %v1786, 0.5
        %v2299 = vadd.f32 %v1787, 0.5
        %v2300 = vadd.f32 %v1788, 0.5
        %v2301 = vadd.f32 %v1789, 0.5
        %v2302 = vadd.f32 %v1790, 0.5
        %v2303 = vadd.f32 %v1791, 0.5
        %v2304 = vadd.f32 %v1792, 0.5
        %v2305 = vadd.f32 %v1793, 0.5
        %v2306 = vadd.f32 %v1794, 0.5
        %v2307 = vadd.f32 %v1795, 0.5
        %v2308 = vadd.f32 %v1796, 0.5
        %v2309 = vadd.f32 %v1797, 0.5
        %v2310 = vadd.f32 %v1798, 0.5
        %v2311 = vadd.f32 %v1799, 0.5
        %v2312 = vadd.f32 %v1800, 0.5
        %v2313 = vadd.f32 %v1801, 0.5
        %v2314 = vadd.f32 %v1802, 0.5
        %v2315 = vadd.f32 %v1803, 0.5
        %v2316 = vadd.f32 %v1804, 0.5
        %v2317 = vadd.f32 %v1805, 0.5
        %v2318 = vadd.f32 %v1806, 0.5
        %v2319 = vadd.f32 %v1807, 0.5
        %v2320 = vadd.f32 %v1808, 0.5
        %v2321 = vadd.f32 %v1809, 0.5
        %v2322 = vadd.f32 %v1810, 0.5
        %v2323 = vadd.f32 %v1811, 0.5
        %v2324 = vadd.f32 %v1812, 0.5
        %v2325 = vadd.f32 %v1813, 0.5
        %v2326 = vadd.f32 %v1814, 0.5
        %v2327 = vadd.f32 %v1815, 0.5
        %v2328 = vadd.f32 %v1816, 0.5
        %v2329 = vadd.f32 %v1817, 0.5
        %v2330 = vadd.f32 %v1818, 0.5
        %v2331 = vadd.f32 %v1819, 0.5
        %v2332 = vadd.f32 %v1820, 0.5
        %v2333 = vadd.f32 %v1821, 0.5
        %v2334 = vadd.f32 %v1822, 0.5
        %v2335 = vadd.f32 %v1823, 0.5
        %v2336 = vadd.f32 %v1824, 0.5
        %v2337 = vadd.f32 %v1825, 0.5
        %v2338 = vadd.f32 %v1826, 0.5
        %v2339 = vadd.f32 %v1827, 0.5
        %v2340 = vadd.f32 %v1828, 0.5
        %v2341 = vadd.f32 %v1829, 0.5
        %v2342 = vadd.f32 %v1830, 0.5
        %v2343 = vadd.f32 %v1831, 0.5
        %v2344 = vadd.f32 %v1832, 0.5
        %v2345 = vadd.f32 %v1833, 0.5
        %v2346 = vadd.f32 %v1834, 0.5
        %v2347 = vadd.f32 %v1835, 0.5
        %v2348 = vadd.f32 %v1836, 0.5
        %v2349 = vadd.f32 %v1837, 0.5
        %v2350 = vadd.f32 %v1838, 0.5
        %v2351 = vadd.f32 %v1839, 0.5
        %v2352 = vadd.f32 %v1840, 0.5
        %v2353 = vadd.f32 %v1841, 0.5
        %v2354 = vadd.f32 %v1842, 0.5
        %v2355 = vadd.f32 %v1843, 0.5
        %v2356 = vadd.f32 %v1844, 0.5
        %v2357 = vadd.f32 %v1845, 0.5
        %v2358 = vadd.f32 %v1846, 0.5
        %v2359 = vadd.f32 %v1847, 0.5
        %v2360 = vadd.f32 %v1848, 0.5
        %v2361 = vadd.f32 %v1849, 0.5
        %v2362 = vadd.f32 %v1850, 0.5
        %v2363 = vadd.f32 %v1851, 0.5
        %v2364 = vadd.f32 %v1852, 0.5
        %v2365 = vadd.f32 %v1853, 0.5
        %v2366 = vadd.f32 %v1854, 0.5
        %v2367 = vadd.f32 %v1855, 0.5
        %v2368 = vadd.f32 %v1856, 0.5
        %v2369 = vadd.f32 %v1857, 0.5
        %v2370 = vadd.f32 %v1858, 0.5
        %v2371 = vadd.f32 %v1859, 0.5
        %v2372 = vadd.f32 %v1860, 0.5
        %v2373 = vadd.f32 %v1861, 0.5
        %v2374 = vadd.f32 %v1862, 0.5
        %v2375 = vadd.f32 %v1863, 0.5
        %v2376 = vadd.f32 %v1864, 0.5
        %v2377 = vadd.f32 %v1865, 0.5
        %v2378 = vadd.f32 %v1866, 0.5
        %v2379 = vadd.f32 %v1867, 0.5
        %v2380 = vadd.f32 %v1868, 0.5
        %v2381 = vadd.f32 %v1869, 0.5
        %v2382 = vadd.f32 %v1870, 0.5
        %v2383 = vadd.f32 %v1871, 0.5
        %v2384 = vadd.f32 %v1872, 0.5
        %v2385 = vadd.f32 %v1873, 0.5
        %v2386 = vadd.f32 %v1874, 0.5
        %v2387 = vadd.f32 %v1875, 0.5
        %v2388 = vadd.f32 %v1876, 0.5
        %v2389 = vadd.f32 %v1877, 0.5
        %v2390 = vadd.f32 %v1878, 0.5
        %v2391 = vadd.f32 %v1879, 0.5
        %v2392 = vadd.f32 %v1880, 0.5
        %v2393 = vadd.f32 %v1881, 0.5
        %v2394 = vadd.f32 %v1882, 0.5
        %v2395 = vadd.f32 %v1883, 0.5
        %v2396 = vadd.f32 %v1884, 0.5
        %v2397 = vadd.f32 %v1885, 0.5
        %v2398 = vadd.f32 %v1886, 0.5
        %v2399 = vadd.f32 %v1887, 0.5
        %v2400 = vadd.f32 %v1888, 0.5
        %v2401 = vadd.f32 %v1889, 0.5
        %v2402 = vadd.f32 %v1890, 0.5
        %v2403 = vadd.f32 %v1891, 0.5
        %v2404 = vadd.f32 %v1892, 0.5
        %v2405 = vadd.f32 %v1893, 0.5
        %v2406 = vadd.f32 %v1894, 0.5
        %v2407 = vadd.f32 %v1895, 0.5
        %v2408 = vadd.f32 %v1896, 0.5
        %v2409 = vadd.f32 %v1897, 0.5
        %v2410 = vadd.f32 %v1898, 0.5
        %v2411 = vadd.f32 %v1899, 0.5
        %v2412 = vadd.f32 %v1900, 0.5
        %v2413 = vadd.f32 %v1901, 0.5
        %v2414 = vadd.f32 %v1902, 0.5
        %v2415 = vadd.f32 %v1903, 0.5
        %v2416 = vadd.f32 %v1904, 0.5
        %v2417 = vadd.f32 %v1905, 0.5
        %v2418 = vadd.f32 %v1906, 0.5
        %v2419 = vadd.f32 %v1907, 0.5
        %v2420 = vadd.f32 %v1908, 0.5
        %v2421 = vadd.f32 %v1909, 0.5
        %v2422 = vadd.f32 %v1910, 0.5
        %v2423 = vadd.f32 %v1911, 0.5
        %v2424 = vadd.f32 %v1912, 0.5
        %v2425 = vadd.f32 %v1913, 0.5
        %v2426 = vadd.f32 %v1914, 0.5
        %v2427 = vadd.f32 %v1915, 0.5
        %v2428 = vadd.f32 %v1916, 0.5
        %v2429 = vadd.f32 %v1917, 0.5
        %v2430 = vadd.f32 %v1918, 0.5
        %v2431 = vadd.f32 %v1919, 0.5
        %v2432 = vadd.f32 %v1920, 0.5
        %v2433 = vadd.f32 %v1921, 0.5
        %v2434 = vadd.f32 %v1922, 0.5
        %v2435 = vadd.f32 %v1923, 0.5
        %v2436 = vadd.f32 %v1924, 0.5
        %v2437 = vadd.f32 %v1925, 0.5
        %v2438 = vadd.f32 %v1926, 0.5
        %v2439 = vadd.f32 %v1927, 0.5
        %v2440 = vadd.f32 %v1928, 0.5
        %v2441 = vadd.f32 %v1929, 0.5
        %v2442 = vadd.f32 %v1930, 0.5
        %v2443 = vadd.f32 %v1931, 0.5
        %v2444 = vadd.f32 %v1932, 0.5
        %v2445 = vadd.f32 %v1933, 0.5
        %v2446 = vadd.f32 %v1934, 0.5
        %v2447 = vadd.f32 %v1935, 0.5
        %v2448 = vadd.f32 %v1936, 0.5
        %v2449 = vadd.f32 %v1937, 0.5
        %v2450 = vadd.f32 %v1938, 0.5
        %v2451 = vadd.f32 %v1939, 0.5
        %v2452 = vadd.f32 %v1940, 0.5
        %v2453 = vadd.f32 %v1941, 0.5
        %v2454 = vadd.f32 %v1942, 0.5
        %v2455 = vadd.f32 %v1943, 0.5
        %v2456 = vadd.f32 %v1944, 0.5
        %v2457 = vadd.f32 %v1945, 0.5
        %v2458 = vadd.f32 %v1946, 0.5
        %v2459 = vadd.f32 %v1947, 0.5
        %v2460 = vadd.f32 %v1948, 0.5
        %v2461 = vadd.f32 %v1949, 0.5
        %v2462 = vadd.f32 %v1950, 0.5
        %v2463 = vadd.f32 %v1951, 0.5
        %v2464 = vadd.f32 %v1952, 0.5
        %v2465 = vadd.f32 %v1953, 0.5
        %v2466 = vadd.f32 %v1954, 0.5
        %v2467 = vadd.f32 %v1955, 0.5
        %v2468 = vadd.f32 %v1956, 0.5
        %v2469 = vadd.f32 %v1957, 0.5
        %v2470 = vadd.f32 %v1958, 0.5
        %v2471 = vadd.f32 %v1959, 0.5
        %v2472 = vadd.f32 %v1960, 0.5
        %v2473 = vadd.f32 %v1961, 0.5
        %v2474 = vadd.f32 %v1962, 0.5
        %v2475 = vadd.f32 %v1963, 0.5
        %v2476 = vadd.f32 %v1964, 0.5
        %v2477 = vadd.f32 %v1965, 0.5
        %v2478 = vadd.f32 %v1966, 0.5
        %v2479 = vadd.f32 %v1967, 0.5
        %v2480 = vadd.f32 %v1968, 0.5
        %v2481 = vadd.f32 %v1969, 0.5
        %v2482 = vadd.f32 %v1970, 0.5
        %v2483 = vadd.f32 %v1971, 0.5
        %v2484 = vadd.f32 %v1972, 0.5
        %v2485 = vadd.f32 %v1973, 0.5
        %v2486 = vadd.f32 %v1974, 0.5
        %v2487 = vadd.f32 %v1975, 0.5
        %v2488 = vadd.f32 %v1976, 0.5
        %v2489 = vadd.f32 %v1977, 0.5
        %v2490 = vadd.f32 %v1978, 0.5
        %v2491 = vadd.f32 %v1979, 0.5
        %v2492 = vadd.f32 %v1980, 0.5
        %v2493 = vadd.f32 %v1981, 0.5
        %v2494 = vadd.f32 %v1982, 0.5
        %v2495 = vadd.f32 %v1983, 0.5
        %v2496 = vadd.f32 %v1984, 0.5
        %v2497 = vadd.f32 %v1985, 0.5
        %v2498 = vadd.f32 %v1986, 0.5
        %v2499 = vadd.f32 %v1987, 0.5
        %v2500 = vadd.f32 %v1988, 0.5
        %v2501 = vadd.f32 %v1989, 0.5
        %v2502 = vadd.f32 %v1990, 0.5
        %v2503 = vadd.f32 %v1991, 0.5
        %v2504 = vadd.f32 %v1992, 0.5
        %v2505 = vadd.f32 %v1993, 0.5
        %v2506 = vadd.f32 %v1994, 0.5
        %v2507 = vadd.f32 %v1995, 0.5
        %v2508 = vadd.f32 %v1996, 0.5
        %v2509 = vadd.f32 %v1997, 0.5
        %v2510 = vadd.f32 %v1998, 0.5
        %v2511 = vadd.f32 %v1999, 0.5
        %v2512 = vadd.f32 %v2000, 0.5
        %v2513 = vadd.f32 %v2001, 0.5
        %v2514 = vadd.f32 %v2002, 0.5
        %v2515 = vadd.f32 %v2003, 0.5
        %v2516 = vadd.f32 %v2004, 0.5
        %v2517 = vadd.f32 %v2005, 0.5
        %v2518 = vadd.f32 %v2006, 0.5
        %v2519 = vadd.f32 %v2007, 0.5
        %v2520 = vadd.f32 %v2008, 0.5
        %v2521 = vadd.f32 %v2009, 0.5
        %v2522 = vadd.f32 %v2010, 0.5
        %v2523 = vadd.f32 %v2011, 0.5
        %v2524 = vadd.f32 %v2012, 0.5
        %v2525 = vadd.f32 %v2013, 0.5
        %v2526 = vadd.f32 %v2014, 0.5
        %v2527 = vadd.f32 %v2015, 0.5
        %v2528 = vadd.f32 %v2016, 0.5
        %v2529 = vadd.f32 %v2017, 0.5
        %v2530 = vadd.f32 %v2018, 0.5
        %v2531 = vadd.f32 %v2019, 0.5
        %v2532 = vadd.f32 %v2020, 0.5
        %v2533 = vadd.f32 %v2021, 0.5
        %v2534 = vadd.f32 %v2022, 0.5
        %v2535 = vadd.f32 %v2023, 0.5
        %v2536 = vadd.f32 %v2024, 0.5
        %v2537 = vadd.f32 %v2025, 0.5
        %v2538 = vadd.f32 %v2026, 0.5
        %v2539 = vadd.f32 %v2027, 0.5
        %v2540 = vadd.f32 %v2028, 0.5
        %v2541 = vadd.f32 %v2029, 0.5
        %v2542 = vadd.f32 %v2030, 0.5
        %v2543 = vadd.f32 %v2031, 0.5
        %v2544 = vadd.f32 %v2032, 0.5
        %v2545 = vadd.f32 %v2033, 0.5
        %v2546 = vadd.f32 %v2034, 0.5
        %v2547 = vadd.f32 %v2035, 0.5
        %v2548 = vadd.f32 %v2036, 0.5
        %v2549 = vadd.f32 %v2037, 0.5
        %v2550 = vadd.f32 %v2038, 0.5
        %v2551 = vadd.f32 %v2039, 0.5
        %v2552 = vadd.f32 %v2040, 0.5
        %v2553 = vadd.f32 %v2041, 0.5
        %v2554 = vadd.f32 %v2042, 0.5
        %v2555 = vadd.f32 %v2043, 0.5
        %v2556 = vadd.f32 %v2044, 0.5
        %v2557 = vadd.f32 %v2045, 0.5
        %v2558 = vadd.f32 %v2046, 0.5
        %v2559 = vadd.f32 %v2047, 0.5
        %v2560 = vadd.f32 %v2048, 0.5
        %v2561 = vadd.f32 %v2049, 0.5
        %v2562 = vadd.f32 %v2050, 0.5
        %v2563 = vadd.f32 %v2051, 0.5
        %v2564 = vadd.f32 %v2052, 0.5
        %v2565 = vadd.f32 %v2053, 0.5
        %v2566 = vadd.f32 %v2054, 0.5
        %v2567 = vadd.f32 %v2055, 0.5
        %v2568 = vadd.f32 %v2056, 0.5
        %v2569 = vadd.f32 %v2057, 0.5
        %v2570 = vadd.f32 %v2058, 0.5
        %v2571 = vadd.f32 %v2059, 0.5
        %v2572 = vadd.f32 %v2060, 0.5
        %v2573 = vadd.f32 %v2061, 0.5
        %v2574 = vadd.f32 %v2062, 0.5
        %v2575 = vadd.f32 %v2063, 0.5
        %v2576 = vadd.f32 %v2064, 0.5
        %v2577 = vadd.f32 %v2065, 0.5
        %v2578 = vadd.f32 %v2066, 0.5
        %v2579 = vadd.f32 %v2067, 0.5
        %v2580 = vadd.f32 %v2068, 0.5
        %v2581 = vadd.f32 %v2069, 0.5
        %v2582 = vadd.f32 %v2070, 0.5
        %v2583 = vadd.f32 %v2071, 0.5
        %v2584 = vadd.f32 %v2072, 0.5
        %v2585 = vadd.f32 %v2073, 0.5
        %v2586 = vadd.f32 %v2074, 0.5
        %v2587 = vadd.f32 %v2075, 0.5
        %v2588 = vadd.f32 %v2076, 0.5
        %v2589 = vadd.f32 %v2077, 0.5
        %v2590 = vadd.f32 %v2078, 0.5
        %v2591 = vadd.f32 %v2079, 0.5
        %v2592 = vadd.f32 %v2080, 0.5
        %v2593 = vadd.f32 %v2081, 0.5
        %v2594 = vadd.f32 %v2082, 0.5
        %v2595 = vadd.f32 %v2083, 0.5
        %v2596 = vadd.f32 %v2084, 0.5
        %v2597 = vadd.f32 %v2085, 0.5
        %v2598 = vadd.f32 %v2086, 0.5
        %v2599 = vadd.f32 %v2087, 0.5
        %v2600 = vadd.f32 %v2088, 0.5
        %v2601 = vadd.f32 %v2089, 0.5
        %v2602 = vadd.f32 %v2090, 0.5
        %v2603 = vadd.f32 %v2091, 0.5
        %v2604 = vadd.f32 %v2092, 0.5
        %v2605 = vadd.f32 %v2093, 0.5
        %v2606 = vadd.f32 %v2094, 0.5
        %v2607 = vadd.f32 %v2095, 0.5
        %v2608 = vadd.f32 %v2096, 0.5
        %v2609 = vadd.f32 %v2097, 0.5
        %v2610 = vadd.f32 %v2098, 0.5
        %v2611 = vadd.f32 %v2099, 0.5
        %v2612 = vadd.f32 %v2100, 0.5
        %v2613 = vadd.f32 %v2101, 0.5
        %v2614 = vadd.f32 %v2102, 0.5
        %v2615 = vadd.f32 %v2103, 0.5
        %v2616 = vadd.f32 %v2104, 0.5
        %v2617 = vadd.f32 %v2105, 0.5
        %v2618 = vadd.f32 %v2106, 0.5
        %v2619 = vadd.f32 %v2107, 0.5
        %v2620 = vadd.f32 %v2108, 0.5
        %v2621 = vadd.f32 %v2109, 0.5
        %v2622 = vadd.f32 %v2110, 0.5
        %v2623 = vadd.f32 %v2111, 0.5
        %v2624 = vadd.f32 %v2112, 0.5
        %v2625 = vadd.f32 %v2113, 0.5
        %v2626 = vadd.f32 %v2114, 0.5
        %v2627 = vadd.f32 %v2115, 0.5
        %v2628 = vadd.f32 %v2116, 0.5
        %v2629 = vadd.f32 %v2117, 0.5
        %v2630 = vadd.f32 %v2118, 0.5
        %v2631 = vadd.f32 %v2119, 0.5
        %v2632 = vadd.f32 %v2120, 0.5
        %v2633 = vadd.f32 %v2121, 0.5
        %v2634 = vadd.f32 %v2122, 0.5
        %v2635 = vadd.f32 %v2123, 0.5
        %v2636 = vadd.f32 %v2124, 0.5
        %v2637 = vadd.f32 %v2125, 0.5
        %v2638 = vadd.f32 %v2126, 0.5
        %v2639 = vadd.f32 %v2127, 0.5
        %v2640 = vadd.f32 %v2128, 0.5
        %v2641 = vadd.f32 %v2129, 0.5
        %v2642 = vadd.f32 %v2130, 0.5
        %v2643 = vadd.f32 %v2131, 0.5
        %v2644 = vadd.f32 %v2132, 0.5
        %v2645 = vadd.f32 %v2133, 0.5
        %v2646 = vadd.f32 %v2134, 0.5
        %v2647 = vadd.f32 %v2135, 0.5
        %v2648 = vadd.f32 %v2136, 0.5
        %v2649 = vadd.f32 %v2137, 0.5
        %v2650 = vadd.f32 %v2138, 0.5
        %v2651 = vadd.f32 %v2139, 0.5
        %v2652 = vadd.f32 %v2140, 0.5
        %v2653 = vadd.f32 %v2141, 0.5
        %v2654 = vadd.f32 %v2142, 0.5
        %v2655 = vadd.f32 %v2143, 0.5
        %v2656 = vadd.f32 %v2144, 0.5
        %v2657 = vadd.f32 %v2145, 0.5
        %v2658 = vadd.f32 %v2146, 0.5
        %v2659 = vadd.f32 %v2147, 0.5
        %v2660 = vadd.f32 %v2148, 0.5
        %v2661 = vadd.f32 %v2149, 0.5
        %v2662 = vadd.f32 %v2150, 0.5
        %v2663 = vadd.f32 %v2151, 0.5
        %v2664 = vadd.f32 %v2152, 0.5
        %v2665 = vadd.f32 %v2153, 0.5
        %v2666 = vadd.f32 %v2154, 0.5
        %v2667 = vadd.f32 %v2155, 0.5
        %v2668 = vadd.f32 %v2156, 0.5
        %v2669 = vadd.f32 %v2157, 0.5
        %v2670 = vadd.f32 %v2158, 0.5
        %v2671 = vadd.f32 %v2159, 0.5
        %v2672 = vadd.f32 %v2160, 0.5
        %v2673 = vadd.f32 %v2161, 0.5
        %v2674 = vadd.f32 %v2162, 0.5
        %v2675 = vadd.f32 %v2163, 0.5
        %v2676 = vadd.f32 %v2164, 0.5
        %v2677 = vadd.f32 %v2165, 0.5
        %v2678 = vadd.f32 %v2166, 0.5
        %v2679 = vadd.f32 %v2167, 0.5
        %v2680 = vadd.f32 %v2168, 0.5
        %v2681 = vadd.f32 %v2169, 0.5
        %v2682 = vadd.f32 %v2170, 0.5
        %v2683 = vadd.f32 %v2171, 0.5
        %v2684 = vadd.f32 %v2172, 0.5
        %v2685 = vadd.f32 %v2173, 0.5
        %v2686 = vadd.f32 %v2174, 0.5
        %v2687 = vadd.f32 %v2175, 0.5
        %v2688 = vadd.f32 %v2176, 0.5
        %v2689 = vadd.f32 %v2177, 0.5
        %v2690 = vadd.f32 %v2178, 0.5
        %v2691 = vadd.f32 %v2179, 0.5
        %v2692 = vadd.f32 %v2180, 0.5
        %v2693 = vadd.f32 %v2181, 0.5
        %v2694 = vadd.f32 %v2182, 0.5
        %v2695 = vadd.f32 %v2183, 0.5
        %v2696 = vadd.f32 %v2184, 0.5
        %v2697 = vadd.f32 %v2185, 0.5
        %v2698 = vmul.f32 %v138, %v2186
        %v2699 = vmul.f32 %v139, %v2187
        %v2700 = vmul.f32 %v140, %v2188
        %v2701 = vmul.f32 %v141, %v2189
        %v2702 = vmul.f32 %v142, %v2190
        %v2703 = vmul.f32 %v143, %v2191
        %v2704 = vmul.f32 %v144, %v2192
        %v2705 = vmul.f32 %v145, %v2193
        %v2706 = vmul.f32 %v146, %v2194
        %v2707 = vmul.f32 %v147, %v2195
        %v2708 = vmul.f32 %v148, %v2196
        %v2709 = vmul.f32 %v149, %v2197
        %v2710 = vmul.f32 %v150, %v2198
        %v2711 = vmul.f32 %v151, %v2199
        %v2712 = vmul.f32 %v152, %v2200
        %v2713 = vmul.f32 %v153, %v2201
        %v2714 = vmul.f32 %v154, %v2202
        %v2715 = vmul.f32 %v155, %v2203
        %v2716 = vmul.f32 %v156, %v2204
        %v2717 = vmul.f32 %v157, %v2205
        %v2718 = vmul.f32 %v158, %v2206
        %v2719 = vmul.f32 %v159, %v2207
        %v2720 = vmul.f32 %v160, %v2208
        %v2721 = vmul.f32 %v161, %v2209
        %v2722 = vmul.f32 %v162, %v2210
        %v2723 = vmul.f32 %v163, %v2211
        %v2724 = vmul.f32 %v164, %v2212
        %v2725 = vmul.f32 %v165, %v2213
        %v2726 = vmul.f32 %v166, %v2214
        %v2727 = vmul.f32 %v167, %v2215
        %v2728 = vmul.f32 %v168, %v2216
        %v2729 = vmul.f32 %v169, %v2217
        %v2730 = vmul.f32 %v170, %v2218
        %v2731 = vmul.f32 %v171, %v2219
        %v2732 = vmul.f32 %v172, %v2220
        %v2733 = vmul.f32 %v173, %v2221
        %v2734 = vmul.f32 %v174, %v2222
        %v2735 = vmul.f32 %v175, %v2223
        %v2736 = vmul.f32 %v176, %v2224
        %v2737 = vmul.f32 %v177, %v2225
        %v2738 = vmul.f32 %v178, %v2226
        %v2739 = vmul.f32 %v179, %v2227
        %v2740 = vmul.f32 %v180, %v2228
        %v2741 = vmul.f32 %v181, %v2229
        %v2742 = vmul.f32 %v182, %v2230
        %v2743 = vmul.f32 %v183, %v2231
        %v2744 = vmul.f32 %v184, %v2232
        %v2745 = vmul.f32 %v185, %v2233
        %v2746 = vmul.f32 %v186, %v2234
        %v2747 = vmul.f32 %v187, %v2235
        %v2748 = vmul.f32 %v188, %v2236
        %v2749 = vmul.f32 %v189, %v2237
        %v2750 = vmul.f32 %v190, %v2238
        %v2751 = vmul.f32 %v191, %v2239
        %v2752 = vmul.f32 %v192, %v2240
        %v2753 = vmul.f32 %v193, %v2241
        %v2754 = vmul.f32 %v194, %v2242
        %v2755 = vmul.f32 %v195, %v2243
        %v2756 = vmul.f32 %v196, %v2244
        %v2757 = vmul.f32 %v197, %v2245
        %v2758 = vmul.f32 %v198, %v2246
        %v2759 = vmul.f32 %v199, %v2247
        %v2760 = vmul.f32 %v200, %v2248
        %v2761 = vmul.f32 %v201, %v2249
        %v2762 = vmul.f32 %v202, %v2250
        %v2763 = vmul.f32 %v203, %v2251
        %v2764 = vmul.f32 %v204, %v2252
        %v2765 = vmul.f32 %v205, %v2253
        %v2766 = vmul.f32 %v206, %v2254
        %v2767 = vmul.f32 %v207, %v2255
        %v2768 = vmul.f32 %v208, %v2256
        %v2769 = vmul.f32 %v209, %v2257
        %v2770 = vmul.f32 %v210, %v2258
        %v2771 = vmul.f32 %v211, %v2259
        %v2772 = vmul.f32 %v212, %v2260
        %v2773 = vmul.f32 %v213, %v2261
        %v2774 = vmul.f32 %v214, %v2262
        %v2775 = vmul.f32 %v215, %v2263
        %v2776 = vmul.f32 %v216, %v2264
        %v2777 = vmul.f32 %v217, %v2265
        %v2778 = vmul.f32 %v218, %v2266
        %v2779 = vmul.f32 %v219, %v2267
        %v2780 = vmul.f32 %v220, %v2268
        %v2781 = vmul.f32 %v221, %v2269
        %v2782 = vmul.f32 %v222, %v2270
        %v2783 = vmul.f32 %v223, %v2271
        %v2784 = vmul.f32 %v224, %v2272
        %v2785 = vmul.f32 %v225, %v2273
        %v2786 = vmul.f32 %v226, %v2274
        %v2787 = vmul.f32 %v227, %v2275
        %v2788 = vmul.f32 %v228, %v2276
        %v2789 = vmul.f32 %v229, %v2277
        %v2790 = vmul.f32 %v230, %v2278
        %v2791 = vmul.f32 %v231, %v2279
        %v2792 = vmul.f32 %v232, %v2280
        %v2793 = vmul.f32 %v233, %v2281
        %v2794 = vmul.f32 %v234, %v2282
        %v2795 = vmul.f32 %v235, %v2283
        %v2796 = vmul.f32 %v236, %v2284
        %v2797 = vmul.f32 %v237, %v2285
        %v2798 = vmul.f32 %v238, %v2286
        %v2799 = vmul.f32 %v239, %v2287
        %v2800 = vmul.f32 %v240, %v2288
        %v2801 = vmul.f32 %v241, %v2289
        %v2802 = vmul.f32 %v242, %v2290
        %v2803 = vmul.f32 %v243, %v2291
        %v2804 = vmul.f32 %v244, %v2292
        %v2805 = vmul.f32 %v245, %v2293
        %v2806 = vmul.f32 %v246, %v2294
        %v2807 = vmul.f32 %v247, %v2295
        %v2808 = vmul.f32 %v248, %v2296
        %v2809 = vmul.f32 %v249, %v2297
        %v2810 = vmul.f32 %v250, %v2298
        %v2811 = vmul.f32 %v251, %v2299
        %v2812 = vmul.f32 %v252, %v2300
        %v2813 = vmul.f32 %v253, %v2301
        %v2814 = vmul.f32 %v254, %v2302
        %v2815 = vmul.f32 %v255, %v2303
        %v2816 = vmul.f32 %v256, %v2304
        %v2817 = vmul.f32 %v257, %v2305
        %v2818 = vmul.f32 %v258, %v2306
        %v2819 = vmul.f32 %v259, %v2307
        %v2820 = vmul.f32 %v260, %v2308
        %v2821 = vmul.f32 %v261, %v2309
        %v2822 = vmul.f32 %v262, %v2310
        %v2823 = vmul.f32 %v263, %v2311
        %v2824 = vmul.f32 %v264, %v2312
        %v2825 = vmul.f32 %v265, %v2313
        %v2826 = vmul.f32 %v266, %v2314
        %v2827 = vmul.f32 %v267, %v2315
        %v2828 = vmul.f32 %v268, %v2316
        %v2829 = vmul.f32 %v269, %v2317
        %v2830 = vmul.f32 %v270, %v2318
        %v2831 = vmul.f32 %v271, %v2319
        %v2832 = vmul.f32 %v272, %v2320
        %v2833 = vmul.f32 %v273, %v2321
        %v2834 = vmul.f32 %v274, %v2322
        %v2835 = vmul.f32 %v275, %v2323
        %v2836 = vmul.f32 %v276, %v2324
        %v2837 = vmul.f32 %v277, %v2325
        %v2838 = vmul.f32 %v278, %v2326
        %v2839 = vmul.f32 %v279, %v2327
        %v2840 = vmul.f32 %v280, %v2328
        %v2841 = vmul.f32 %v281, %v2329
        %v2842 = vmul.f32 %v282, %v2330
        %v2843 = vmul.f32 %v283, %v2331
        %v2844 = vmul.f32 %v284, %v2332
        %v2845 = vmul.f32 %v285, %v2333
        %v2846 = vmul.f32 %v286, %v2334
        %v2847 = vmul.f32 %v287, %v2335
        %v2848 = vmul.f32 %v288, %v2336
        %v2849 = vmul.f32 %v289, %v2337
        %v2850 = vmul.f32 %v290, %v2338
        %v2851 = vmul.f32 %v291, %v2339
        %v2852 = vmul.f32 %v292, %v2340
        %v2853 = vmul.f32 %v293, %v2341
        %v2854 = vmul.f32 %v294, %v2342
        %v2855 = vmul.f32 %v295, %v2343
        %v2856 = vmul.f32 %v296, %v2344
        %v2857 = vmul.f32 %v297, %v2345
        %v2858 = vmul.f32 %v298, %v2346
        %v2859 = vmul.f32 %v299, %v2347
        %v2860 = vmul.f32 %v300, %v2348
        %v2861 = vmul.f32 %v301, %v2349
        %v2862 = vmul.f32 %v302, %v2350
        %v2863 = vmul.f32 %v303, %v2351
        %v2864 = vmul.f32 %v304, %v2352
        %v2865 = vmul.f32 %v305, %v2353
        %v2866 = vmul.f32 %v306, %v2354
        %v2867 = vmul.f32 %v307, %v2355
        %v2868 = vmul.f32 %v308, %v2356
        %v2869 = vmul.f32 %v309, %v2357
        %v2870 = vmul.f32 %v310, %v2358
        %v2871 = vmul.f32 %v311, %v2359
        %v2872 = vmul.f32 %v312, %v2360
        %v2873 = vmul.f32 %v313, %v2361
        %v2874 = vmul.f32 %v314, %v2362
        %v2875 = vmul.f32 %v315, %v2363
        %v2876 = vmul.f32 %v316, %v2364
        %v2877 = vmul.f32 %v317, %v2365
        %v2878 = vmul.f32 %v318, %v2366
        %v2879 = vmul.f32 %v319, %v2367
        %v2880 = vmul.f32 %v320, %v2368
        %v2881 = vmul.f32 %v321, %v2369
        %v2882 = vmul.f32 %v322, %v2370
        %v2883 = vmul.f32 %v323, %v2371
        %v2884 = vmul.f32 %v324, %v2372
        %v2885 = vmul.f32 %v325, %v2373
        %v2886 = vmul.f32 %v326, %v2374
        %v2887 = vmul.f32 %v327, %v2375
        %v2888 = vmul.f32 %v328, %v2376
        %v2889 = vmul.f32 %v329, %v2377
        %v2890 = vmul.f32 %v330, %v2378
        %v2891 = vmul.f32 %v331, %v2379
        %v2892 = vmul.f32 %v332, %v2380
        %v2893 = vmul.f32 %v333, %v2381
        %v2894 = vmul.f32 %v334, %v2382
        %v2895 = vmul.f32 %v335, %v2383
        %v2896 = vmul.f32 %v336, %v2384
        %v2897 = vmul.f32 %v337, %v2385
        %v2898 = vmul.f32 %v338, %v2386
        %v2899 = vmul.f32 %v339, %v2387
        %v2900 = vmul.f32 %v340, %v2388
        %v2901 = vmul.f32 %v341, %v2389
        %v2902 = vmul.f32 %v342, %v2390
        %v2903 = vmul.f32 %v343, %v2391
        %v2904 = vmul.f32 %v344, %v2392
        %v2905 = vmul.f32 %v345, %v2393
        %v2906 = vmul.f32 %v346, %v2394
        %v2907 = vmul.f32 %v347, %v2395
        %v2908 = vmul.f32 %v348, %v2396
        %v2909 = vmul.f32 %v349, %v2397
        %v2910 = vmul.f32 %v350, %v2398
        %v2911 = vmul.f32 %v351, %v2399
        %v2912 = vmul.f32 %v352, %v2400
        %v2913 = vmul.f32 %v353, %v2401
        %v2914 = vmul.f32 %v354, %v2402
        %v2915 = vmul.f32 %v355, %v2403
        %v2916 = vmul.f32 %v356, %v2404
        %v2917 = vmul.f32 %v357, %v2405
        %v2918 = vmul.f32 %v358, %v2406
        %v2919 = vmul.f32 %v359, %v2407
        %v2920 = vmul.f32 %v360, %v2408
        %v2921 = vmul.f32 %v361, %v2409
        %v2922 = vmul.f32 %v362, %v2410
        %v2923 = vmul.f32 %v363, %v2411
        %v2924 = vmul.f32 %v364, %v2412
        %v2925 = vmul.f32 %v365, %v2413
        %v2926 = vmul.f32 %v366, %v2414
        %v2927 = vmul.f32 %v367, %v2415
        %v2928 = vmul.f32 %v368, %v2416
        %v2929 = vmul.f32 %v369, %v2417
        %v2930 = vmul.f32 %v370, %v2418
        %v2931 = vmul.f32 %v371, %v2419
        %v2932 = vmul.f32 %v372, %v2420
        %v2933 = vmul.f32 %v373, %v2421
        %v2934 = vmul.f32 %v374, %v2422
        %v2935 = vmul.f32 %v375, %v2423
        %v2936 = vmul.f32 %v376, %v2424
        %v2937 = vmul.f32 %v377, %v2425
        %v2938 = vmul.f32 %v378, %v2426
        %v2939 = vmul.f32 %v379, %v2427
        %v2940 = vmul.f32 %v380, %v2428
        %v2941 = vmul.f32 %v381, %v2429
        %v2942 = vmul.f32 %v382, %v2430
        %v2943 = vmul.f32 %v383, %v2431
        %v2944 = vmul.f32 %v384, %v2432
        %v2945 = vmul.f32 %v385, %v2433
        %v2946 = vmul.f32 %v386, %v2434
        %v2947 = vmul.f32 %v387, %v2435
        %v2948 = vmul.f32 %v388, %v2436
        %v2949 = vmul.f32 %v389, %v2437
        %v2950 = vmul.f32 %v390, %v2438
        %v2951 = vmul.f32 %v391, %v2439
        %v2952 = vmul.f32 %v392, %v2440
        %v2953 = vmul.f32 %v393, %v2441
        %v2954 = vmul.f32 %v394, %v2442
        %v2955 = vmul.f32 %v395, %v2443
        %v2956 = vmul.f32 %v396, %v2444
        %v2957 = vmul.f32 %v397, %v2445
        %v2958 = vmul.f32 %v398, %v2446
        %v2959 = vmul.f32 %v399, %v2447
        %v2960 = vmul.f32 %v400, %v2448
        %v2961 = vmul.f32 %v401, %v2449
        %v2962 = vmul.f32 %v402, %v2450
        %v2963 = vmul.f32 %v403, %v2451
        %v2964 = vmul.f32 %v404, %v2452
        %v2965 = vmul.f32 %v405, %v2453
        %v2966 = vmul.f32 %v406, %v2454
        %v2967 = vmul.f32 %v407, %v2455
        %v2968 = vmul.f32 %v408, %v2456
        %v2969 = vmul.f32 %v409, %v2457
        %v2970 = vmul.f32 %v410, %v2458
        %v2971 = vmul.f32 %v411, %v2459
        %v2972 = vmul.f32 %v412, %v2460
        %v2973 = vmul.f32 %v413, %v2461
        %v2974 = vmul.f32 %v414, %v2462
        %v2975 = vmul.f32 %v415, %v2463
        %v2976 = vmul.f32 %v416, %v2464
        %v2977 = vmul.f32 %v417, %v2465
        %v2978 = vmul.f32 %v418, %v2466
        %v2979 = vmul.f32 %v419, %v2467
        %v2980 = vmul.f32 %v420, %v2468
        %v2981 = vmul.f32 %v421, %v2469
        %v2982 = vmul.f32 %v422, %v2470
        %v2983 = vmul.f32 %v423, %v2471
        %v2984 = vmul.f32 %v424, %v2472
        %v2985 = vmul.f32 %v425, %v2473
        %v2986 = vmul.f32 %v426, %v2474
        %v2987 = vmul.f32 %v427, %v2475
        %v2988 = vmul.f32 %v428, %v2476
        %v2989 = vmul.f32 %v429, %v2477
        %v2990 = vmul.f32 %v430, %v2478
        %v2991 = vmul.f32 %v431, %v2479
        %v2992 = vmul.f32 %v432, %v2480
        %v2993 = vmul.f32 %v433, %v2481
        %v2994 = vmul.f32 %v434, %v2482
        %v2995 = vmul.f32 %v435, %v2483
        %v2996 = vmul.f32 %v436, %v2484
        %v2997 = vmul.f32 %v437, %v2485
        %v2998 = vmul.f32 %v438, %v2486
        %v2999 = vmul.f32 %v439, %v2487
        %v3000 = vmul.f32 %v440, %v2488
        %v3001 = vmul.f32 %v441, %v2489
        %v3002 = vmul.f32 %v442, %v2490
        %v3003 = vmul.f32 %v443, %v2491
        %v3004 = vmul.f32 %v444, %v2492
        %v3005 = vmul.f32 %v445, %v2493
        %v3006 = vmul.f32 %v446, %v2494
        %v3007 = vmul.f32 %v447, %v2495
        %v3008 = vmul.f32 %v448, %v2496
        %v3009 = vmul.f32 %v449, %v2497
        %v3010 = vmul.f32 %v450, %v2498
        %v3011 = vmul.f32 %v451, %v2499
        %v3012 = vmul.f32 %v452, %v2500
        %v3013 = vmul.f32 %v453, %v2501
        %v3014 = vmul.f32 %v454, %v2502
        %v3015 = vmul.f32 %v455, %v2503
        %v3016 = vmul.f32 %v456, %v2504
        %v3017 = vmul.f32 %v457, %v2505
        %v3018 = vmul.f32 %v458, %v2506
        %v3019 = vmul.f32 %v459, %v2507
        %v3020 = vmul.f32 %v460, %v2508
        %v3021 = vmul.f32 %v461, %v2509
        %v3022 = vmul.f32 %v462, %v2510
        %v3023 = vmul.f32 %v463, %v2511
        %v3024 = vmul.f32 %v464, %v2512
        %v3025 = vmul.f32 %v465, %v2513
        %v3026 = vmul.f32 %v466, %v2514
        %v3027 = vmul.f32 %v467, %v2515
        %v3028 = vmul.f32 %v468, %v2516
        %v3029 = vmul.f32 %v469, %v2517
        %v3030 = vmul.f32 %v470, %v2518
        %v3031 = vmul.f32 %v471, %v2519
        %v3032 = vmul.f32 %v472, %v2520
        %v3033 = vmul.f32 %v473, %v2521
        %v3034 = vmul.f32 %v474, %v2522
        %v3035 = vmul.f32 %v475, %v2523
        %v3036 = vmul.f32 %v476, %v2524
        %v3037 = vmul.f32 %v477, %v2525
        %v3038 = vmul.f32 %v478, %v2526
        %v3039 = vmul.f32 %v479, %v2527
        %v3040 = vmul.f32 %v480, %v2528
        %v3041 = vmul.f32 %v481, %v2529
        %v3042 = vmul.f32 %v482, %v2530
        %v3043 = vmul.f32 %v483, %v2531
        %v3044 = vmul.f32 %v484, %v2532
        %v3045 = vmul.f32 %v485, %v2533
        %v3046 = vmul.f32 %v486, %v2534
        %v3047 = vmul.f32 %v487, %v2535
        %v3048 = vmul.f32 %v488, %v2536
        %v3049 = vmul.f32 %v489, %v2537
        %v3050 = vmul.f32 %v490, %v2538
        %v3051 = vmul.f32 %v491, %v2539
        %v3052 = vmul.f32 %v492, %v2540
        %v3053 = vmul.f32 %v493, %v2541
        %v3054 = vmul.f32 %v494, %v2542
        %v3055 = vmul.f32 %v495, %v2543
        %v3056 = vmul.f32 %v496, %v2544
        %v3057 = vmul.f32 %v497, %v2545
        %v3058 = vmul.f32 %v498, %v2546
        %v3059 = vmul.f32 %v499, %v2547
        %v3060 = vmul.f32 %v500, %v2548
        %v3061 = vmul.f32 %v501, %v2549
        %v3062 = vmul.f32 %v502, %v2550
        %v3063 = vmul.f32 %v503, %v2551
        %v3064 = vmul.f32 %v504, %v2552
        %v3065 = vmul.f32 %v505, %v2553
        %v3066 = vmul.f32 %v506, %v2554
        %v3067 = vmul.f32 %v507, %v2555
        %v3068 = vmul.f32 %v508, %v2556
        %v3069 = vmul.f32 %v509, %v2557
        %v3070 = vmul.f32 %v510, %v2558
        %v3071 = vmul.f32 %v511, %v2559
        %v3072 = vmul.f32 %v512, %v2560
        %v3073 = vmul.f32 %v513, %v2561
        %v3074 = vmul.f32 %v514, %v2562
        %v3075 = vmul.f32 %v515, %v2563
        %v3076 = vmul.f32 %v516, %v2564
        %v3077 = vmul.f32 %v517, %v2565
        %v3078 = vmul.f32 %v518, %v2566
        %v3079 = vmul.f32 %v519, %v2567
        %v3080 = vmul.f32 %v520, %v2568
        %v3081 = vmul.f32 %v521, %v2569
        %v3082 = vmul.f32 %v522, %v2570
        %v3083 = vmul.f32 %v523, %v2571
        %v3084 = vmul.f32 %v524, %v2572
        %v3085 = vmul.f32 %v525, %v2573
        %v3086 = vmul.f32 %v526, %v2574
        %v3087 = vmul.f32 %v527, %v2575
        %v3088 = vmul.f32 %v528, %v2576
        %v3089 = vmul.f32 %v529, %v2577
        %v3090 = vmul.f32 %v530, %v2578
        %v3091 = vmul.f32 %v531, %v2579
        %v3092 = vmul.f32 %v532, %v2580
        %v3093 = vmul.f32 %v533, %v2581
        %v3094 = vmul.f32 %v534, %v2582
        %v3095 = vmul.f32 %v535, %v2583
        %v3096 = vmul.f32 %v536, %v2584
        %v3097 = vmul.f32 %v537, %v2585
        %v3098 = vmul.f32 %v538, %v2586
        %v3099 = vmul.f32 %v539, %v2587
        %v3100 = vmul.f32 %v540, %v2588
        %v3101 = vmul.f32 %v541, %v2589
        %v3102 = vmul.f32 %v542, %v2590
        %v3103 = vmul.f32 %v543, %v2591
        %v3104 = vmul.f32 %v544, %v2592
        %v3105 = vmul.f32 %v545, %v2593
        %v3106 = vmul.f32 %v546, %v2594
        %v3107 = vmul.f32 %v547, %v2595
        %v3108 = vmul.f32 %v548, %v2596
        %v3109 = vmul.f32 %v549, %v2597
        %v3110 = vmul.f32 %v550, %v2598
        %v3111 = vmul.f32 %v551, %v2599
        %v3112 = vmul.f32 %v552, %v2600
        %v3113 = vmul.f32 %v553, %v2601
        %v3114 = vmul.f32 %v554, %v2602
        %v3115 = vmul.f32 %v555, %v2603
        %v3116 = vmul.f32 %v556, %v2604
        %v3117 = vmul.f32 %v557, %v2605
        %v3118 = vmul.f32 %v558, %v2606
        %v3119 = vmul.f32 %v559, %v2607
        %v3120 = vmul.f32 %v560, %v2608
        %v3121 = vmul.f32 %v561, %v2609
        %v3122 = vmul.f32 %v562, %v2610
        %v3123 = vmul.f32 %v563, %v2611
        %v3124 = vmul.f32 %v564, %v2612
        %v3125 = vmul.f32 %v565, %v2613
        %v3126 = vmul.f32 %v566, %v2614
        %v3127 = vmul.f32 %v567, %v2615
        %v3128 = vmul.f32 %v568, %v2616
        %v3129 = vmul.f32 %v569, %v2617
        %v3130 = vmul.f32 %v570, %v2618
        %v3131 = vmul.f32 %v571, %v2619
        %v3132 = vmul.f32 %v572, %v2620
        %v3133 = vmul.f32 %v573, %v2621
        %v3134 = vmul.f32 %v574, %v2622
        %v3135 = vmul.f32 %v575, %v2623
        %v3136 = vmul.f32 %v576, %v2624
        %v3137 = vmul.f32 %v577, %v2625
        %v3138 = vmul.f32 %v578, %v2626
        %v3139 = vmul.f32 %v579, %v2627
        %v3140 = vmul.f32 %v580, %v2628
        %v3141 = vmul.f32 %v581, %v2629
        %v3142 = vmul.f32 %v582, %v2630
        %v3143 = vmul.f32 %v583, %v2631
        %v3144 = vmul.f32 %v584, %v2632
        %v3145 = vmul.f32 %v585, %v2633
        %v3146 = vmul.f32 %v586, %v2634
        %v3147 = vmul.f32 %v587, %v2635
        %v3148 = vmul.f32 %v588, %v2636
        %v3149 = vmul.f32 %v589, %v2637
        %v3150 = vmul.f32 %v590, %v2638
        %v3151 = vmul.f32 %v591, %v2639
        %v3152 = vmul.f32 %v592, %v2640
        %v3153 = vmul.f32 %v593, %v2641
        %v3154 = vmul.f32 %v594, %v2642
        %v3155 = vmul.f32 %v595, %v2643
        %v3156 = vmul.f32 %v596, %v2644
        %v3157 = vmul.f32 %v597, %v2645
        %v3158 = vmul.f32 %v598, %v2646
        %v3159 = vmul.f32 %v599, %v2647
        %v3160 = vmul.f32 %v600, %v2648
        %v3161 = vmul.f32 %v601, %v2649
        %v3162 = vmul.f32 %v602, %v2650
        %v3163 = vmul.f32 %v603, %v2651
        %v3164 = vmul.f32 %v604, %v2652
        %v3165 = vmul.f32 %v605, %v2653
        %v3166 = vmul.f32 %v606, %v2654
        %v3167 = vmul.f32 %v607, %v2655
        %v3168 = vmul.f32 %v608, %v2656
        %v3169 = vmul.f32 %v609, %v2657
        %v3170 = vmul.f32 %v610, %v2658
        %v3171 = vmul.f32 %v611, %v2659
        %v3172 = vmul.f32 %v612, %v2660
        %v3173 = vmul.f32 %v613, %v2661
        %v3174 = vmul.f32 %v614, %v2662
        %v3175 = vmul.f32 %v615, %v2663
        %v3176 = vmul.f32 %v616, %v2664
        %v3177 = vmul.f32 %v617, %v2665
        %v3178 = vmul.f32 %v618, %v2666
        %v3179 = vmul.f32 %v619, %v2667
        %v3180 = vmul.f32 %v620, %v2668
        %v3181 = vmul.f32 %v621, %v2669
        %v3182 = vmul.f32 %v622, %v2670
        %v3183 = vmul.f32 %v623, %v2671
        %v3184 = vmul.f32 %v624, %v2672
        %v3185 = vmul.f32 %v625, %v2673
        %v3186 = vmul.f32 %v626, %v2674
        %v3187 = vmul.f32 %v627, %v2675
        %v3188 = vmul.f32 %v628, %v2676
        %v3189 = vmul.f32 %v629, %v2677
        %v3190 = vmul.f32 %v630, %v2678
        %v3191 = vmul.f32 %v631, %v2679
        %v3192 = vmul.f32 %v632, %v2680
        %v3193 = vmul.f32 %v633, %v2681
        %v3194 = vmul.f32 %v634, %v2682
        %v3195 = vmul.f32 %v635, %v2683
        %v3196 = vmul.f32 %v636, %v2684
        %v3197 = vmul.f32 %v637, %v2685
        %v3198 = vmul.f32 %v638, %v2686
        %v3199 = vmul.f32 %v639, %v2687
        %v3200 = vmul.f32 %v640, %v2688
        %v3201 = vmul.f32 %v641, %v2689
        %v3202 = vmul.f32 %v642, %v2690
        %v3203 = vmul.f32 %v643, %v2691
        %v3204 = vmul.f32 %v644, %v2692
        %v3205 = vmul.f32 %v645, %v2693
        %v3206 = vmul.f32 %v646, %v2694
        %v3207 = vmul.f32 %v647, %v2695
        %v3208 = vmul.f32 %v648, %v2696
        %v3209 = vmul.f32 %v649, %v2697
        %3210 = vst [vmem:[%s135] sm:$0xff] %v2698
        %3211 = vst [vmem:[%s135 + $0x8] sm:$0xff] %v2699
        %3212 = vst [vmem:[%s135 + $0x10] sm:$0xff] %v2700
        %3213 = vst [vmem:[%s135 + $0x18] sm:$0xff] %v2701
        %3214 = vst [vmem:[%s135 + $0x20] sm:$0xff] %v2702
        %3215 = vst [vmem:[%s135 + $0x28] sm:$0xff] %v2703
        %3216 = vst [vmem:[%s135 + $0x30] sm:$0xff] %v2704
        %3217 = vst [vmem:[%s135 + $0x38] sm:$0xff] %v2705
        %3218 = vst [vmem:[%s135 + $0x40] sm:$0xff] %v2706
        %3219 = vst [vmem:[%s135 + $0x48] sm:$0xff] %v2707
        %3220 = vst [vmem:[%s135 + $0x50] sm:$0xff] %v2708
        %3221 = vst [vmem:[%s135 + $0x58] sm:$0xff] %v2709
        %3222 = vst [vmem:[%s135 + $0x60] sm:$0xff] %v2710
        %3223 = vst [vmem:[%s135 + $0x68] sm:$0xff] %v2711
        %3224 = vst [vmem:[%s135 + $0x70] sm:$0xff] %v2712
        %3225 = vst [vmem:[%s135 + $0x78] sm:$0xff] %v2713
        %3226 = vst [vmem:[%s135 + $0x80] sm:$0xff] %v2714
        %3227 = vst [vmem:[%s135 + $0x88] sm:$0xff] %v2715
        %3228 = vst [vmem:[%s135 + $0x90] sm:$0xff] %v2716
        %3229 = vst [vmem:[%s135 + $0x98] sm:$0xff] %v2717
        %3230 = vst [vmem:[%s135 + $0xa0] sm:$0xff] %v2718
        %3231 = vst [vmem:[%s135 + $0xa8] sm:$0xff] %v2719
        %3232 = vst [vmem:[%s135 + $0xb0] sm:$0xff] %v2720
        %3233 = vst [vmem:[%s135 + $0xb8] sm:$0xff] %v2721
        %3234 = vst [vmem:[%s135 + $0xc0] sm:$0xff] %v2722
        %3235 = vst [vmem:[%s135 + $0xc8] sm:$0xff] %v2723
        %3236 = vst [vmem:[%s135 + $0xd0] sm:$0xff] %v2724
        %3237 = vst [vmem:[%s135 + $0xd8] sm:$0xff] %v2725
        %3238 = vst [vmem:[%s135 + $0xe0] sm:$0xff] %v2726
        %3239 = vst [vmem:[%s135 + $0xe8] sm:$0xff] %v2727
        %3240 = vst [vmem:[%s135 + $0xf0] sm:$0xff] %v2728
        %3241 = vst [vmem:[%s135 + $0xf8] sm:$0xff] %v2729
        %3242 = vst [vmem:[%s135 + $0x100] sm:$0xff] %v2730
        %3243 = vst [vmem:[%s135 + $0x108] sm:$0xff] %v2731
        %3244 = vst [vmem:[%s135 + $0x110] sm:$0xff] %v2732
        %3245 = vst [vmem:[%s135 + $0x118] sm:$0xff] %v2733
        %3246 = vst [vmem:[%s135 + $0x120] sm:$0xff] %v2734
        %3247 = vst [vmem:[%s135 + $0x128] sm:$0xff] %v2735
        %3248 = vst [vmem:[%s135 + $0x130] sm:$0xff] %v2736
        %3249 = vst [vmem:[%s135 + $0x138] sm:$0xff] %v2737
        %3250 = vst [vmem:[%s135 + $0x140] sm:$0xff] %v2738
        %3251 = vst [vmem:[%s135 + $0x148] sm:$0xff] %v2739
        %3252 = vst [vmem:[%s135 + $0x150] sm:$0xff] %v2740
        %3253 = vst [vmem:[%s135 + $0x158] sm:$0xff] %v2741
        %3254 = vst [vmem:[%s135 + $0x160] sm:$0xff] %v2742
        %3255 = vst [vmem:[%s135 + $0x168] sm:$0xff] %v2743
        %3256 = vst [vmem:[%s135 + $0x170] sm:$0xff] %v2744
        %3257 = vst [vmem:[%s135 + $0x178] sm:$0xff] %v2745
        %3258 = vst [vmem:[%s135 + $0x180] sm:$0xff] %v2746
        %3259 = vst [vmem:[%s135 + $0x188] sm:$0xff] %v2747
        %3260 = vst [vmem:[%s135 + $0x190] sm:$0xff] %v2748
        %3261 = vst [vmem:[%s135 + $0x198] sm:$0xff] %v2749
        %3262 = vst [vmem:[%s135 + $0x1a0] sm:$0xff] %v2750
        %3263 = vst [vmem:[%s135 + $0x1a8] sm:$0xff] %v2751
        %3264 = vst [vmem:[%s135 + $0x1b0] sm:$0xff] %v2752
        %3265 = vst [vmem:[%s135 + $0x1b8] sm:$0xff] %v2753
        %3266 = vst [vmem:[%s135 + $0x1c0] sm:$0xff] %v2754
        %3267 = vst [vmem:[%s135 + $0x1c8] sm:$0xff] %v2755
        %3268 = vst [vmem:[%s135 + $0x1d0] sm:$0xff] %v2756
        %3269 = vst [vmem:[%s135 + $0x1d8] sm:$0xff] %v2757
        %3270 = vst [vmem:[%s135 + $0x1e0] sm:$0xff] %v2758
        %3271 = vst [vmem:[%s135 + $0x1e8] sm:$0xff] %v2759
        %3272 = vst [vmem:[%s135 + $0x1f0] sm:$0xff] %v2760
        %3273 = vst [vmem:[%s135 + $0x1f8] sm:$0xff] %v2761
        %3274 = vst [vmem:[%s135 + $0x200] sm:$0xff] %v2762
        %3275 = vst [vmem:[%s135 + $0x208] sm:$0xff] %v2763
        %3276 = vst [vmem:[%s135 + $0x210] sm:$0xff] %v2764
        %3277 = vst [vmem:[%s135 + $0x218] sm:$0xff] %v2765
        %3278 = vst [vmem:[%s135 + $0x220] sm:$0xff] %v2766
        %3279 = vst [vmem:[%s135 + $0x228] sm:$0xff] %v2767
        %3280 = vst [vmem:[%s135 + $0x230] sm:$0xff] %v2768
        %3281 = vst [vmem:[%s135 + $0x238] sm:$0xff] %v2769
        %3282 = vst [vmem:[%s135 + $0x240] sm:$0xff] %v2770
        %3283 = vst [vmem:[%s135 + $0x248] sm:$0xff] %v2771
        %3284 = vst [vmem:[%s135 + $0x250] sm:$0xff] %v2772
        %3285 = vst [vmem:[%s135 + $0x258] sm:$0xff] %v2773
        %3286 = vst [vmem:[%s135 + $0x260] sm:$0xff] %v2774
        %3287 = vst [vmem:[%s135 + $0x268] sm:$0xff] %v2775
        %3288 = vst [vmem:[%s135 + $0x270] sm:$0xff] %v2776
        %3289 = vst [vmem:[%s135 + $0x278] sm:$0xff] %v2777
        %3290 = vst [vmem:[%s135 + $0x280] sm:$0xff] %v2778
        %3291 = vst [vmem:[%s135 + $0x288] sm:$0xff] %v2779
        %3292 = vst [vmem:[%s135 + $0x290] sm:$0xff] %v2780
        %3293 = vst [vmem:[%s135 + $0x298] sm:$0xff] %v2781
        %3294 = vst [vmem:[%s135 + $0x2a0] sm:$0xff] %v2782
        %3295 = vst [vmem:[%s135 + $0x2a8] sm:$0xff] %v2783
        %3296 = vst [vmem:[%s135 + $0x2b0] sm:$0xff] %v2784
        %3297 = vst [vmem:[%s135 + $0x2b8] sm:$0xff] %v2785
        %3298 = vst [vmem:[%s135 + $0x2c0] sm:$0xff] %v2786
        %3299 = vst [vmem:[%s135 + $0x2c8] sm:$0xff] %v2787
        %3300 = vst [vmem:[%s135 + $0x2d0] sm:$0xff] %v2788
        %3301 = vst [vmem:[%s135 + $0x2d8] sm:$0xff] %v2789
        %3302 = vst [vmem:[%s135 + $0x2e0] sm:$0xff] %v2790
        %3303 = vst [vmem:[%s135 + $0x2e8] sm:$0xff] %v2791
        %3304 = vst [vmem:[%s135 + $0x2f0] sm:$0xff] %v2792
        %3305 = vst [vmem:[%s135 + $0x2f8] sm:$0xff] %v2793
        %3306 = vst [vmem:[%s135 + $0x300] sm:$0xff] %v2794
        %3307 = vst [vmem:[%s135 + $0x308] sm:$0xff] %v2795
        %3308 = vst [vmem:[%s135 + $0x310] sm:$0xff] %v2796
        %3309 = vst [vmem:[%s135 + $0x318] sm:$0xff] %v2797
        %3310 = vst [vmem:[%s135 + $0x320] sm:$0xff] %v2798
        %3311 = vst [vmem:[%s135 + $0x328] sm:$0xff] %v2799
        %3312 = vst [vmem:[%s135 + $0x330] sm:$0xff] %v2800
        %3313 = vst [vmem:[%s135 + $0x338] sm:$0xff] %v2801
        %3314 = vst [vmem:[%s135 + $0x340] sm:$0xff] %v2802
        %3315 = vst [vmem:[%s135 + $0x348] sm:$0xff] %v2803
        %3316 = vst [vmem:[%s135 + $0x350] sm:$0xff] %v2804
        %3317 = vst [vmem:[%s135 + $0x358] sm:$0xff] %v2805
        %3318 = vst [vmem:[%s135 + $0x360] sm:$0xff] %v2806
        %3319 = vst [vmem:[%s135 + $0x368] sm:$0xff] %v2807
        %3320 = vst [vmem:[%s135 + $0x370] sm:$0xff] %v2808
        %3321 = vst [vmem:[%s135 + $0x378] sm:$0xff] %v2809
        %3322 = vst [vmem:[%s135 + $0x380] sm:$0xff] %v2810
        %3323 = vst [vmem:[%s135 + $0x388] sm:$0xff] %v2811
        %3324 = vst [vmem:[%s135 + $0x390] sm:$0xff] %v2812
        %3325 = vst [vmem:[%s135 + $0x398] sm:$0xff] %v2813
        %3326 = vst [vmem:[%s135 + $0x3a0] sm:$0xff] %v2814
        %3327 = vst [vmem:[%s135 + $0x3a8] sm:$0xff] %v2815
        %3328 = vst [vmem:[%s135 + $0x3b0] sm:$0xff] %v2816
        %3329 = vst [vmem:[%s135 + $0x3b8] sm:$0xff] %v2817
        %3330 = vst [vmem:[%s135 + $0x3c0] sm:$0xff] %v2818
        %3331 = vst [vmem:[%s135 + $0x3c8] sm:$0xff] %v2819
        %3332 = vst [vmem:[%s135 + $0x3d0] sm:$0xff] %v2820
        %3333 = vst [vmem:[%s135 + $0x3d8] sm:$0xff] %v2821
        %3334 = vst [vmem:[%s135 + $0x3e0] sm:$0xff] %v2822
        %3335 = vst [vmem:[%s135 + $0x3e8] sm:$0xff] %v2823
        %3336 = vst [vmem:[%s135 + $0x3f0] sm:$0xff] %v2824
        %3337 = vst [vmem:[%s135 + $0x3f8] sm:$0xff] %v2825
        %3338 = vst [vmem:[%s135 + $0x400] sm:$0xff] %v2826
        %3339 = vst [vmem:[%s135 + $0x408] sm:$0xff] %v2827
        %3340 = vst [vmem:[%s135 + $0x410] sm:$0xff] %v2828
        %3341 = vst [vmem:[%s135 + $0x418] sm:$0xff] %v2829
        %3342 = vst [vmem:[%s135 + $0x420] sm:$0xff] %v2830
        %3343 = vst [vmem:[%s135 + $0x428] sm:$0xff] %v2831
        %3344 = vst [vmem:[%s135 + $0x430] sm:$0xff] %v2832
        %3345 = vst [vmem:[%s135 + $0x438] sm:$0xff] %v2833
        %3346 = vst [vmem:[%s135 + $0x440] sm:$0xff] %v2834
        %3347 = vst [vmem:[%s135 + $0x448] sm:$0xff] %v2835
        %3348 = vst [vmem:[%s135 + $0x450] sm:$0xff] %v2836
        %3349 = vst [vmem:[%s135 + $0x458] sm:$0xff] %v2837
        %3350 = vst [vmem:[%s135 + $0x460] sm:$0xff] %v2838
        %3351 = vst [vmem:[%s135 + $0x468] sm:$0xff] %v2839
        %3352 = vst [vmem:[%s135 + $0x470] sm:$0xff] %v2840
        %3353 = vst [vmem:[%s135 + $0x478] sm:$0xff] %v2841
        %3354 = vst [vmem:[%s135 + $0x480] sm:$0xff] %v2842
        %3355 = vst [vmem:[%s135 + $0x488] sm:$0xff] %v2843
        %3356 = vst [vmem:[%s135 + $0x490] sm:$0xff] %v2844
        %3357 = vst [vmem:[%s135 + $0x498] sm:$0xff] %v2845
        %3358 = vst [vmem:[%s135 + $0x4a0] sm:$0xff] %v2846
        %3359 = vst [vmem:[%s135 + $0x4a8] sm:$0xff] %v2847
        %3360 = vst [vmem:[%s135 + $0x4b0] sm:$0xff] %v2848
        %3361 = vst [vmem:[%s135 + $0x4b8] sm:$0xff] %v2849
        %3362 = vst [vmem:[%s135 + $0x4c0] sm:$0xff] %v2850
        %3363 = vst [vmem:[%s135 + $0x4c8] sm:$0xff] %v2851
        %3364 = vst [vmem:[%s135 + $0x4d0] sm:$0xff] %v2852
        %3365 = vst [vmem:[%s135 + $0x4d8] sm:$0xff] %v2853
        %3366 = vst [vmem:[%s135 + $0x4e0] sm:$0xff] %v2854
        %3367 = vst [vmem:[%s135 + $0x4e8] sm:$0xff] %v2855
        %3368 = vst [vmem:[%s135 + $0x4f0] sm:$0xff] %v2856
        %3369 = vst [vmem:[%s135 + $0x4f8] sm:$0xff] %v2857
        %3370 = vst [vmem:[%s135 + $0x500] sm:$0xff] %v2858
        %3371 = vst [vmem:[%s135 + $0x508] sm:$0xff] %v2859
        %3372 = vst [vmem:[%s135 + $0x510] sm:$0xff] %v2860
        %3373 = vst [vmem:[%s135 + $0x518] sm:$0xff] %v2861
        %3374 = vst [vmem:[%s135 + $0x520] sm:$0xff] %v2862
        %3375 = vst [vmem:[%s135 + $0x528] sm:$0xff] %v2863
        %3376 = vst [vmem:[%s135 + $0x530] sm:$0xff] %v2864
        %3377 = vst [vmem:[%s135 + $0x538] sm:$0xff] %v2865
        %3378 = vst [vmem:[%s135 + $0x540] sm:$0xff] %v2866
        %3379 = vst [vmem:[%s135 + $0x548] sm:$0xff] %v2867
        %3380 = vst [vmem:[%s135 + $0x550] sm:$0xff] %v2868
        %3381 = vst [vmem:[%s135 + $0x558] sm:$0xff] %v2869
        %3382 = vst [vmem:[%s135 + $0x560] sm:$0xff] %v2870
        %3383 = vst [vmem:[%s135 + $0x568] sm:$0xff] %v2871
        %3384 = vst [vmem:[%s135 + $0x570] sm:$0xff] %v2872
        %3385 = vst [vmem:[%s135 + $0x578] sm:$0xff] %v2873
        %3386 = vst [vmem:[%s135 + $0x580] sm:$0xff] %v2874
        %3387 = vst [vmem:[%s135 + $0x588] sm:$0xff] %v2875
        %3388 = vst [vmem:[%s135 + $0x590] sm:$0xff] %v2876
        %3389 = vst [vmem:[%s135 + $0x598] sm:$0xff] %v2877
        %3390 = vst [vmem:[%s135 + $0x5a0] sm:$0xff] %v2878
        %3391 = vst [vmem:[%s135 + $0x5a8] sm:$0xff] %v2879
        %3392 = vst [vmem:[%s135 + $0x5b0] sm:$0xff] %v2880
        %3393 = vst [vmem:[%s135 + $0x5b8] sm:$0xff] %v2881
        %3394 = vst [vmem:[%s135 + $0x5c0] sm:$0xff] %v2882
        %3395 = vst [vmem:[%s135 + $0x5c8] sm:$0xff] %v2883
        %3396 = vst [vmem:[%s135 + $0x5d0] sm:$0xff] %v2884
        %3397 = vst [vmem:[%s135 + $0x5d8] sm:$0xff] %v2885
        %3398 = vst [vmem:[%s135 + $0x5e0] sm:$0xff] %v2886
        %3399 = vst [vmem:[%s135 + $0x5e8] sm:$0xff] %v2887
        %3400 = vst [vmem:[%s135 + $0x5f0] sm:$0xff] %v2888
        %3401 = vst [vmem:[%s135 + $0x5f8] sm:$0xff] %v2889
        %3402 = vst [vmem:[%s135 + $0x600] sm:$0xff] %v2890
        %3403 = vst [vmem:[%s135 + $0x608] sm:$0xff] %v2891
        %3404 = vst [vmem:[%s135 + $0x610] sm:$0xff] %v2892
        %3405 = vst [vmem:[%s135 + $0x618] sm:$0xff] %v2893
        %3406 = vst [vmem:[%s135 + $0x620] sm:$0xff] %v2894
        %3407 = vst [vmem:[%s135 + $0x628] sm:$0xff] %v2895
        %3408 = vst [vmem:[%s135 + $0x630] sm:$0xff] %v2896
        %3409 = vst [vmem:[%s135 + $0x638] sm:$0xff] %v2897
        %3410 = vst [vmem:[%s135 + $0x640] sm:$0xff] %v2898
        %3411 = vst [vmem:[%s135 + $0x648] sm:$0xff] %v2899
        %3412 = vst [vmem:[%s135 + $0x650] sm:$0xff] %v2900
        %3413 = vst [vmem:[%s135 + $0x658] sm:$0xff] %v2901
        %3414 = vst [vmem:[%s135 + $0x660] sm:$0xff] %v2902
        %3415 = vst [vmem:[%s135 + $0x668] sm:$0xff] %v2903
        %3416 = vst [vmem:[%s135 + $0x670] sm:$0xff] %v2904
        %3417 = vst [vmem:[%s135 + $0x678] sm:$0xff] %v2905
        %3418 = vst [vmem:[%s135 + $0x680] sm:$0xff] %v2906
        %3419 = vst [vmem:[%s135 + $0x688] sm:$0xff] %v2907
        %3420 = vst [vmem:[%s135 + $0x690] sm:$0xff] %v2908
        %3421 = vst [vmem:[%s135 + $0x698] sm:$0xff] %v2909
        %3422 = vst [vmem:[%s135 + $0x6a0] sm:$0xff] %v2910
        %3423 = vst [vmem:[%s135 + $0x6a8] sm:$0xff] %v2911
        %3424 = vst [vmem:[%s135 + $0x6b0] sm:$0xff] %v2912
        %3425 = vst [vmem:[%s135 + $0x6b8] sm:$0xff] %v2913
        %3426 = vst [vmem:[%s135 + $0x6c0] sm:$0xff] %v2914
        %3427 = vst [vmem:[%s135 + $0x6c8] sm:$0xff] %v2915
        %3428 = vst [vmem:[%s135 + $0x6d0] sm:$0xff] %v2916
        %3429 = vst [vmem:[%s135 + $0x6d8] sm:$0xff] %v2917
        %3430 = vst [vmem:[%s135 + $0x6e0] sm:$0xff] %v2918
        %3431 = vst [vmem:[%s135 + $0x6e8] sm:$0xff] %v2919
        %3432 = vst [vmem:[%s135 + $0x6f0] sm:$0xff] %v2920
        %3433 = vst [vmem:[%s135 + $0x6f8] sm:$0xff] %v2921
        %3434 = vst [vmem:[%s135 + $0x700] sm:$0xff] %v2922
        %3435 = vst [vmem:[%s135 + $0x708] sm:$0xff] %v2923
        %3436 = vst [vmem:[%s135 + $0x710] sm:$0xff] %v2924
        %3437 = vst [vmem:[%s135 + $0x718] sm:$0xff] %v2925
        %3438 = vst [vmem:[%s135 + $0x720] sm:$0xff] %v2926
        %3439 = vst [vmem:[%s135 + $0x728] sm:$0xff] %v2927
        %3440 = vst [vmem:[%s135 + $0x730] sm:$0xff] %v2928
        %3441 = vst [vmem:[%s135 + $0x738] sm:$0xff] %v2929
        %3442 = vst [vmem:[%s135 + $0x740] sm:$0xff] %v2930
        %3443 = vst [vmem:[%s135 + $0x748] sm:$0xff] %v2931
        %3444 = vst [vmem:[%s135 + $0x750] sm:$0xff] %v2932
        %3445 = vst [vmem:[%s135 + $0x758] sm:$0xff] %v2933
        %3446 = vst [vmem:[%s135 + $0x760] sm:$0xff] %v2934
        %3447 = vst [vmem:[%s135 + $0x768] sm:$0xff] %v2935
        %3448 = vst [vmem:[%s135 + $0x770] sm:$0xff] %v2936
        %3449 = vst [vmem:[%s135 + $0x778] sm:$0xff] %v2937
        %3450 = vst [vmem:[%s135 + $0x780] sm:$0xff] %v2938
        %3451 = vst [vmem:[%s135 + $0x788] sm:$0xff] %v2939
        %3452 = vst [vmem:[%s135 + $0x790] sm:$0xff] %v2940
        %3453 = vst [vmem:[%s135 + $0x798] sm:$0xff] %v2941
        %3454 = vst [vmem:[%s135 + $0x7a0] sm:$0xff] %v2942
        %3455 = vst [vmem:[%s135 + $0x7a8] sm:$0xff] %v2943
        %3456 = vst [vmem:[%s135 + $0x7b0] sm:$0xff] %v2944
        %3457 = vst [vmem:[%s135 + $0x7b8] sm:$0xff] %v2945
        %3458 = vst [vmem:[%s135 + $0x7c0] sm:$0xff] %v2946
        %3459 = vst [vmem:[%s135 + $0x7c8] sm:$0xff] %v2947
        %3460 = vst [vmem:[%s135 + $0x7d0] sm:$0xff] %v2948
        %3461 = vst [vmem:[%s135 + $0x7d8] sm:$0xff] %v2949
        %3462 = vst [vmem:[%s135 + $0x7e0] sm:$0xff] %v2950
        %3463 = vst [vmem:[%s135 + $0x7e8] sm:$0xff] %v2951
        %3464 = vst [vmem:[%s135 + $0x7f0] sm:$0xff] %v2952
        %3465 = vst [vmem:[%s135 + $0x7f8] sm:$0xff] %v2953
        %3466 = vst [vmem:[%s135 + $0x800] sm:$0xff] %v2954
        %3467 = vst [vmem:[%s135 + $0x808] sm:$0xff] %v2955
        %3468 = vst [vmem:[%s135 + $0x810] sm:$0xff] %v2956
        %3469 = vst [vmem:[%s135 + $0x818] sm:$0xff] %v2957
        %3470 = vst [vmem:[%s135 + $0x820] sm:$0xff] %v2958
        %3471 = vst [vmem:[%s135 + $0x828] sm:$0xff] %v2959
        %3472 = vst [vmem:[%s135 + $0x830] sm:$0xff] %v2960
        %3473 = vst [vmem:[%s135 + $0x838] sm:$0xff] %v2961
        %3474 = vst [vmem:[%s135 + $0x840] sm:$0xff] %v2962
        %3475 = vst [vmem:[%s135 + $0x848] sm:$0xff] %v2963
        %3476 = vst [vmem:[%s135 + $0x850] sm:$0xff] %v2964
        %3477 = vst [vmem:[%s135 + $0x858] sm:$0xff] %v2965
        %3478 = vst [vmem:[%s135 + $0x860] sm:$0xff] %v2966
        %3479 = vst [vmem:[%s135 + $0x868] sm:$0xff] %v2967
        %3480 = vst [vmem:[%s135 + $0x870] sm:$0xff] %v2968
        %3481 = vst [vmem:[%s135 + $0x878] sm:$0xff] %v2969
        %3482 = vst [vmem:[%s135 + $0x880] sm:$0xff] %v2970
        %3483 = vst [vmem:[%s135 + $0x888] sm:$0xff] %v2971
        %3484 = vst [vmem:[%s135 + $0x890] sm:$0xff] %v2972
        %3485 = vst [vmem:[%s135 + $0x898] sm:$0xff] %v2973
        %3486 = vst [vmem:[%s135 + $0x8a0] sm:$0xff] %v2974
        %3487 = vst [vmem:[%s135 + $0x8a8] sm:$0xff] %v2975
        %3488 = vst [vmem:[%s135 + $0x8b0] sm:$0xff] %v2976
        %3489 = vst [vmem:[%s135 + $0x8b8] sm:$0xff] %v2977
        %3490 = vst [vmem:[%s135 + $0x8c0] sm:$0xff] %v2978
        %3491 = vst [vmem:[%s135 + $0x8c8] sm:$0xff] %v2979
        %3492 = vst [vmem:[%s135 + $0x8d0] sm:$0xff] %v2980
        %3493 = vst [vmem:[%s135 + $0x8d8] sm:$0xff] %v2981
        %3494 = vst [vmem:[%s135 + $0x8e0] sm:$0xff] %v2982
        %3495 = vst [vmem:[%s135 + $0x8e8] sm:$0xff] %v2983
        %3496 = vst [vmem:[%s135 + $0x8f0] sm:$0xff] %v2984
        %3497 = vst [vmem:[%s135 + $0x8f8] sm:$0xff] %v2985
        %3498 = vst [vmem:[%s135 + $0x900] sm:$0xff] %v2986
        %3499 = vst [vmem:[%s135 + $0x908] sm:$0xff] %v2987
        %3500 = vst [vmem:[%s135 + $0x910] sm:$0xff] %v2988
        %3501 = vst [vmem:[%s135 + $0x918] sm:$0xff] %v2989
        %3502 = vst [vmem:[%s135 + $0x920] sm:$0xff] %v2990
        %3503 = vst [vmem:[%s135 + $0x928] sm:$0xff] %v2991
        %3504 = vst [vmem:[%s135 + $0x930] sm:$0xff] %v2992
        %3505 = vst [vmem:[%s135 + $0x938] sm:$0xff] %v2993
        %3506 = vst [vmem:[%s135 + $0x940] sm:$0xff] %v2994
        %3507 = vst [vmem:[%s135 + $0x948] sm:$0xff] %v2995
        %3508 = vst [vmem:[%s135 + $0x950] sm:$0xff] %v2996
        %3509 = vst [vmem:[%s135 + $0x958] sm:$0xff] %v2997
        %3510 = vst [vmem:[%s135 + $0x960] sm:$0xff] %v2998
        %3511 = vst [vmem:[%s135 + $0x968] sm:$0xff] %v2999
        %3512 = vst [vmem:[%s135 + $0x970] sm:$0xff] %v3000
        %3513 = vst [vmem:[%s135 + $0x978] sm:$0xff] %v3001
        %3514 = vst [vmem:[%s135 + $0x980] sm:$0xff] %v3002
        %3515 = vst [vmem:[%s135 + $0x988] sm:$0xff] %v3003
        %3516 = vst [vmem:[%s135 + $0x990] sm:$0xff] %v3004
        %3517 = vst [vmem:[%s135 + $0x998] sm:$0xff] %v3005
        %3518 = vst [vmem:[%s135 + $0x9a0] sm:$0xff] %v3006
        %3519 = vst [vmem:[%s135 + $0x9a8] sm:$0xff] %v3007
        %3520 = vst [vmem:[%s135 + $0x9b0] sm:$0xff] %v3008
        %3521 = vst [vmem:[%s135 + $0x9b8] sm:$0xff] %v3009
        %3522 = vst [vmem:[%s135 + $0x9c0] sm:$0xff] %v3010
        %3523 = vst [vmem:[%s135 + $0x9c8] sm:$0xff] %v3011
        %3524 = vst [vmem:[%s135 + $0x9d0] sm:$0xff] %v3012
        %3525 = vst [vmem:[%s135 + $0x9d8] sm:$0xff] %v3013
        %3526 = vst [vmem:[%s135 + $0x9e0] sm:$0xff] %v3014
        %3527 = vst [vmem:[%s135 + $0x9e8] sm:$0xff] %v3015
        %3528 = vst [vmem:[%s135 + $0x9f0] sm:$0xff] %v3016
        %3529 = vst [vmem:[%s135 + $0x9f8] sm:$0xff] %v3017
        %3530 = vst [vmem:[%s135 + $0xa00] sm:$0xff] %v3018
        %3531 = vst [vmem:[%s135 + $0xa08] sm:$0xff] %v3019
        %3532 = vst [vmem:[%s135 + $0xa10] sm:$0xff] %v3020
        %3533 = vst [vmem:[%s135 + $0xa18] sm:$0xff] %v3021
        %3534 = vst [vmem:[%s135 + $0xa20] sm:$0xff] %v3022
        %3535 = vst [vmem:[%s135 + $0xa28] sm:$0xff] %v3023
        %3536 = vst [vmem:[%s135 + $0xa30] sm:$0xff] %v3024
        %3537 = vst [vmem:[%s135 + $0xa38] sm:$0xff] %v3025
        %3538 = vst [vmem:[%s135 + $0xa40] sm:$0xff] %v3026
        %3539 = vst [vmem:[%s135 + $0xa48] sm:$0xff] %v3027
        %3540 = vst [vmem:[%s135 + $0xa50] sm:$0xff] %v3028
        %3541 = vst [vmem:[%s135 + $0xa58] sm:$0xff] %v3029
        %3542 = vst [vmem:[%s135 + $0xa60] sm:$0xff] %v3030
        %3543 = vst [vmem:[%s135 + $0xa68] sm:$0xff] %v3031
        %3544 = vst [vmem:[%s135 + $0xa70] sm:$0xff] %v3032
        %3545 = vst [vmem:[%s135 + $0xa78] sm:$0xff] %v3033
        %3546 = vst [vmem:[%s135 + $0xa80] sm:$0xff] %v3034
        %3547 = vst [vmem:[%s135 + $0xa88] sm:$0xff] %v3035
        %3548 = vst [vmem:[%s135 + $0xa90] sm:$0xff] %v3036
        %3549 = vst [vmem:[%s135 + $0xa98] sm:$0xff] %v3037
        %3550 = vst [vmem:[%s135 + $0xaa0] sm:$0xff] %v3038
        %3551 = vst [vmem:[%s135 + $0xaa8] sm:$0xff] %v3039
        %3552 = vst [vmem:[%s135 + $0xab0] sm:$0xff] %v3040
        %3553 = vst [vmem:[%s135 + $0xab8] sm:$0xff] %v3041
        %3554 = vst [vmem:[%s135 + $0xac0] sm:$0xff] %v3042
        %3555 = vst [vmem:[%s135 + $0xac8] sm:$0xff] %v3043
        %3556 = vst [vmem:[%s135 + $0xad0] sm:$0xff] %v3044
        %3557 = vst [vmem:[%s135 + $0xad8] sm:$0xff] %v3045
        %3558 = vst [vmem:[%s135 + $0xae0] sm:$0xff] %v3046
        %3559 = vst [vmem:[%s135 + $0xae8] sm:$0xff] %v3047
        %3560 = vst [vmem:[%s135 + $0xaf0] sm:$0xff] %v3048
        %3561 = vst [vmem:[%s135 + $0xaf8] sm:$0xff] %v3049
        %3562 = vst [vmem:[%s135 + $0xb00] sm:$0xff] %v3050
        %3563 = vst [vmem:[%s135 + $0xb08] sm:$0xff] %v3051
        %3564 = vst [vmem:[%s135 + $0xb10] sm:$0xff] %v3052
        %3565 = vst [vmem:[%s135 + $0xb18] sm:$0xff] %v3053
        %3566 = vst [vmem:[%s135 + $0xb20] sm:$0xff] %v3054
        %3567 = vst [vmem:[%s135 + $0xb28] sm:$0xff] %v3055
        %3568 = vst [vmem:[%s135 + $0xb30] sm:$0xff] %v3056
        %3569 = vst [vmem:[%s135 + $0xb38] sm:$0xff] %v3057
        %3570 = vst [vmem:[%s135 + $0xb40] sm:$0xff] %v3058
        %3571 = vst [vmem:[%s135 + $0xb48] sm:$0xff] %v3059
        %3572 = vst [vmem:[%s135 + $0xb50] sm:$0xff] %v3060
        %3573 = vst [vmem:[%s135 + $0xb58] sm:$0xff] %v3061
        %3574 = vst [vmem:[%s135 + $0xb60] sm:$0xff] %v3062
        %3575 = vst [vmem:[%s135 + $0xb68] sm:$0xff] %v3063
        %3576 = vst [vmem:[%s135 + $0xb70] sm:$0xff] %v3064
        %3577 = vst [vmem:[%s135 + $0xb78] sm:$0xff] %v3065
        %3578 = vst [vmem:[%s135 + $0xb80] sm:$0xff] %v3066
        %3579 = vst [vmem:[%s135 + $0xb88] sm:$0xff] %v3067
        %3580 = vst [vmem:[%s135 + $0xb90] sm:$0xff] %v3068
        %3581 = vst [vmem:[%s135 + $0xb98] sm:$0xff] %v3069
        %3582 = vst [vmem:[%s135 + $0xba0] sm:$0xff] %v3070
        %3583 = vst [vmem:[%s135 + $0xba8] sm:$0xff] %v3071
        %3584 = vst [vmem:[%s135 + $0xbb0] sm:$0xff] %v3072
        %3585 = vst [vmem:[%s135 + $0xbb8] sm:$0xff] %v3073
        %3586 = vst [vmem:[%s135 + $0xbc0] sm:$0xff] %v3074
        %3587 = vst [vmem:[%s135 + $0xbc8] sm:$0xff] %v3075
        %3588 = vst [vmem:[%s135 + $0xbd0] sm:$0xff] %v3076
        %3589 = vst [vmem:[%s135 + $0xbd8] sm:$0xff] %v3077
        %3590 = vst [vmem:[%s135 + $0xbe0] sm:$0xff] %v3078
        %3591 = vst [vmem:[%s135 + $0xbe8] sm:$0xff] %v3079
        %3592 = vst [vmem:[%s135 + $0xbf0] sm:$0xff] %v3080
        %3593 = vst [vmem:[%s135 + $0xbf8] sm:$0xff] %v3081
        %3594 = vst [vmem:[%s135 + $0xc00] sm:$0xff] %v3082
        %3595 = vst [vmem:[%s135 + $0xc08] sm:$0xff] %v3083
        %3596 = vst [vmem:[%s135 + $0xc10] sm:$0xff] %v3084
        %3597 = vst [vmem:[%s135 + $0xc18] sm:$0xff] %v3085
        %3598 = vst [vmem:[%s135 + $0xc20] sm:$0xff] %v3086
        %3599 = vst [vmem:[%s135 + $0xc28] sm:$0xff] %v3087
        %3600 = vst [vmem:[%s135 + $0xc30] sm:$0xff] %v3088
        %3601 = vst [vmem:[%s135 + $0xc38] sm:$0xff] %v3089
        %3602 = vst [vmem:[%s135 + $0xc40] sm:$0xff] %v3090
        %3603 = vst [vmem:[%s135 + $0xc48] sm:$0xff] %v3091
        %3604 = vst [vmem:[%s135 + $0xc50] sm:$0xff] %v3092
        %3605 = vst [vmem:[%s135 + $0xc58] sm:$0xff] %v3093
        %3606 = vst [vmem:[%s135 + $0xc60] sm:$0xff] %v3094
        %3607 = vst [vmem:[%s135 + $0xc68] sm:$0xff] %v3095
        %3608 = vst [vmem:[%s135 + $0xc70] sm:$0xff] %v3096
        %3609 = vst [vmem:[%s135 + $0xc78] sm:$0xff] %v3097
        %3610 = vst [vmem:[%s135 + $0xc80] sm:$0xff] %v3098
        %3611 = vst [vmem:[%s135 + $0xc88] sm:$0xff] %v3099
        %3612 = vst [vmem:[%s135 + $0xc90] sm:$0xff] %v3100
        %3613 = vst [vmem:[%s135 + $0xc98] sm:$0xff] %v3101
        %3614 = vst [vmem:[%s135 + $0xca0] sm:$0xff] %v3102
        %3615 = vst [vmem:[%s135 + $0xca8] sm:$0xff] %v3103
        %3616 = vst [vmem:[%s135 + $0xcb0] sm:$0xff] %v3104
        %3617 = vst [vmem:[%s135 + $0xcb8] sm:$0xff] %v3105
        %3618 = vst [vmem:[%s135 + $0xcc0] sm:$0xff] %v3106
        %3619 = vst [vmem:[%s135 + $0xcc8] sm:$0xff] %v3107
        %3620 = vst [vmem:[%s135 + $0xcd0] sm:$0xff] %v3108
        %3621 = vst [vmem:[%s135 + $0xcd8] sm:$0xff] %v3109
        %3622 = vst [vmem:[%s135 + $0xce0] sm:$0xff] %v3110
        %3623 = vst [vmem:[%s135 + $0xce8] sm:$0xff] %v3111
        %3624 = vst [vmem:[%s135 + $0xcf0] sm:$0xff] %v3112
        %3625 = vst [vmem:[%s135 + $0xcf8] sm:$0xff] %v3113
        %3626 = vst [vmem:[%s135 + $0xd00] sm:$0xff] %v3114
        %3627 = vst [vmem:[%s135 + $0xd08] sm:$0xff] %v3115
        %3628 = vst [vmem:[%s135 + $0xd10] sm:$0xff] %v3116
        %3629 = vst [vmem:[%s135 + $0xd18] sm:$0xff] %v3117
        %3630 = vst [vmem:[%s135 + $0xd20] sm:$0xff] %v3118
        %3631 = vst [vmem:[%s135 + $0xd28] sm:$0xff] %v3119
        %3632 = vst [vmem:[%s135 + $0xd30] sm:$0xff] %v3120
        %3633 = vst [vmem:[%s135 + $0xd38] sm:$0xff] %v3121
        %3634 = vst [vmem:[%s135 + $0xd40] sm:$0xff] %v3122
        %3635 = vst [vmem:[%s135 + $0xd48] sm:$0xff] %v3123
        %3636 = vst [vmem:[%s135 + $0xd50] sm:$0xff] %v3124
        %3637 = vst [vmem:[%s135 + $0xd58] sm:$0xff] %v3125
        %3638 = vst [vmem:[%s135 + $0xd60] sm:$0xff] %v3126
        %3639 = vst [vmem:[%s135 + $0xd68] sm:$0xff] %v3127
        %3640 = vst [vmem:[%s135 + $0xd70] sm:$0xff] %v3128
        %3641 = vst [vmem:[%s135 + $0xd78] sm:$0xff] %v3129
        %3642 = vst [vmem:[%s135 + $0xd80] sm:$0xff] %v3130
        %3643 = vst [vmem:[%s135 + $0xd88] sm:$0xff] %v3131
        %3644 = vst [vmem:[%s135 + $0xd90] sm:$0xff] %v3132
        %3645 = vst [vmem:[%s135 + $0xd98] sm:$0xff] %v3133
        %3646 = vst [vmem:[%s135 + $0xda0] sm:$0xff] %v3134
        %3647 = vst [vmem:[%s135 + $0xda8] sm:$0xff] %v3135
        %3648 = vst [vmem:[%s135 + $0xdb0] sm:$0xff] %v3136
        %3649 = vst [vmem:[%s135 + $0xdb8] sm:$0xff] %v3137
        %3650 = vst [vmem:[%s135 + $0xdc0] sm:$0xff] %v3138
        %3651 = vst [vmem:[%s135 + $0xdc8] sm:$0xff] %v3139
        %3652 = vst [vmem:[%s135 + $0xdd0] sm:$0xff] %v3140
        %3653 = vst [vmem:[%s135 + $0xdd8] sm:$0xff] %v3141
        %3654 = vst [vmem:[%s135 + $0xde0] sm:$0xff] %v3142
        %3655 = vst [vmem:[%s135 + $0xde8] sm:$0xff] %v3143
        %3656 = vst [vmem:[%s135 + $0xdf0] sm:$0xff] %v3144
        %3657 = vst [vmem:[%s135 + $0xdf8] sm:$0xff] %v3145
        %3658 = vst [vmem:[%s135 + $0xe00] sm:$0xff] %v3146
        %3659 = vst [vmem:[%s135 + $0xe08] sm:$0xff] %v3147
        %3660 = vst [vmem:[%s135 + $0xe10] sm:$0xff] %v3148
        %3661 = vst [vmem:[%s135 + $0xe18] sm:$0xff] %v3149
        %3662 = vst [vmem:[%s135 + $0xe20] sm:$0xff] %v3150
        %3663 = vst [vmem:[%s135 + $0xe28] sm:$0xff] %v3151
        %3664 = vst [vmem:[%s135 + $0xe30] sm:$0xff] %v3152
        %3665 = vst [vmem:[%s135 + $0xe38] sm:$0xff] %v3153
        %3666 = vst [vmem:[%s135 + $0xe40] sm:$0xff] %v3154
        %3667 = vst [vmem:[%s135 + $0xe48] sm:$0xff] %v3155
        %3668 = vst [vmem:[%s135 + $0xe50] sm:$0xff] %v3156
        %3669 = vst [vmem:[%s135 + $0xe58] sm:$0xff] %v3157
        %3670 = vst [vmem:[%s135 + $0xe60] sm:$0xff] %v3158
        %3671 = vst [vmem:[%s135 + $0xe68] sm:$0xff] %v3159
        %3672 = vst [vmem:[%s135 + $0xe70] sm:$0xff] %v3160
        %3673 = vst [vmem:[%s135 + $0xe78] sm:$0xff] %v3161
        %3674 = vst [vmem:[%s135 + $0xe80] sm:$0xff] %v3162
        %3675 = vst [vmem:[%s135 + $0xe88] sm:$0xff] %v3163
        %3676 = vst [vmem:[%s135 + $0xe90] sm:$0xff] %v3164
        %3677 = vst [vmem:[%s135 + $0xe98] sm:$0xff] %v3165
        %3678 = vst [vmem:[%s135 + $0xea0] sm:$0xff] %v3166
        %3679 = vst [vmem:[%s135 + $0xea8] sm:$0xff] %v3167
        %3680 = vst [vmem:[%s135 + $0xeb0] sm:$0xff] %v3168
        %3681 = vst [vmem:[%s135 + $0xeb8] sm:$0xff] %v3169
        %3682 = vst [vmem:[%s135 + $0xec0] sm:$0xff] %v3170
        %3683 = vst [vmem:[%s135 + $0xec8] sm:$0xff] %v3171
        %3684 = vst [vmem:[%s135 + $0xed0] sm:$0xff] %v3172
        %3685 = vst [vmem:[%s135 + $0xed8] sm:$0xff] %v3173
        %3686 = vst [vmem:[%s135 + $0xee0] sm:$0xff] %v3174
        %3687 = vst [vmem:[%s135 + $0xee8] sm:$0xff] %v3175
        %3688 = vst [vmem:[%s135 + $0xef0] sm:$0xff] %v3176
        %3689 = vst [vmem:[%s135 + $0xef8] sm:$0xff] %v3177
        %3690 = vst [vmem:[%s135 + $0xf00] sm:$0xff] %v3178
        %3691 = vst [vmem:[%s135 + $0xf08] sm:$0xff] %v3179
        %3692 = vst [vmem:[%s135 + $0xf10] sm:$0xff] %v3180
        %3693 = vst [vmem:[%s135 + $0xf18] sm:$0xff] %v3181
        %3694 = vst [vmem:[%s135 + $0xf20] sm:$0xff] %v3182
        %3695 = vst [vmem:[%s135 + $0xf28] sm:$0xff] %v3183
        %3696 = vst [vmem:[%s135 + $0xf30] sm:$0xff] %v3184
        %3697 = vst [vmem:[%s135 + $0xf38] sm:$0xff] %v3185
        %3698 = vst [vmem:[%s135 + $0xf40] sm:$0xff] %v3186
        %3699 = vst [vmem:[%s135 + $0xf48] sm:$0xff] %v3187
        %3700 = vst [vmem:[%s135 + $0xf50] sm:$0xff] %v3188
        %3701 = vst [vmem:[%s135 + $0xf58] sm:$0xff] %v3189
        %3702 = vst [vmem:[%s135 + $0xf60] sm:$0xff] %v3190
        %3703 = vst [vmem:[%s135 + $0xf68] sm:$0xff] %v3191
        %3704 = vst [vmem:[%s135 + $0xf70] sm:$0xff] %v3192
        %3705 = vst [vmem:[%s135 + $0xf78] sm:$0xff] %v3193
        %3706 = vst [vmem:[%s135 + $0xf80] sm:$0xff] %v3194
        %3707 = vst [vmem:[%s135 + $0xf88] sm:$0xff] %v3195
        %3708 = vst [vmem:[%s135 + $0xf90] sm:$0xff] %v3196
        %3709 = vst [vmem:[%s135 + $0xf98] sm:$0xff] %v3197
        %3710 = vst [vmem:[%s135 + $0xfa0] sm:$0xff] %v3198
        %3711 = vst [vmem:[%s135 + $0xfa8] sm:$0xff] %v3199
        %3712 = vst [vmem:[%s135 + $0xfb0] sm:$0xff] %v3200
        %3713 = vst [vmem:[%s135 + $0xfb8] sm:$0xff] %v3201
        %3714 = vst [vmem:[%s135 + $0xfc0] sm:$0xff] %v3202
        %3715 = vst [vmem:[%s135 + $0xfc8] sm:$0xff] %v3203
        %3716 = vst [vmem:[%s135 + $0xfd0] sm:$0xff] %v3204
        %3717 = vst [vmem:[%s135 + $0xfd8] sm:$0xff] %v3205
        %3718 = vst [vmem:[%s135 + $0xfe0] sm:$0xff] %v3206
        %3719 = vst [vmem:[%s135 + $0xfe8] sm:$0xff] %v3207
        %3720 = vst [vmem:[%s135 + $0xff0] sm:$0xff] %v3208
        %3721 = vst [vmem:[%s135 + $0xff8] sm:$0xff] %v3209
        %s3722 = sand.u32 %s52, 1
        %s3723 = scalar_lea.sflag [#allocation4], %s3722
        %s3724 = sand.u32 %s52, 1
        %s3725 = smul.addr %s3724, 4096
        %s3726 = scalar_lea.vmem [#allocation5], %s3725
        // Predicated region
        $region29: #{tpu_custom_call.1} parent=23 // pred_check
          %p3727 = pneg %p62
        $region30: #{tpu_custom_call.1} parent=23 // pred_check_branch
          %3729 = sbr.rel (%p3727) target = $region32
        $region31: #{tpu_custom_call.1} parent=23 // pred_region
          %s3730 = smul.u32 64, %s18
          %s3732 = ssub.s32 65536, 65536
          %3733 = vsyncadd %s3723, %s3732
          %s3734 = smul.addr %s3730, 8
          %s3735 = smul.addr %s3734, 128
          %s3736 = scalar_lea.hbm %s1, %s3735
          %s3737 = sshll.u32 %s3726, 4
          %s3738 = int_to_ptr.vmem [resolvable:$true] %s3737
          %3743 = dma.vmem_to_hbm [thread:$0]  %s3738, 65536, %s3736, %s3723, 1024, 1024, 64
        $region32: #{tpu_custom_call.1} parent=23 // pred_fallthru
          _
      $region24: #{tpu_custom_call.1} parent=5 // pred_fallthru
        _
      %p3744 = scmp.le.s32.totalorder 2, %s13
      // Predicated region
      $region33: #{tpu_custom_call.1} parent=5 // pred_check
        %p3745 = pneg %p3744
      $region34: #{tpu_custom_call.1} parent=5 // pred_check_branch
        %3747 = sbr.rel (%p3745) target = $region36
      $region35: #{tpu_custom_call.1} parent=5 // pred_region
        %s3748 = ssub.s32 %s13, 2
        // Predicated region
        $region37: #{tpu_custom_call.1} parent=35 // pred_check
          %p3749 = pneg %p68
        $region38: #{tpu_custom_call.1} parent=35 // pred_check_branch
          %3751 = sbr.rel (%p3749) target = $region40
        $region39: #{tpu_custom_call.1} parent=35 // pred_region
          %s3752 = sand.u32 %s53, 1
          %s3753 = scalar_lea.sflag [#allocation4], %s3752
          %s3754 = sand.u32 %s53, 1
          %s3755 = smul.addr %s3754, 4096
          %s3756 = scalar_lea.vmem [#allocation5], %s3755
          %3757 = dma.done %s3753, 65536
        $region40: #{tpu_custom_call.1} parent=35 // pred_fallthru
          _
      $region36: #{tpu_custom_call.1} parent=5 // pred_fallthru
        _
    $region6: #{tpu_custom_call.1} parent=1 // loop_footer
      %s17 = sadd.s32 1, %s13
    $region7: #{tpu_custom_call.1} parent=1 // loop_footer_branch
      %12 = sbr.rel target = $region3
    $region8: #{tpu_custom_call.1} parent=1 // loop_exit
      _
    %3758 = vsyncpa [#allocation3], 1
    %s3759 = scalar_lea.sflag [#allocation3], 1
    %3760 = vsyncpa %s3759, 1
    %3761 = vsyncpa [#allocation4], 1
    %s3762 = scalar_lea.sflag [#allocation4], 1
    %3763 = vsyncpa %s3762, 1

</llo_original>
